<compile_context>
chip_gen: v7x
topology: tpu7x:2x2x1
jax: 0.10.0
libtpu: 0.0.40
codegen_flags: <defaults>
</compile_context>

<pallas_src>
import functools

import jax
import jax.numpy as jnp
from jax.experimental import pallas as pl
from jax.experimental.pallas import tpu as pltpu


# ------------------------------ kernel ------------------------------------ #

def _resnet_kernel(x_ref, w1_ref, b1_ref, w2_ref, b2_ref, o_ref, *, num_blocks):
    # Natural layout: batch on the sublane axis, features on lanes.
    x = x_ref[...].astype(jnp.float32)                                     # (tile_b, dim)
    for blk in range(num_blocks):                                          # 6 blocks, static unroll
        # Linear(dim, 64) + ReLU :  h = relu(x @ W1^T + b1)   (W1^T stored directly)
        h = jnp.dot(x, w1_ref[blk], preferred_element_type=jnp.float32)    # (tile_b, hidden)
        h = jnp.maximum(h + b1_ref[blk], 0.0)
        # Linear(64, dim) + residual :  x = h @ W2^T + b2 + x
        y = jnp.dot(h, w2_ref[blk], preferred_element_type=jnp.float32)    # (tile_b, dim)
        x = y + b2_ref[blk] + x
    o_ref[...] = x.astype(o_ref.dtype)


# --------------------------- tiling heuristics ----------------------------- #

def _num_tensorcores():
    """Best-effort TensorCore-per-chip count (v7x has 2); falls back to 1."""
    try:
        info = pltpu.get_tpu_info()
        for attr in ("num_cores", "core_count", "num_tensorcores", "tensorcores_per_chip"):
            v = getattr(info, attr, None)
            if isinstance(v, int) and v > 0:
                return v
    except Exception:
        pass
    try:
        kind = jax.devices()[0].device_kind.lower()
        if "v7" in kind:
            return 2
    except Exception:
        pass
    return 1


def _pick_tile_b(B, dim, *, num_cores=1, itemsize=4, tile_bytes_budget=4 << 20):
    """Batch tile (sublane axis).

    Picks the largest divisor of B (multiple of 8, bounded by a per-buffer byte
    budget) such that the grid has >= 2 steps per TensorCore when the chip has
    more than one core (pipelining + megacore).  On single-core chips with
    small B this returns B -> grid=1 (fewest per-step overheads).
    """
    if B % 8 != 0:
        return B  # tiny / ragged batch: single full-extent block
    cap = max(8, min(2048, (tile_bytes_budget // max(1, dim * itemsize)) // 8 * 8))
    min_steps = 2 * num_cores if num_cores > 1 else 1
    candidates = sorted(
        {d for d in range(8, min(B, cap) + 1, 8) if B % d == 0}
        | ({B} if B <= cap else set()),
        reverse=True,
    )
    for tb in candidates:
        if B // tb >= min_steps:
            return tb
    return candidates[0] if candidates else B


def _vmem_estimate_bytes(tile_b, dim, hidden, num_blocks, itemsize=4):
    act = 2 * 2 * tile_b * dim * itemsize                       # x + out, double-buffered
    weights = 2 * num_blocks * (2 * dim * hidden + hidden + dim) * itemsize
    work = 2 * tile_b * max(dim, hidden) * itemsize             # live intermediates headroom
    return act + weights + work


# ------------------------------ wrapper ------------------------------------ #

def resnet_forward(x, params, *, tile_b=None, num_cores=None):
    """Pallas implementation of ResNet.forward(x) for x of shape (batch, dim)."""
    w1s, b1s, w2s, b2s = params
    B, dim = x.shape
    num_blocks, _, hidden = w1s.shape

    if num_cores is None:
        num_cores = _num_tensorcores()
    if tile_b is None:
        tile_b = _pick_tile_b(B, dim, num_cores=num_cores)
    assert B % tile_b == 0, "batch must be divisible by tile_b"
    grid = (B // tile_b,)

    in_specs = [
        pl.BlockSpec((tile_b, dim), lambda i: (i, 0)),                 # x (marches with grid)
        pl.BlockSpec((num_blocks, dim, hidden), lambda i: (0, 0, 0)),  # W1^T stack (VMEM-resident)
        pl.BlockSpec((num_blocks, 1, hidden), lambda i: (0, 0, 0)),    # b1 stack
        pl.BlockSpec((num_blocks, hidden, dim), lambda i: (0, 0, 0)),  # W2^T stack
        pl.BlockSpec((num_blocks, 1, dim), lambda i: (0, 0, 0)),       # b2 stack
    ]
    out_specs = pl.BlockSpec((tile_b, dim), lambda i: (i, 0))

    vmem_limit = int(min(64 << 20,
                         max(8 << 20, 4 * _vmem_estimate_bytes(tile_b, dim, hidden, num_blocks))))

    return pl.pallas_call(
        functools.partial(_resnet_kernel, num_blocks=num_blocks),
        out_shape=jax.ShapeDtypeStruct((B, dim), x.dtype),
        grid_spec=pl.GridSpec(grid=grid, in_specs=in_specs, out_specs=out_specs),
        compiler_params=pltpu.CompilerParams(
            dimension_semantics=("parallel",),   # batch tiles are independent (megacore on v7x)
            vmem_limit_bytes=vmem_limit,
        ),
    )(x, w1s, b1s, w2s, b2s)


# --------------------------- params & reference ----------------------------- #

def init_resnet_params(key, dim, *, num_blocks=6, hidden=64, dtype=jnp.float32):
    """Mirror nn.Linear default init: U(-1/sqrt(fan_in), 1/sqrt(fan_in)).

    Weights are stored pre-transposed ((in_features, out_features)) so the kernel
    computes x @ W directly in the natural (batch, dim) layout.  Biases are row
    vectors (1, out_features) that broadcast along the batch (sublane) axis.
    All blocks are stacked on axis 0.
    """
    keys = jax.random.split(key, num_blocks * 4)
    w1s, b1s, w2s, b2s = [], [], [], []
    for blk in range(num_blocks):
        kw1, kb1, kw2, kb2 = keys[4 * blk:4 * blk + 4]
        bound1 = 1.0 / (dim ** 0.5)     # Linear(dim, hidden): fan_in = dim
        w1s.append(jax.random.uniform(kw1, (dim, hidden), dtype, -bound1, bound1))
        b1s.append(jax.random.uniform(kb1, (1, hidden), dtype, -bound1, bound1))
        bound2 = 1.0 / (hidden ** 0.5)  # Linear(hidden, dim): fan_in = hidden
        w2s.append(jax.random.uniform(kw2, (hidden, dim), dtype, -bound2, bound2))
        b2s.append(jax.random.uniform(kb2, (1, dim), dtype, -bound2, bound2))
    return (jnp.stack(w1s), jnp.stack(b1s), jnp.stack(w2s), jnp.stack(b2s))


def resnet_reference(x, params):
    """Pure-JAX reference (PyTorch semantics, (batch, dim) layout)."""
    w1s, b1s, w2s, b2s = params
    for blk in range(w1s.shape[0]):
        h = jnp.maximum(x @ w1s[blk] + b1s[blk], 0.0)
        x = h @ w2s[blk] + b2s[blk] + x
    return x


if __name__ == "__main__":
    key = jax.random.PRNGKey(0)
    k_params, k_x = jax.random.split(key)

    dim = 8       # ResNet feature dimension
    batch = 256   # grid=1 on v5e/v6e, >= 2 steps/core on v7x

    params = init_resnet_params(k_params, dim, num_blocks=6, hidden=64)
    x = jax.random.normal(k_x, (batch, dim), dtype=jnp.float32)

    out = jax.block_until_ready(resnet_forward(x, params))

    ref = resnet_reference(x, params)
    assert out.shape == (batch, dim)
    assert jnp.allclose(out, ref, atol=1e-4, rtol=1e-4), "mismatch vs reference"

    print("KERNEL_OK")
</pallas_src>

<mosaic_0001>
module attributes {stable_mosaic.version = 11 : i64} {
  func.func @_resnet_kernel(%arg0: i32, %arg1: memref<256x8xf32, #tpu.memory_space<vmem>>, %arg2: memref<6x8x64xf32, #tpu.memory_space<vmem>>, %arg3: memref<6x1x64xf32, #tpu.memory_space<vmem>>, %arg4: memref<6x64x8xf32, #tpu.memory_space<vmem>>, %arg5: memref<6x1x8xf32, #tpu.memory_space<vmem>>, %arg6: memref<256x8xf32, #tpu.memory_space<vmem>>) attributes {dimension_semantics = [#tpu.dimension_semantics<parallel>], iteration_bounds = array<i64: 1>, scalar_prefetch = 0 : i64, scratch_operands = 0 : i64, tpu.core_type = #tpu.core_type<tc>, window_params = [{transform_indices = @transform_0, window_bounds = array<i64: 256, 8>}, {pipeline_mode = #tpu.pipeline_mode<synchronous>, transform_indices = @transform_1, window_bounds = array<i64: 6, 8, 64>}, {pipeline_mode = #tpu.pipeline_mode<synchronous>, transform_indices = @transform_2, window_bounds = array<i64: 6, 1, 64>}, {pipeline_mode = #tpu.pipeline_mode<synchronous>, transform_indices = @transform_3, window_bounds = array<i64: 6, 64, 8>}, {pipeline_mode = #tpu.pipeline_mode<synchronous>, transform_indices = @transform_4, window_bounds = array<i64: 6, 1, 8>}, {transform_indices = @transform_5, window_bounds = array<i64: 256, 8>}]} {
    %c0 = arith.constant 0 : index
    %c0_0 = arith.constant 0 : index
    %0 = vector.load %arg1[%c0, %c0_0] : memref<256x8xf32, #tpu.memory_space<vmem>>, vector<256x8xf32>
    %c0_1 = arith.constant 0 : index
    %c0_2 = arith.constant 0 : index
    %c0_3 = arith.constant 0 : index
    %1 = vector.load %arg2[%c0_1, %c0_2, %c0_3] : memref<6x8x64xf32, #tpu.memory_space<vmem>>, vector<1x8x64xf32>
    %2 = vector.shape_cast %1 : vector<1x8x64xf32> to vector<8x64xf32>
    %cst = arith.constant dense<0.000000e+00> : vector<256x64xf32>
    %3 = tpu.matmul %0, %2, %cst {dimension_numbers = #tpu.dot_dimension_numbers<[1], [0], [0], [1], [0, 0, 1, 1], [], []>} : vector<256x8xf32>, vector<8x64xf32>, vector<256x64xf32> -> vector<256x64xf32>
    %c0_4 = arith.constant 0 : index
    %c0_5 = arith.constant 0 : index
    %c0_6 = arith.constant 0 : index
    %4 = vector.load %arg3[%c0_4, %c0_5, %c0_6] : memref<6x1x64xf32, #tpu.memory_space<vmem>>, vector<1x1x64xf32>
    %5 = vector.shape_cast %4 : vector<1x1x64xf32> to vector<1x64xf32>
    %6 = vector.broadcast %5 : vector<1x64xf32> to vector<256x64xf32>
    %7 = arith.addf %3, %6 : vector<256x64xf32>
    %cst_7 = arith.constant 0.000000e+00 : f32
    %8 = vector.broadcast %cst_7 : f32 to vector<256x64xf32>
    %9 = arith.maximumf %7, %8 : vector<256x64xf32>
    %c0_8 = arith.constant 0 : index
    %c0_9 = arith.constant 0 : index
    %c0_10 = arith.constant 0 : index
    %10 = vector.load %arg4[%c0_8, %c0_9, %c0_10] : memref<6x64x8xf32, #tpu.memory_space<vmem>>, vector<1x64x8xf32>
    %11 = vector.shape_cast %10 : vector<1x64x8xf32> to vector<64x8xf32>
    %cst_11 = arith.constant dense<0.000000e+00> : vector<256x8xf32>
    %12 = tpu.matmul %9, %11, %cst_11 {dimension_numbers = #tpu.dot_dimension_numbers<[1], [0], [0], [1], [0, 0, 1, 1], [], []>} : vector<256x64xf32>, vector<64x8xf32>, vector<256x8xf32> -> vector<256x8xf32>
    %c0_12 = arith.constant 0 : index
    %c0_13 = arith.constant 0 : index
    %c0_14 = arith.constant 0 : index
    %13 = vector.load %arg5[%c0_12, %c0_13, %c0_14] : memref<6x1x8xf32, #tpu.memory_space<vmem>>, vector<1x1x8xf32>
    %14 = vector.shape_cast %13 : vector<1x1x8xf32> to vector<1x8xf32>
    %15 = vector.broadcast %14 : vector<1x8xf32> to vector<256x8xf32>
    %16 = arith.addf %12, %15 : vector<256x8xf32>
    %17 = arith.addf %16, %0 : vector<256x8xf32>
    %c1 = arith.constant 1 : index
    %c0_15 = arith.constant 0 : index
    %c0_16 = arith.constant 0 : index
    %18 = vector.load %arg2[%c1, %c0_15, %c0_16] : memref<6x8x64xf32, #tpu.memory_space<vmem>>, vector<1x8x64xf32>
    %19 = vector.shape_cast %18 : vector<1x8x64xf32> to vector<8x64xf32>
    %cst_17 = arith.constant dense<0.000000e+00> : vector<256x64xf32>
    %20 = tpu.matmul %17, %19, %cst_17 {dimension_numbers = #tpu.dot_dimension_numbers<[1], [0], [0], [1], [0, 0, 1, 1], [], []>} : vector<256x8xf32>, vector<8x64xf32>, vector<256x64xf32> -> vector<256x64xf32>
    %c1_18 = arith.constant 1 : index
    %c0_19 = arith.constant 0 : index
    %c0_20 = arith.constant 0 : index
    %21 = vector.load %arg3[%c1_18, %c0_19, %c0_20] : memref<6x1x64xf32, #tpu.memory_space<vmem>>, vector<1x1x64xf32>
    %22 = vector.shape_cast %21 : vector<1x1x64xf32> to vector<1x64xf32>
    %23 = vector.broadcast %22 : vector<1x64xf32> to vector<256x64xf32>
    %24 = arith.addf %20, %23 : vector<256x64xf32>
    %cst_21 = arith.constant 0.000000e+00 : f32
    %25 = vector.broadcast %cst_21 : f32 to vector<256x64xf32>
    %26 = arith.maximumf %24, %25 : vector<256x64xf32>
    %c1_22 = arith.constant 1 : index
    %c0_23 = arith.constant 0 : index
    %c0_24 = arith.constant 0 : index
    %27 = vector.load %arg4[%c1_22, %c0_23, %c0_24] : memref<6x64x8xf32, #tpu.memory_space<vmem>>, vector<1x64x8xf32>
    %28 = vector.shape_cast %27 : vector<1x64x8xf32> to vector<64x8xf32>
    %cst_25 = arith.constant dense<0.000000e+00> : vector<256x8xf32>
    %29 = tpu.matmul %26, %28, %cst_25 {dimension_numbers = #tpu.dot_dimension_numbers<[1], [0], [0], [1], [0, 0, 1, 1], [], []>} : vector<256x64xf32>, vector<64x8xf32>, vector<256x8xf32> -> vector<256x8xf32>
    %c1_26 = arith.constant 1 : index
    %c0_27 = arith.constant 0 : index
    %c0_28 = arith.constant 0 : index
    %30 = vector.load %arg5[%c1_26, %c0_27, %c0_28] : memref<6x1x8xf32, #tpu.memory_space<vmem>>, vector<1x1x8xf32>
    %31 = vector.shape_cast %30 : vector<1x1x8xf32> to vector<1x8xf32>
    %32 = vector.broadcast %31 : vector<1x8xf32> to vector<256x8xf32>
    %33 = arith.addf %29, %32 : vector<256x8xf32>
    %34 = arith.addf %33, %17 : vector<256x8xf32>
    %c2 = arith.constant 2 : index
    %c0_29 = arith.constant 0 : index
    %c0_30 = arith.constant 0 : index
    %35 = vector.load %arg2[%c2, %c0_29, %c0_30] : memref<6x8x64xf32, #tpu.memory_space<vmem>>, vector<1x8x64xf32>
    %36 = vector.shape_cast %35 : vector<1x8x64xf32> to vector<8x64xf32>
    %cst_31 = arith.constant dense<0.000000e+00> : vector<256x64xf32>
    %37 = tpu.matmul %34, %36, %cst_31 {dimension_numbers = #tpu.dot_dimension_numbers<[1], [0], [0], [1], [0, 0, 1, 1], [], []>} : vector<256x8xf32>, vector<8x64xf32>, vector<256x64xf32> -> vector<256x64xf32>
    %c2_32 = arith.constant 2 : index
    %c0_33 = arith.constant 0 : index
    %c0_34 = arith.constant 0 : index
    %38 = vector.load %arg3[%c2_32, %c0_33, %c0_34] : memref<6x1x64xf32, #tpu.memory_space<vmem>>, vector<1x1x64xf32>
    %39 = vector.shape_cast %38 : vector<1x1x64xf32> to vector<1x64xf32>
    %40 = vector.broadcast %39 : vector<1x64xf32> to vector<256x64xf32>
    %41 = arith.addf %37, %40 : vector<256x64xf32>
    %cst_35 = arith.constant 0.000000e+00 : f32
    %42 = vector.broadcast %cst_35 : f32 to vector<256x64xf32>
    %43 = arith.maximumf %41, %42 : vector<256x64xf32>
    %c2_36 = arith.constant 2 : index
    %c0_37 = arith.constant 0 : index
    %c0_38 = arith.constant 0 : index
    %44 = vector.load %arg4[%c2_36, %c0_37, %c0_38] : memref<6x64x8xf32, #tpu.memory_space<vmem>>, vector<1x64x8xf32>
    %45 = vector.shape_cast %44 : vector<1x64x8xf32> to vector<64x8xf32>
    %cst_39 = arith.constant dense<0.000000e+00> : vector<256x8xf32>
    %46 = tpu.matmul %43, %45, %cst_39 {dimension_numbers = #tpu.dot_dimension_numbers<[1], [0], [0], [1], [0, 0, 1, 1], [], []>} : vector<256x64xf32>, vector<64x8xf32>, vector<256x8xf32> -> vector<256x8xf32>
    %c2_40 = arith.constant 2 : index
    %c0_41 = arith.constant 0 : index
    %c0_42 = arith.constant 0 : index
    %47 = vector.load %arg5[%c2_40, %c0_41, %c0_42] : memref<6x1x8xf32, #tpu.memory_space<vmem>>, vector<1x1x8xf32>
    %48 = vector.shape_cast %47 : vector<1x1x8xf32> to vector<1x8xf32>
    %49 = vector.broadcast %48 : vector<1x8xf32> to vector<256x8xf32>
    %50 = arith.addf %46, %49 : vector<256x8xf32>
    %51 = arith.addf %50, %34 : vector<256x8xf32>
    %c3 = arith.constant 3 : index
    %c0_43 = arith.constant 0 : index
    %c0_44 = arith.constant 0 : index
    %52 = vector.load %arg2[%c3, %c0_43, %c0_44] : memref<6x8x64xf32, #tpu.memory_space<vmem>>, vector<1x8x64xf32>
    %53 = vector.shape_cast %52 : vector<1x8x64xf32> to vector<8x64xf32>
    %cst_45 = arith.constant dense<0.000000e+00> : vector<256x64xf32>
    %54 = tpu.matmul %51, %53, %cst_45 {dimension_numbers = #tpu.dot_dimension_numbers<[1], [0], [0], [1], [0, 0, 1, 1], [], []>} : vector<256x8xf32>, vector<8x64xf32>, vector<256x64xf32> -> vector<256x64xf32>
    %c3_46 = arith.constant 3 : index
    %c0_47 = arith.constant 0 : index
    %c0_48 = arith.constant 0 : index
    %55 = vector.load %arg3[%c3_46, %c0_47, %c0_48] : memref<6x1x64xf32, #tpu.memory_space<vmem>>, vector<1x1x64xf32>
    %56 = vector.shape_cast %55 : vector<1x1x64xf32> to vector<1x64xf32>
    %57 = vector.broadcast %56 : vector<1x64xf32> to vector<256x64xf32>
    %58 = arith.addf %54, %57 : vector<256x64xf32>
    %cst_49 = arith.constant 0.000000e+00 : f32
    %59 = vector.broadcast %cst_49 : f32 to vector<256x64xf32>
    %60 = arith.maximumf %58, %59 : vector<256x64xf32>
    %c3_50 = arith.constant 3 : index
    %c0_51 = arith.constant 0 : index
    %c0_52 = arith.constant 0 : index
    %61 = vector.load %arg4[%c3_50, %c0_51, %c0_52] : memref<6x64x8xf32, #tpu.memory_space<vmem>>, vector<1x64x8xf32>
    %62 = vector.shape_cast %61 : vector<1x64x8xf32> to vector<64x8xf32>
    %cst_53 = arith.constant dense<0.000000e+00> : vector<256x8xf32>
    %63 = tpu.matmul %60, %62, %cst_53 {dimension_numbers = #tpu.dot_dimension_numbers<[1], [0], [0], [1], [0, 0, 1, 1], [], []>} : vector<256x64xf32>, vector<64x8xf32>, vector<256x8xf32> -> vector<256x8xf32>
    %c3_54 = arith.constant 3 : index
    %c0_55 = arith.constant 0 : index
    %c0_56 = arith.constant 0 : index
    %64 = vector.load %arg5[%c3_54, %c0_55, %c0_56] : memref<6x1x8xf32, #tpu.memory_space<vmem>>, vector<1x1x8xf32>
    %65 = vector.shape_cast %64 : vector<1x1x8xf32> to vector<1x8xf32>
    %66 = vector.broadcast %65 : vector<1x8xf32> to vector<256x8xf32>
    %67 = arith.addf %63, %66 : vector<256x8xf32>
    %68 = arith.addf %67, %51 : vector<256x8xf32>
    %c4 = arith.constant 4 : index
    %c0_57 = arith.constant 0 : index
    %c0_58 = arith.constant 0 : index
    %69 = vector.load %arg2[%c4, %c0_57, %c0_58] : memref<6x8x64xf32, #tpu.memory_space<vmem>>, vector<1x8x64xf32>
    %70 = vector.shape_cast %69 : vector<1x8x64xf32> to vector<8x64xf32>
    %cst_59 = arith.constant dense<0.000000e+00> : vector<256x64xf32>
    %71 = tpu.matmul %68, %70, %cst_59 {dimension_numbers = #tpu.dot_dimension_numbers<[1], [0], [0], [1], [0, 0, 1, 1], [], []>} : vector<256x8xf32>, vector<8x64xf32>, vector<256x64xf32> -> vector<256x64xf32>
    %c4_60 = arith.constant 4 : index
    %c0_61 = arith.constant 0 : index
    %c0_62 = arith.constant 0 : index
    %72 = vector.load %arg3[%c4_60, %c0_61, %c0_62] : memref<6x1x64xf32, #tpu.memory_space<vmem>>, vector<1x1x64xf32>
    %73 = vector.shape_cast %72 : vector<1x1x64xf32> to vector<1x64xf32>
    %74 = vector.broadcast %73 : vector<1x64xf32> to vector<256x64xf32>
    %75 = arith.addf %71, %74 : vector<256x64xf32>
    %cst_63 = arith.constant 0.000000e+00 : f32
    %76 = vector.broadcast %cst_63 : f32 to vector<256x64xf32>
    %77 = arith.maximumf %75, %76 : vector<256x64xf32>
    %c4_64 = arith.constant 4 : index
    %c0_65 = arith.constant 0 : index
    %c0_66 = arith.constant 0 : index
    %78 = vector.load %arg4[%c4_64, %c0_65, %c0_66] : memref<6x64x8xf32, #tpu.memory_space<vmem>>, vector<1x64x8xf32>
    %79 = vector.shape_cast %78 : vector<1x64x8xf32> to vector<64x8xf32>
    %cst_67 = arith.constant dense<0.000000e+00> : vector<256x8xf32>
    %80 = tpu.matmul %77, %79, %cst_67 {dimension_numbers = #tpu.dot_dimension_numbers<[1], [0], [0], [1], [0, 0, 1, 1], [], []>} : vector<256x64xf32>, vector<64x8xf32>, vector<256x8xf32> -> vector<256x8xf32>
    %c4_68 = arith.constant 4 : index
    %c0_69 = arith.constant 0 : index
    %c0_70 = arith.constant 0 : index
    %81 = vector.load %arg5[%c4_68, %c0_69, %c0_70] : memref<6x1x8xf32, #tpu.memory_space<vmem>>, vector<1x1x8xf32>
    %82 = vector.shape_cast %81 : vector<1x1x8xf32> to vector<1x8xf32>
    %83 = vector.broadcast %82 : vector<1x8xf32> to vector<256x8xf32>
    %84 = arith.addf %80, %83 : vector<256x8xf32>
    %85 = arith.addf %84, %68 : vector<256x8xf32>
    %c5 = arith.constant 5 : index
    %c0_71 = arith.constant 0 : index
    %c0_72 = arith.constant 0 : index
    %86 = vector.load %arg2[%c5, %c0_71, %c0_72] : memref<6x8x64xf32, #tpu.memory_space<vmem>>, vector<1x8x64xf32>
    %87 = vector.shape_cast %86 : vector<1x8x64xf32> to vector<8x64xf32>
    %cst_73 = arith.constant dense<0.000000e+00> : vector<256x64xf32>
    %88 = tpu.matmul %85, %87, %cst_73 {dimension_numbers = #tpu.dot_dimension_numbers<[1], [0], [0], [1], [0, 0, 1, 1], [], []>} : vector<256x8xf32>, vector<8x64xf32>, vector<256x64xf32> -> vector<256x64xf32>
    %c5_74 = arith.constant 5 : index
    %c0_75 = arith.constant 0 : index
    %c0_76 = arith.constant 0 : index
    %89 = vector.load %arg3[%c5_74, %c0_75, %c0_76] : memref<6x1x64xf32, #tpu.memory_space<vmem>>, vector<1x1x64xf32>
    %90 = vector.shape_cast %89 : vector<1x1x64xf32> to vector<1x64xf32>
    %91 = vector.broadcast %90 : vector<1x64xf32> to vector<256x64xf32>
    %92 = arith.addf %88, %91 : vector<256x64xf32>
    %cst_77 = arith.constant 0.000000e+00 : f32
    %93 = vector.broadcast %cst_77 : f32 to vector<256x64xf32>
    %94 = arith.maximumf %92, %93 : vector<256x64xf32>
    %c5_78 = arith.constant 5 : index
    %c0_79 = arith.constant 0 : index
    %c0_80 = arith.constant 0 : index
    %95 = vector.load %arg4[%c5_78, %c0_79, %c0_80] : memref<6x64x8xf32, #tpu.memory_space<vmem>>, vector<1x64x8xf32>
    %96 = vector.shape_cast %95 : vector<1x64x8xf32> to vector<64x8xf32>
    %cst_81 = arith.constant dense<0.000000e+00> : vector<256x8xf32>
    %97 = tpu.matmul %94, %96, %cst_81 {dimension_numbers = #tpu.dot_dimension_numbers<[1], [0], [0], [1], [0, 0, 1, 1], [], []>} : vector<256x64xf32>, vector<64x8xf32>, vector<256x8xf32> -> vector<256x8xf32>
    %c5_82 = arith.constant 5 : index
    %c0_83 = arith.constant 0 : index
    %c0_84 = arith.constant 0 : index
    %98 = vector.load %arg5[%c5_82, %c0_83, %c0_84] : memref<6x1x8xf32, #tpu.memory_space<vmem>>, vector<1x1x8xf32>
    %99 = vector.shape_cast %98 : vector<1x1x8xf32> to vector<1x8xf32>
    %100 = vector.broadcast %99 : vector<1x8xf32> to vector<256x8xf32>
    %101 = arith.addf %97, %100 : vector<256x8xf32>
    %102 = arith.addf %101, %85 : vector<256x8xf32>
    %c0_85 = arith.constant 0 : index
    %c0_86 = arith.constant 0 : index
    %103 = vector.load %arg6[%c0_85, %c0_86] : memref<256x8xf32, #tpu.memory_space<vmem>>, vector<256x8xf32>
    tpu.vector_store %arg6[%c0_85, %c0_86], %102 {strides = array<i32>} : memref<256x8xf32, #tpu.memory_space<vmem>>, vector<256x8xf32>,
    return
  }
  func.func @transform_0(%arg0: i32) -> (i32, i32) {
    %c0_i32 = arith.constant 0 : i32
    %c0_i32_0 = arith.constant 0 : i32
    return %arg0, %c0_i32 : i32, i32
  }
  func.func @transform_1(%arg0: i32) -> (i32, i32, i32) {
    %c0_i32 = arith.constant 0 : i32
    %c0_i32_0 = arith.constant 0 : i32
    %c0_i32_1 = arith.constant 0 : i32
    %c0_i32_2 = arith.constant 0 : i32
    return %c0_i32, %c0_i32_0, %c0_i32_1 : i32, i32, i32
  }
  func.func @transform_2(%arg0: i32) -> (i32, i32, i32) {
    %c0_i32 = arith.constant 0 : i32
    %c0_i32_0 = arith.constant 0 : i32
    %c0_i32_1 = arith.constant 0 : i32
    %c0_i32_2 = arith.constant 0 : i32
    return %c0_i32, %c0_i32_0, %c0_i32_1 : i32, i32, i32
  }
  func.func @transform_3(%arg0: i32) -> (i32, i32, i32) {
    %c0_i32 = arith.constant 0 : i32
    %c0_i32_0 = arith.constant 0 : i32
    %c0_i32_1 = arith.constant 0 : i32
    %c0_i32_2 = arith.constant 0 : i32
    return %c0_i32, %c0_i32_0, %c0_i32_1 : i32, i32, i32
  }
  func.func @transform_4(%arg0: i32) -> (i32, i32, i32) {
    %c0_i32 = arith.constant 0 : i32
    %c0_i32_0 = arith.constant 0 : i32
    %c0_i32_1 = arith.constant 0 : i32
    %c0_i32_2 = arith.constant 0 : i32
    return %c0_i32, %c0_i32_0, %c0_i32_1 : i32, i32, i32
  }
  func.func @transform_5(%arg0: i32) -> (i32, i32) {
    %c0_i32 = arith.constant 0 : i32
    %c0_i32_0 = arith.constant 0 : i32
    return %arg0, %c0_i32 : i32, i32
  }
}

</mosaic_0001>

<llo_original>
// kernel: tpu_custom_call.1
$region0: #{tpu_custom_call.1}
  #allocation0 [shape = 'u32[]', space=smem, size = 0x4, offset = 0x4, fixed_abs, tag = 'smem constant byte address 0x4 - core index']
  #allocation1 [shape = 'u32[144,128]{1,0:T(1,128)}', space=vmem, size = 0x12000, scoped, tag = 'internal scratch']
  %s0 = inlined_call_operand.vmem [shape: f32[256,8], index: 0, kind: input, shape index: {}]
  %s1 = inlined_call_operand.vmem [shape: f32[6,8,64], index: 1, kind: input, shape index: {}]
  %s2 = inlined_call_operand.vmem [shape: f32[6,1,64], index: 2, kind: input, shape index: {}]
  %s3 = inlined_call_operand.vmem [shape: f32[6,64,8], index: 3, kind: input, shape index: {}]
  %s4 = inlined_call_operand.vmem [shape: f32[6,1,8], index: 4, kind: input, shape index: {}]
  %s5 = inlined_call_operand.vmem [shape: f32[256,8], index: 5, kind: output, shape index: {}]
  %s6 = sld [smem:[#allocation0]]
  $region30: #{tpu_custom_call.1} parent=0
    _
  %s8 = ssub.s32 1, %s6
  %s9 = scalar_select 0, %s8, %s6
  // Predicated region
  $region2: #{tpu_custom_call.1} parent=0 // pred_check
    _
  $region3: #{tpu_custom_call.1} parent=0 // pred_check_branch
    %11 = sbr.rel (0) target = $region5
  $region4: #{tpu_custom_call.1} parent=0 // pred_region
    _
  $region5: #{tpu_custom_call.1} parent=0 // pred_fallthru
    _
  // Predicated region
  $region6: #{tpu_custom_call.1} parent=0 // pred_check
    _
  $region7: #{tpu_custom_call.1} parent=0 // pred_check_branch
    %13 = sbr.rel (0) target = $region9
  $region8: #{tpu_custom_call.1} parent=0 // pred_region
    _
  $region9: #{tpu_custom_call.1} parent=0 // pred_fallthru
    _
  // Predicated region
  $region10: #{tpu_custom_call.1} parent=0 // pred_check
    _
  $region11: #{tpu_custom_call.1} parent=0 // pred_check_branch
    %15 = sbr.rel (0) target = $region13
  $region12: #{tpu_custom_call.1} parent=0 // pred_region
    _
  $region13: #{tpu_custom_call.1} parent=0 // pred_fallthru
    _
  // Predicated region
  $region14: #{tpu_custom_call.1} parent=0 // pred_check
    _
  $region15: #{tpu_custom_call.1} parent=0 // pred_check_branch
    %17 = sbr.rel (0) target = $region17
  $region16: #{tpu_custom_call.1} parent=0 // pred_region
    _
  $region17: #{tpu_custom_call.1} parent=0 // pred_fallthru
    _
  // Predicated region
  $region18: #{tpu_custom_call.1} parent=0 // pred_check
    _
  $region19: #{tpu_custom_call.1} parent=0 // pred_check_branch
    %19 = sbr.rel (0) target = $region21
  $region20: #{tpu_custom_call.1} parent=0 // pred_region
    _
  $region21: #{tpu_custom_call.1} parent=0 // pred_fallthru
    _
  %v20 = vld [vmem:[%s0] sm:$0xff]
  %v21 = vld [vmem:[%s0 + $0x8] sm:$0xff]
  %v22 = vld [vmem:[%s0 + $0x10] sm:$0xff]
  %v23 = vld [vmem:[%s0 + $0x18] sm:$0xff]
  %v24 = vld [vmem:[%s0 + $0x20] sm:$0xff]
  %v25 = vld [vmem:[%s0 + $0x28] sm:$0xff]
  %v26 = vld [vmem:[%s0 + $0x30] sm:$0xff]
  %v27 = vld [vmem:[%s0 + $0x38] sm:$0xff]
  %v28 = vld [vmem:[%s0 + $0x40] sm:$0xff]
  %v29 = vld [vmem:[%s0 + $0x48] sm:$0xff]
  %v30 = vld [vmem:[%s0 + $0x50] sm:$0xff]
  %v31 = vld [vmem:[%s0 + $0x58] sm:$0xff]
  %v32 = vld [vmem:[%s0 + $0x60] sm:$0xff]
  %v33 = vld [vmem:[%s0 + $0x68] sm:$0xff]
  %v34 = vld [vmem:[%s0 + $0x70] sm:$0xff]
  %v35 = vld [vmem:[%s0 + $0x78] sm:$0xff]
  %v36 = vld [vmem:[%s0 + $0x80] sm:$0xff]
  %v37 = vld [vmem:[%s0 + $0x88] sm:$0xff]
  %v38 = vld [vmem:[%s0 + $0x90] sm:$0xff]
  %v39 = vld [vmem:[%s0 + $0x98] sm:$0xff]
  %v40 = vld [vmem:[%s0 + $0xa0] sm:$0xff]
  %v41 = vld [vmem:[%s0 + $0xa8] sm:$0xff]
  %v42 = vld [vmem:[%s0 + $0xb0] sm:$0xff]
  %v43 = vld [vmem:[%s0 + $0xb8] sm:$0xff]
  %v44 = vld [vmem:[%s0 + $0xc0] sm:$0xff]
  %v45 = vld [vmem:[%s0 + $0xc8] sm:$0xff]
  %v46 = vld [vmem:[%s0 + $0xd0] sm:$0xff]
  %v47 = vld [vmem:[%s0 + $0xd8] sm:$0xff]
  %v48 = vld [vmem:[%s0 + $0xe0] sm:$0xff]
  %v49 = vld [vmem:[%s0 + $0xe8] sm:$0xff]
  %v50 = vld [vmem:[%s0 + $0xf0] sm:$0xff]
  %v51 = vld [vmem:[%s0 + $0xf8] sm:$0xff]
  %v52 = vld [vmem:[%s1] sm:$0xff]
  %v53 = vld [vmem:[%s2] sm:$0x1]
  %v55 = vlaneseq
  %v56 = vshrl.u32 %v55, 7
  %v57 = vsub.s32 0, %v56
  %v58 = vrot.slane %v53, %v57
  %vm60 = vcmask 64512
  %v62 = vsel %vm60, %v20, 0
  %v65 = vsel %vm60, %v21, 0
  %v68 = vsel %vm60, %v22, 0
  %v71 = vsel %vm60, %v23, 0
  %v74 = vsel %vm60, %v24, 0
  %v77 = vsel %vm60, %v25, 0
  %v80 = vsel %vm60, %v26, 0
  %v83 = vsel %vm60, %v27, 0
  %v86 = vsel %vm60, %v28, 0
  %v89 = vsel %vm60, %v29, 0
  %v92 = vsel %vm60, %v30, 0
  %v95 = vsel %vm60, %v31, 0
  %v98 = vsel %vm60, %v32, 0
  %v101 = vsel %vm60, %v33, 0
  %v104 = vsel %vm60, %v34, 0
  %v107 = vsel %vm60, %v35, 0
  %v110 = vsel %vm60, %v36, 0
  %v113 = vsel %vm60, %v37, 0
  %v116 = vsel %vm60, %v38, 0
  %v119 = vsel %vm60, %v39, 0
  %v122 = vsel %vm60, %v40, 0
  %v125 = vsel %vm60, %v41, 0
  %v128 = vsel %vm60, %v42, 0
  %v131 = vsel %vm60, %v43, 0
  %v134 = vsel %vm60, %v44, 0
  %v137 = vsel %vm60, %v45, 0
  %v140 = vsel %vm60, %v46, 0
  %v143 = vsel %vm60, %v47, 0
  %v146 = vsel %vm60, %v48, 0
  %v149 = vsel %vm60, %v49, 0
  %v152 = vsel %vm60, %v50, 0
  %v155 = vsel %vm60, %v51, 0
  %157 = vmatprep.subr.mxu0 0.0
  %158 = vmatpush1.msra.mxu0 %v52
  %159 = vmatprep.subr.mxu0 0.0
  %160 = vmatpush1.msra.mxu0 0.0
  %161 = vmatprep.subr.mxu0 0.0
  %162 = vmatpush1.msra.mxu0 0.0
  %163 = vmatprep.subr.mxu0 0.0
  %164 = vmatpush1.msra.mxu0 0.0
  %165 = vmatprep.subr.mxu0 0.0
  %166 = vmatpush1.msra.mxu0 0.0
  %167 = vmatprep.subr.mxu0 0.0
  %168 = vmatpush1.msra.mxu0 0.0
  %169 = vmatprep.subr.mxu0 0.0
  %170 = vmatpush1.msra.mxu0 0.0
  %171 = vmatprep.subr.mxu0 0.0
  %172 = vmatpush1.msra.mxu0 0.0
  %173 = vmatprep.subr.mxu0 0.0
  %174 = vmatpush1.msra.mxu0 0.0
  %175 = vmatprep.subr.mxu0 0.0
  %176 = vmatpush1.msra.mxu0 0.0
  %177 = vmatprep.subr.mxu0 0.0
  %178 = vmatpush1.msra.mxu0 0.0
  %179 = vmatprep.subr.mxu0 0.0
  %180 = vmatpush1.msra.mxu0 0.0
  %181 = vmatprep.subr.mxu0 0.0
  %182 = vmatpush1.msra.mxu0 0.0
  %183 = vmatprep.subr.mxu0 0.0
  %184 = vmatpush1.msra.mxu0 0.0
  %185 = vmatprep.subr.mxu0 0.0
  %186 = vmatpush1.msra.mxu0 0.0
  %187 = vmatprep.subr.mxu0 0.0
  %188 = vmatpush1.msra.mxu0 0.0
  %189 = vmatprep.subr.mxu0 0.0
  %190 = vmatpush1.msra.mxu0 0.0
  %191 = vmatprep.subr.mxu0 0.0
  %192 = vmatpush1.msra.mxu0 0.0
  %193 = vmatprep.subr.mxu0 0.0
  %194 = vmatpush1.msra.mxu0 0.0
  %195 = vmatprep.subr.mxu0 0.0
  %196 = vmatpush1.msra.mxu0 0.0
  %197 = vmatprep.subr.mxu0 0.0
  %198 = vmatpush1.msra.mxu0 0.0
  %199 = vmatprep.subr.mxu0 0.0
  %200 = vmatpush1.msra.mxu0 0.0
  %201 = vmatprep.subr.mxu0 0.0
  %202 = vmatpush1.msra.mxu0 0.0
  %203 = vmatprep.subr.mxu0 0.0
  %204 = vmatpush1.msra.mxu0 0.0
  %205 = vmatprep.subr.mxu0 0.0
  %206 = vmatpush1.msra.mxu0 0.0
  %207 = vmatprep.subr.mxu0 0.0
  %208 = vmatpush1.msra.mxu0 0.0
  %209 = vmatprep.subr.mxu0 0.0
  %210 = vmatpush1.msra.mxu0 0.0
  %211 = vmatprep.subr.mxu0 0.0
  %212 = vmatpush1.msra.mxu0 0.0
  %213 = vmatprep.subr.mxu0 0.0
  %214 = vmatpush1.msra.mxu0 0.0
  %215 = vmatprep.subr.mxu0 0.0
  %216 = vmatpush1.msra.mxu0 0.0
  %217 = vmatprep.subr.mxu0 0.0
  %218 = vmatpush1.msra.mxu0 0.0
  %219 = vmatprep.subr.mxu0 0.0
  %220 = vmatpush1.msra.mxu0 0.0
  %221 = vmatprep.mubr.f32.mxu0 0.0
  %222 = vmatmul.mubr.f32.gmra.mrb[0].mxu0 %v62
  %v223 = vpop.f32.mrb[0].mxu0
  %v224 = vadd.f32 %v58, %v223
  %v225 = vpop.f32.mrb[0].mxu0
  %226 = vmatprep.mubr.f32.mxu0 0.0
  %227 = vmatmul.mubr.f32.gmra.mrb[0].mxu0 %v65
  %v228 = vpop.f32.mrb[0].mxu0
  %v229 = vadd.f32 %v58, %v228
  %v230 = vpop.f32.mrb[0].mxu0
  %231 = vmatprep.mubr.f32.mxu0 0.0
  %232 = vmatmul.mubr.f32.gmra.mrb[0].mxu0 %v68
  %v233 = vpop.f32.mrb[0].mxu0
  %v234 = vadd.f32 %v58, %v233
  %v235 = vpop.f32.mrb[0].mxu0
  %236 = vmatprep.mubr.f32.mxu0 0.0
  %237 = vmatmul.mubr.f32.gmra.mrb[0].mxu0 %v71
  %v238 = vpop.f32.mrb[0].mxu0
  %v239 = vadd.f32 %v58, %v238
  %v240 = vpop.f32.mrb[0].mxu0
  %241 = vmatprep.mubr.f32.mxu0 0.0
  %242 = vmatmul.mubr.f32.gmra.mrb[0].mxu0 %v74
  %v243 = vpop.f32.mrb[0].mxu0
  %v244 = vadd.f32 %v58, %v243
  %v245 = vpop.f32.mrb[0].mxu0
  %246 = vmatprep.mubr.f32.mxu0 0.0
  %247 = vmatmul.mubr.f32.gmra.mrb[0].mxu0 %v77
  %v248 = vpop.f32.mrb[0].mxu0
  %v249 = vadd.f32 %v58, %v248
  %v250 = vpop.f32.mrb[0].mxu0
  %251 = vmatprep.mubr.f32.mxu0 0.0
  %252 = vmatmul.mubr.f32.gmra.mrb[0].mxu0 %v80
  %v253 = vpop.f32.mrb[0].mxu0
  %v254 = vadd.f32 %v58, %v253
  %v255 = vpop.f32.mrb[0].mxu0
  %256 = vmatprep.mubr.f32.mxu0 0.0
  %257 = vmatmul.mubr.f32.gmra.mrb[0].mxu0 %v83
  %v258 = vpop.f32.mrb[0].mxu0
  %v259 = vadd.f32 %v58, %v258
  %v260 = vpop.f32.mrb[0].mxu0
  %261 = vmatprep.mubr.f32.mxu0 0.0
  %262 = vmatmul.mubr.f32.gmra.mrb[0].mxu0 %v86
  %v263 = vpop.f32.mrb[0].mxu0
  %v264 = vadd.f32 %v58, %v263
  %v265 = vpop.f32.mrb[0].mxu0
  %266 = vmatprep.mubr.f32.mxu0 0.0
  %267 = vmatmul.mubr.f32.gmra.mrb[0].mxu0 %v89
  %v268 = vpop.f32.mrb[0].mxu0
  %v269 = vadd.f32 %v58, %v268
  %v270 = vpop.f32.mrb[0].mxu0
  %271 = vmatprep.mubr.f32.mxu0 0.0
  %272 = vmatmul.mubr.f32.gmra.mrb[0].mxu0 %v92
  %v273 = vpop.f32.mrb[0].mxu0
  %v274 = vadd.f32 %v58, %v273
  %v275 = vpop.f32.mrb[0].mxu0
  %276 = vmatprep.mubr.f32.mxu0 0.0
  %277 = vmatmul.mubr.f32.gmra.mrb[0].mxu0 %v95
  %v278 = vpop.f32.mrb[0].mxu0
  %v279 = vadd.f32 %v58, %v278
  %v280 = vpop.f32.mrb[0].mxu0
  %281 = vmatprep.mubr.f32.mxu0 0.0
  %282 = vmatmul.mubr.f32.gmra.mrb[0].mxu0 %v98
  %v283 = vpop.f32.mrb[0].mxu0
  %v284 = vadd.f32 %v58, %v283
  %v285 = vpop.f32.mrb[0].mxu0
  %286 = vmatprep.mubr.f32.mxu0 0.0
  %287 = vmatmul.mubr.f32.gmra.mrb[0].mxu0 %v101
  %v288 = vpop.f32.mrb[0].mxu0
  %v289 = vadd.f32 %v58, %v288
  %v290 = vpop.f32.mrb[0].mxu0
  %291 = vmatprep.mubr.f32.mxu0 0.0
  %292 = vmatmul.mubr.f32.gmra.mrb[0].mxu0 %v104
  %v293 = vpop.f32.mrb[0].mxu0
  %v294 = vadd.f32 %v58, %v293
  %v295 = vpop.f32.mrb[0].mxu0
  %296 = vmatprep.mubr.f32.mxu0 0.0
  %297 = vmatmul.mubr.f32.gmra.mrb[0].mxu0 %v107
  %v298 = vpop.f32.mrb[0].mxu0
  %v299 = vadd.f32 %v58, %v298
  %v300 = vpop.f32.mrb[0].mxu0
  %301 = vmatprep.mubr.f32.mxu0 0.0
  %302 = vmatmul.mubr.f32.gmra.mrb[0].mxu0 %v110
  %v303 = vpop.f32.mrb[0].mxu0
  %v304 = vadd.f32 %v58, %v303
  %v305 = vpop.f32.mrb[0].mxu0
  %306 = vmatprep.mubr.f32.mxu0 0.0
  %307 = vmatmul.mubr.f32.gmra.mrb[0].mxu0 %v113
  %v308 = vpop.f32.mrb[0].mxu0
  %v309 = vadd.f32 %v58, %v308
  %v310 = vpop.f32.mrb[0].mxu0
  %311 = vmatprep.mubr.f32.mxu0 0.0
  %312 = vmatmul.mubr.f32.gmra.mrb[0].mxu0 %v116
  %v313 = vpop.f32.mrb[0].mxu0
  %v314 = vadd.f32 %v58, %v313
  %v315 = vpop.f32.mrb[0].mxu0
  %316 = vmatprep.mubr.f32.mxu0 0.0
  %317 = vmatmul.mubr.f32.gmra.mrb[0].mxu0 %v119
  %v318 = vpop.f32.mrb[0].mxu0
  %v319 = vadd.f32 %v58, %v318
  %v320 = vpop.f32.mrb[0].mxu0
  %321 = vmatprep.mubr.f32.mxu0 0.0
  %322 = vmatmul.mubr.f32.gmra.mrb[0].mxu0 %v122
  %v323 = vpop.f32.mrb[0].mxu0
  %v324 = vadd.f32 %v58, %v323
  %v325 = vpop.f32.mrb[0].mxu0
  %326 = vmatprep.mubr.f32.mxu0 0.0
  %327 = vmatmul.mubr.f32.gmra.mrb[0].mxu0 %v125
  %v328 = vpop.f32.mrb[0].mxu0
  %v329 = vadd.f32 %v58, %v328
  %v330 = vpop.f32.mrb[0].mxu0
  %331 = vmatprep.mubr.f32.mxu0 0.0
  %332 = vmatmul.mubr.f32.gmra.mrb[0].mxu0 %v128
  %v333 = vpop.f32.mrb[0].mxu0
  %v334 = vadd.f32 %v58, %v333
  %v335 = vpop.f32.mrb[0].mxu0
  %336 = vmatprep.mubr.f32.mxu0 0.0
  %337 = vmatmul.mubr.f32.gmra.mrb[0].mxu0 %v131
  %v338 = vpop.f32.mrb[0].mxu0
  %v339 = vadd.f32 %v58, %v338
  %v340 = vpop.f32.mrb[0].mxu0
  %341 = vmatprep.mubr.f32.mxu0 0.0
  %342 = vmatmul.mubr.f32.gmra.mrb[0].mxu0 %v134
  %v343 = vpop.f32.mrb[0].mxu0
  %v344 = vadd.f32 %v58, %v343
  %v345 = vpop.f32.mrb[0].mxu0
  %346 = vmatprep.mubr.f32.mxu0 0.0
  %347 = vmatmul.mubr.f32.gmra.mrb[0].mxu0 %v137
  %v348 = vpop.f32.mrb[0].mxu0
  %v349 = vadd.f32 %v58, %v348
  %v350 = vpop.f32.mrb[0].mxu0
  %351 = vmatprep.mubr.f32.mxu0 0.0
  %352 = vmatmul.mubr.f32.gmra.mrb[0].mxu0 %v140
  %v353 = vpop.f32.mrb[0].mxu0
  %v354 = vadd.f32 %v58, %v353
  %v355 = vpop.f32.mrb[0].mxu0
  %356 = vmatprep.mubr.f32.mxu0 0.0
  %357 = vmatmul.mubr.f32.gmra.mrb[0].mxu0 %v143
  %v358 = vpop.f32.mrb[0].mxu0
  %v359 = vadd.f32 %v58, %v358
  %v360 = vpop.f32.mrb[0].mxu0
  %361 = vmatprep.mubr.f32.mxu0 0.0
  %362 = vmatmul.mubr.f32.gmra.mrb[0].mxu0 %v146
  %v363 = vpop.f32.mrb[0].mxu0
  %v364 = vadd.f32 %v58, %v363
  %v365 = vpop.f32.mrb[0].mxu0
  %366 = vmatprep.mubr.f32.mxu0 0.0
  %367 = vmatmul.mubr.f32.gmra.mrb[0].mxu0 %v149
  %v368 = vpop.f32.mrb[0].mxu0
  %v369 = vadd.f32 %v58, %v368
  %v370 = vpop.f32.mrb[0].mxu0
  %371 = vmatprep.mubr.f32.mxu0 0.0
  %372 = vmatmul.mubr.f32.gmra.mrb[0].mxu0 %v152
  %v373 = vpop.f32.mrb[0].mxu0
  %v374 = vadd.f32 %v58, %v373
  %v375 = vpop.f32.mrb[0].mxu0
  %376 = vmatprep.mubr.f32.mxu0 0.0
  %377 = vmatmul.mubr.f32.gmra.mrb[0].mxu0 %v155
  %v378 = vpop.f32.mrb[0].mxu0
  %v379 = vadd.f32 %v58, %v378
  %v380 = vpop.f32.mrb[0].mxu0
  %381 = vdwg.mxu0
  %v382 = vmax.f32 %v224, 0.0
  %v383 = vmax.f32 %v229, 0.0
  %v384 = vmax.f32 %v234, 0.0
  %v385 = vmax.f32 %v239, 0.0
  %v386 = vmax.f32 %v244, 0.0
  %v387 = vmax.f32 %v249, 0.0
  %v388 = vmax.f32 %v254, 0.0
  %v389 = vmax.f32 %v259, 0.0
  %v390 = vmax.f32 %v264, 0.0
  %v391 = vmax.f32 %v269, 0.0
  %v392 = vmax.f32 %v274, 0.0
  %v393 = vmax.f32 %v279, 0.0
  %v394 = vmax.f32 %v284, 0.0
  %v395 = vmax.f32 %v289, 0.0
  %v396 = vmax.f32 %v294, 0.0
  %v397 = vmax.f32 %v299, 0.0
  %v398 = vmax.f32 %v304, 0.0
  %v399 = vmax.f32 %v309, 0.0
  %v400 = vmax.f32 %v314, 0.0
  %v401 = vmax.f32 %v319, 0.0
  %v402 = vmax.f32 %v324, 0.0
  %v403 = vmax.f32 %v329, 0.0
  %v404 = vmax.f32 %v334, 0.0
  %v405 = vmax.f32 %v339, 0.0
  %v406 = vmax.f32 %v344, 0.0
  %v407 = vmax.f32 %v349, 0.0
  %v408 = vmax.f32 %v354, 0.0
  %v409 = vmax.f32 %v359, 0.0
  %v410 = vmax.f32 %v364, 0.0
  %v411 = vmax.f32 %v369, 0.0
  %v412 = vmax.f32 %v374, 0.0
  %v413 = vmax.f32 %v379, 0.0
  %v414 = vld [vmem:[%s3] sm:$0xff]
  %v415 = vld [vmem:[%s3 + $0x8] sm:$0xff]
  %v416 = vld [vmem:[%s3 + $0x10] sm:$0xff]
  %v417 = vld [vmem:[%s3 + $0x18] sm:$0xff]
  %v418 = vld [vmem:[%s3 + $0x20] sm:$0xff]
  %v419 = vld [vmem:[%s3 + $0x28] sm:$0xff]
  %v420 = vld [vmem:[%s3 + $0x30] sm:$0xff]
  %v421 = vld [vmem:[%s3 + $0x38] sm:$0xff]
  %v422 = vld [vmem:[%s4] sm:$0x1]
  %v424 = vlaneseq
  %v425 = vshrl.u32 %v424, 7
  %v426 = vsub.s32 0, %v425
  %v427 = vrot.slane %v422, %v426
  %vm429 = vcmask 523264
  %v431 = vsel %vm429, %v382, 0
  %v434 = vsel %vm429, %v383, 0
  %v437 = vsel %vm429, %v384, 0
  %v440 = vsel %vm429, %v385, 0
  %v443 = vsel %vm429, %v386, 0
  %v446 = vsel %vm429, %v387, 0
  %v449 = vsel %vm429, %v388, 0
  %v452 = vsel %vm429, %v389, 0
  %v455 = vsel %vm429, %v390, 0
  %v458 = vsel %vm429, %v391, 0
  %v461 = vsel %vm429, %v392, 0
  %v464 = vsel %vm429, %v393, 0
  %v467 = vsel %vm429, %v394, 0
  %v470 = vsel %vm429, %v395, 0
  %v473 = vsel %vm429, %v396, 0
  %v476 = vsel %vm429, %v397, 0
  %v479 = vsel %vm429, %v398, 0
  %v482 = vsel %vm429, %v399, 0
  %v485 = vsel %vm429, %v400, 0
  %v488 = vsel %vm429, %v401, 0
  %v491 = vsel %vm429, %v402, 0
  %v494 = vsel %vm429, %v403, 0
  %v497 = vsel %vm429, %v404, 0
  %v500 = vsel %vm429, %v405, 0
  %v503 = vsel %vm429, %v406, 0
  %v506 = vsel %vm429, %v407, 0
  %v509 = vsel %vm429, %v408, 0
  %v512 = vsel %vm429, %v409, 0
  %v515 = vsel %vm429, %v410, 0
  %v518 = vsel %vm429, %v411, 0
  %v521 = vsel %vm429, %v412, 0
  %v524 = vsel %vm429, %v413, 0
  %526 = vmatprep.subr.mxu0 0.0
  %527 = vmatpush1.msra.mxu0 %v414
  %528 = vmatprep.subr.mxu0 0.0
  %529 = vmatpush1.msra.mxu0 %v415
  %530 = vmatprep.subr.mxu0 0.0
  %531 = vmatpush1.msra.mxu0 %v416
  %532 = vmatprep.subr.mxu0 0.0
  %533 = vmatpush1.msra.mxu0 %v417
  %534 = vmatprep.subr.mxu0 0.0
  %535 = vmatpush1.msra.mxu0 %v418
  %536 = vmatprep.subr.mxu0 0.0
  %537 = vmatpush1.msra.mxu0 %v419
  %538 = vmatprep.subr.mxu0 0.0
  %539 = vmatpush1.msra.mxu0 %v420
  %540 = vmatprep.subr.mxu0 0.0
  %541 = vmatpush1.msra.mxu0 %v421
  %542 = vmatprep.subr.mxu0 0.0
  %543 = vmatpush1.msra.mxu0 0.0
  %544 = vmatprep.subr.mxu0 0.0
  %545 = vmatpush1.msra.mxu0 0.0
  %546 = vmatprep.subr.mxu0 0.0
  %547 = vmatpush1.msra.mxu0 0.0
  %548 = vmatprep.subr.mxu0 0.0
  %549 = vmatpush1.msra.mxu0 0.0
  %550 = vmatprep.subr.mxu0 0.0
  %551 = vmatpush1.msra.mxu0 0.0
  %552 = vmatprep.subr.mxu0 0.0
  %553 = vmatpush1.msra.mxu0 0.0
  %554 = vmatprep.subr.mxu0 0.0
  %555 = vmatpush1.msra.mxu0 0.0
  %556 = vmatprep.subr.mxu0 0.0
  %557 = vmatpush1.msra.mxu0 0.0
  %558 = vmatprep.subr.mxu0 0.0
  %559 = vmatpush1.msra.mxu0 0.0
  %560 = vmatprep.subr.mxu0 0.0
  %561 = vmatpush1.msra.mxu0 0.0
  %562 = vmatprep.subr.mxu0 0.0
  %563 = vmatpush1.msra.mxu0 0.0
  %564 = vmatprep.subr.mxu0 0.0
  %565 = vmatpush1.msra.mxu0 0.0
  %566 = vmatprep.subr.mxu0 0.0
  %567 = vmatpush1.msra.mxu0 0.0
  %568 = vmatprep.subr.mxu0 0.0
  %569 = vmatpush1.msra.mxu0 0.0
  %570 = vmatprep.subr.mxu0 0.0
  %571 = vmatpush1.msra.mxu0 0.0
  %572 = vmatprep.subr.mxu0 0.0
  %573 = vmatpush1.msra.mxu0 0.0
  %574 = vmatprep.subr.mxu0 0.0
  %575 = vmatpush1.msra.mxu0 0.0
  %576 = vmatprep.subr.mxu0 0.0
  %577 = vmatpush1.msra.mxu0 0.0
  %578 = vmatprep.subr.mxu0 0.0
  %579 = vmatpush1.msra.mxu0 0.0
  %580 = vmatprep.subr.mxu0 0.0
  %581 = vmatpush1.msra.mxu0 0.0
  %582 = vmatprep.subr.mxu0 0.0
  %583 = vmatpush1.msra.mxu0 0.0
  %584 = vmatprep.subr.mxu0 0.0
  %585 = vmatpush1.msra.mxu0 0.0
  %586 = vmatprep.subr.mxu0 0.0
  %587 = vmatpush1.msra.mxu0 0.0
  %588 = vmatprep.subr.mxu0 0.0
  %589 = vmatpush1.msra.mxu0 0.0
  %590 = vmatprep.mubr.f32.mxu0 0.0
  %591 = vmatmul.mubr.f32.gmra.mrb[0].mxu0 %v431
  %v592 = vpop.f32.mrb[0].mxu0
  %v593 = vadd.f32 %v427, %v592
  %v594 = vpop.f32.mrb[0].mxu0
  %595 = vmatprep.mubr.f32.mxu0 0.0
  %596 = vmatmul.mubr.f32.gmra.mrb[0].mxu0 %v434
  %v597 = vpop.f32.mrb[0].mxu0
  %v598 = vadd.f32 %v427, %v597
  %v599 = vpop.f32.mrb[0].mxu0
  %600 = vmatprep.mubr.f32.mxu0 0.0
  %601 = vmatmul.mubr.f32.gmra.mrb[0].mxu0 %v437
  %v602 = vpop.f32.mrb[0].mxu0
  %v603 = vadd.f32 %v427, %v602
  %v604 = vpop.f32.mrb[0].mxu0
  %605 = vmatprep.mubr.f32.mxu0 0.0
  %606 = vmatmul.mubr.f32.gmra.mrb[0].mxu0 %v440
  %v607 = vpop.f32.mrb[0].mxu0
  %v608 = vadd.f32 %v427, %v607
  %v609 = vpop.f32.mrb[0].mxu0
  %610 = vmatprep.mubr.f32.mxu0 0.0
  %611 = vmatmul.mubr.f32.gmra.mrb[0].mxu0 %v443
  %v612 = vpop.f32.mrb[0].mxu0
  %v613 = vadd.f32 %v427, %v612
  %v614 = vpop.f32.mrb[0].mxu0
  %615 = vmatprep.mubr.f32.mxu0 0.0
  %616 = vmatmul.mubr.f32.gmra.mrb[0].mxu0 %v446
  %v617 = vpop.f32.mrb[0].mxu0
  %v618 = vadd.f32 %v427, %v617
  %v619 = vpop.f32.mrb[0].mxu0
  %620 = vmatprep.mubr.f32.mxu0 0.0
  %621 = vmatmul.mubr.f32.gmra.mrb[0].mxu0 %v449
  %v622 = vpop.f32.mrb[0].mxu0
  %v623 = vadd.f32 %v427, %v622
  %v624 = vpop.f32.mrb[0].mxu0
  %625 = vmatprep.mubr.f32.mxu0 0.0
  %626 = vmatmul.mubr.f32.gmra.mrb[0].mxu0 %v452
  %v627 = vpop.f32.mrb[0].mxu0
  %v628 = vadd.f32 %v427, %v627
  %v629 = vpop.f32.mrb[0].mxu0
  %630 = vmatprep.mubr.f32.mxu0 0.0
  %631 = vmatmul.mubr.f32.gmra.mrb[0].mxu0 %v455
  %v632 = vpop.f32.mrb[0].mxu0
  %v633 = vadd.f32 %v427, %v632
  %v634 = vpop.f32.mrb[0].mxu0
  %635 = vmatprep.mubr.f32.mxu0 0.0
  %636 = vmatmul.mubr.f32.gmra.mrb[0].mxu0 %v458
  %v637 = vpop.f32.mrb[0].mxu0
  %v638 = vadd.f32 %v427, %v637
  %v639 = vpop.f32.mrb[0].mxu0
  %640 = vmatprep.mubr.f32.mxu0 0.0
  %641 = vmatmul.mubr.f32.gmra.mrb[0].mxu0 %v461
  %v642 = vpop.f32.mrb[0].mxu0
  %v643 = vadd.f32 %v427, %v642
  %v644 = vpop.f32.mrb[0].mxu0
  %645 = vmatprep.mubr.f32.mxu0 0.0
  %646 = vmatmul.mubr.f32.gmra.mrb[0].mxu0 %v464
  %v647 = vpop.f32.mrb[0].mxu0
  %v648 = vadd.f32 %v427, %v647
  %v649 = vpop.f32.mrb[0].mxu0
  %650 = vmatprep.mubr.f32.mxu0 0.0
  %651 = vmatmul.mubr.f32.gmra.mrb[0].mxu0 %v467
  %v652 = vpop.f32.mrb[0].mxu0
  %v653 = vadd.f32 %v427, %v652
  %v654 = vpop.f32.mrb[0].mxu0
  %655 = vmatprep.mubr.f32.mxu0 0.0
  %656 = vmatmul.mubr.f32.gmra.mrb[0].mxu0 %v470
  %v657 = vpop.f32.mrb[0].mxu0
  %v658 = vadd.f32 %v427, %v657
  %v659 = vpop.f32.mrb[0].mxu0
  %660 = vmatprep.mubr.f32.mxu0 0.0
  %661 = vmatmul.mubr.f32.gmra.mrb[0].mxu0 %v473
  %v662 = vpop.f32.mrb[0].mxu0
  %v663 = vadd.f32 %v427, %v662
  %v664 = vpop.f32.mrb[0].mxu0
  %665 = vmatprep.mubr.f32.mxu0 0.0
  %666 = vmatmul.mubr.f32.gmra.mrb[0].mxu0 %v476
  %v667 = vpop.f32.mrb[0].mxu0
  %v668 = vadd.f32 %v427, %v667
  %v669 = vpop.f32.mrb[0].mxu0
  %670 = vmatprep.mubr.f32.mxu0 0.0
  %671 = vmatmul.mubr.f32.gmra.mrb[0].mxu0 %v479
  %v672 = vpop.f32.mrb[0].mxu0
  %v673 = vadd.f32 %v427, %v672
  %v674 = vpop.f32.mrb[0].mxu0
  %675 = vmatprep.mubr.f32.mxu0 0.0
  %676 = vmatmul.mubr.f32.gmra.mrb[0].mxu0 %v482
  %v677 = vpop.f32.mrb[0].mxu0
  %v678 = vadd.f32 %v427, %v677
  %v679 = vpop.f32.mrb[0].mxu0
  %680 = vmatprep.mubr.f32.mxu0 0.0
  %681 = vmatmul.mubr.f32.gmra.mrb[0].mxu0 %v485
  %v682 = vpop.f32.mrb[0].mxu0
  %v683 = vadd.f32 %v427, %v682
  %v684 = vpop.f32.mrb[0].mxu0
  %685 = vmatprep.mubr.f32.mxu0 0.0
  %686 = vmatmul.mubr.f32.gmra.mrb[0].mxu0 %v488
  %v687 = vpop.f32.mrb[0].mxu0
  %v688 = vadd.f32 %v427, %v687
  %v689 = vpop.f32.mrb[0].mxu0
  %690 = vmatprep.mubr.f32.mxu0 0.0
  %691 = vmatmul.mubr.f32.gmra.mrb[0].mxu0 %v491
  %v692 = vpop.f32.mrb[0].mxu0
  %v693 = vadd.f32 %v427, %v692
  %v694 = vpop.f32.mrb[0].mxu0
  %695 = vmatprep.mubr.f32.mxu0 0.0
  %696 = vmatmul.mubr.f32.gmra.mrb[0].mxu0 %v494
  %v697 = vpop.f32.mrb[0].mxu0
  %v698 = vadd.f32 %v427, %v697
  %v699 = vpop.f32.mrb[0].mxu0
  %700 = vmatprep.mubr.f32.mxu0 0.0
  %701 = vmatmul.mubr.f32.gmra.mrb[0].mxu0 %v497
  %v702 = vpop.f32.mrb[0].mxu0
  %v703 = vadd.f32 %v427, %v702
  %v704 = vpop.f32.mrb[0].mxu0
  %705 = vmatprep.mubr.f32.mxu0 0.0
  %706 = vmatmul.mubr.f32.gmra.mrb[0].mxu0 %v500
  %v707 = vpop.f32.mrb[0].mxu0
  %v708 = vadd.f32 %v427, %v707
  %v709 = vpop.f32.mrb[0].mxu0
  %710 = vmatprep.mubr.f32.mxu0 0.0
  %711 = vmatmul.mubr.f32.gmra.mrb[0].mxu0 %v503
  %v712 = vpop.f32.mrb[0].mxu0
  %v713 = vadd.f32 %v427, %v712
  %v714 = vpop.f32.mrb[0].mxu0
  %715 = vmatprep.mubr.f32.mxu0 0.0
  %716 = vmatmul.mubr.f32.gmra.mrb[0].mxu0 %v506
  %v717 = vpop.f32.mrb[0].mxu0
  %v718 = vadd.f32 %v427, %v717
  %v719 = vpop.f32.mrb[0].mxu0
  %720 = vmatprep.mubr.f32.mxu0 0.0
  %721 = vmatmul.mubr.f32.gmra.mrb[0].mxu0 %v509
  %v722 = vpop.f32.mrb[0].mxu0
  %v723 = vadd.f32 %v427, %v722
  %v724 = vpop.f32.mrb[0].mxu0
  %725 = vmatprep.mubr.f32.mxu0 0.0
  %726 = vmatmul.mubr.f32.gmra.mrb[0].mxu0 %v512
  %v727 = vpop.f32.mrb[0].mxu0
  %v728 = vadd.f32 %v427, %v727
  %v729 = vpop.f32.mrb[0].mxu0
  %730 = vmatprep.mubr.f32.mxu0 0.0
  %731 = vmatmul.mubr.f32.gmra.mrb[0].mxu0 %v515
  %v732 = vpop.f32.mrb[0].mxu0
  %v733 = vadd.f32 %v427, %v732
  %v734 = vpop.f32.mrb[0].mxu0
  %735 = vmatprep.mubr.f32.mxu0 0.0
  %736 = vmatmul.mubr.f32.gmra.mrb[0].mxu0 %v518
  %v737 = vpop.f32.mrb[0].mxu0
  %v738 = vadd.f32 %v427, %v737
  %v739 = vpop.f32.mrb[0].mxu0
  %740 = vmatprep.mubr.f32.mxu0 0.0
  %741 = vmatmul.mubr.f32.gmra.mrb[0].mxu0 %v521
  %v742 = vpop.f32.mrb[0].mxu0
  %v743 = vadd.f32 %v427, %v742
  %v744 = vpop.f32.mrb[0].mxu0
  %745 = vmatprep.mubr.f32.mxu0 0.0
  %746 = vmatmul.mubr.f32.gmra.mrb[0].mxu0 %v524
  %v747 = vpop.f32.mrb[0].mxu0
  %v748 = vadd.f32 %v427, %v747
  %v749 = vpop.f32.mrb[0].mxu0
  %750 = vdwg.mxu0
  %v751 = vadd.f32 %v593, %v20
  %v752 = vadd.f32 %v598, %v21
  %v753 = vadd.f32 %v603, %v22
  %v754 = vadd.f32 %v608, %v23
  %v755 = vadd.f32 %v613, %v24
  %v756 = vadd.f32 %v618, %v25
  %v757 = vadd.f32 %v623, %v26
  %v758 = vadd.f32 %v628, %v27
  %v759 = vadd.f32 %v633, %v28
  %v760 = vadd.f32 %v638, %v29
  %v761 = vadd.f32 %v643, %v30
  %v762 = vadd.f32 %v648, %v31
  %v763 = vadd.f32 %v653, %v32
  %v764 = vadd.f32 %v658, %v33
  %v765 = vadd.f32 %v663, %v34
  %v766 = vadd.f32 %v668, %v35
  %v767 = vadd.f32 %v673, %v36
  %v768 = vadd.f32 %v678, %v37
  %v769 = vadd.f32 %v683, %v38
  %v770 = vadd.f32 %v688, %v39
  %v771 = vadd.f32 %v693, %v40
  %v772 = vadd.f32 %v698, %v41
  %v773 = vadd.f32 %v703, %v42
  %v774 = vadd.f32 %v708, %v43
  %v775 = vadd.f32 %v713, %v44
  %v776 = vadd.f32 %v718, %v45
  %v777 = vadd.f32 %v723, %v46
  %v778 = vadd.f32 %v728, %v47
  %v779 = vadd.f32 %v733, %v48
  %v780 = vadd.f32 %v738, %v49
  %v781 = vadd.f32 %v743, %v50
  %v782 = vadd.f32 %v748, %v51
  %s783 = scalar_lea.vmem %s1, 8
  %v784 = vld [vmem:[%s783] sm:$0xff]
  %s785 = scalar_lea.vmem %s2, 1
  %v786 = vld [vmem:[%s785] sm:$0x1]
  %v788 = vlaneseq
  %v789 = vshrl.u32 %v788, 7
  %v790 = vsub.s32 0, %v789
  %v791 = vrot.slane %v786, %v790
  %v794 = vsel %vm60, %v751, 0
  %v797 = vsel %vm60, %v752, 0
  %v800 = vsel %vm60, %v753, 0
  %v803 = vsel %vm60, %v754, 0
  %v806 = vsel %vm60, %v755, 0
  %v809 = vsel %vm60, %v756, 0
  %v812 = vsel %vm60, %v757, 0
  %v815 = vsel %vm60, %v758, 0
  %v818 = vsel %vm60, %v759, 0
  %v821 = vsel %vm60, %v760, 0
  %v824 = vsel %vm60, %v761, 0
  %v827 = vsel %vm60, %v762, 0
  %v830 = vsel %vm60, %v763, 0
  %v833 = vsel %vm60, %v764, 0
  %v836 = vsel %vm60, %v765, 0
  %v839 = vsel %vm60, %v766, 0
  %v842 = vsel %vm60, %v767, 0
  %v845 = vsel %vm60, %v768, 0
  %v848 = vsel %vm60, %v769, 0
  %v851 = vsel %vm60, %v770, 0
  %v854 = vsel %vm60, %v771, 0
  %v857 = vsel %vm60, %v772, 0
  %v860 = vsel %vm60, %v773, 0
  %v863 = vsel %vm60, %v774, 0
  %v866 = vsel %vm60, %v775, 0
  %v869 = vsel %vm60, %v776, 0
  %v872 = vsel %vm60, %v777, 0
  %v875 = vsel %vm60, %v778, 0
  %v878 = vsel %vm60, %v779, 0
  %v881 = vsel %vm60, %v780, 0
  %v884 = vsel %vm60, %v781, 0
  %v887 = vsel %vm60, %v782, 0
  %889 = vmatprep.subr.mxu0 0.0
  %890 = vmatpush1.msra.mxu0 %v784
  %891 = vmatprep.subr.mxu0 0.0
  %892 = vmatpush1.msra.mxu0 0.0
  %893 = vmatprep.subr.mxu0 0.0
  %894 = vmatpush1.msra.mxu0 0.0
  %895 = vmatprep.subr.mxu0 0.0
  %896 = vmatpush1.msra.mxu0 0.0
  %897 = vmatprep.subr.mxu0 0.0
  %898 = vmatpush1.msra.mxu0 0.0
  %899 = vmatprep.subr.mxu0 0.0
  %900 = vmatpush1.msra.mxu0 0.0
  %901 = vmatprep.subr.mxu0 0.0
  %902 = vmatpush1.msra.mxu0 0.0
  %903 = vmatprep.subr.mxu0 0.0
  %904 = vmatpush1.msra.mxu0 0.0
  %905 = vmatprep.subr.mxu0 0.0
  %906 = vmatpush1.msra.mxu0 0.0
  %907 = vmatprep.subr.mxu0 0.0
  %908 = vmatpush1.msra.mxu0 0.0
  %909 = vmatprep.subr.mxu0 0.0
  %910 = vmatpush1.msra.mxu0 0.0
  %911 = vmatprep.subr.mxu0 0.0
  %912 = vmatpush1.msra.mxu0 0.0
  %913 = vmatprep.subr.mxu0 0.0
  %914 = vmatpush1.msra.mxu0 0.0
  %915 = vmatprep.subr.mxu0 0.0
  %916 = vmatpush1.msra.mxu0 0.0
  %917 = vmatprep.subr.mxu0 0.0
  %918 = vmatpush1.msra.mxu0 0.0
  %919 = vmatprep.subr.mxu0 0.0
  %920 = vmatpush1.msra.mxu0 0.0
  %921 = vmatprep.subr.mxu0 0.0
  %922 = vmatpush1.msra.mxu0 0.0
  %923 = vmatprep.subr.mxu0 0.0
  %924 = vmatpush1.msra.mxu0 0.0
  %925 = vmatprep.subr.mxu0 0.0
  %926 = vmatpush1.msra.mxu0 0.0
  %927 = vmatprep.subr.mxu0 0.0
  %928 = vmatpush1.msra.mxu0 0.0
  %929 = vmatprep.subr.mxu0 0.0
  %930 = vmatpush1.msra.mxu0 0.0
  %931 = vmatprep.subr.mxu0 0.0
  %932 = vmatpush1.msra.mxu0 0.0
  %933 = vmatprep.subr.mxu0 0.0
  %934 = vmatpush1.msra.mxu0 0.0
  %935 = vmatprep.subr.mxu0 0.0
  %936 = vmatpush1.msra.mxu0 0.0
  %937 = vmatprep.subr.mxu0 0.0
  %938 = vmatpush1.msra.mxu0 0.0
  %939 = vmatprep.subr.mxu0 0.0
  %940 = vmatpush1.msra.mxu0 0.0
  %941 = vmatprep.subr.mxu0 0.0
  %942 = vmatpush1.msra.mxu0 0.0
  %943 = vmatprep.subr.mxu0 0.0
  %944 = vmatpush1.msra.mxu0 0.0
  %945 = vmatprep.subr.mxu0 0.0
  %946 = vmatpush1.msra.mxu0 0.0
  %947 = vmatprep.subr.mxu0 0.0
  %948 = vmatpush1.msra.mxu0 0.0
  %949 = vmatprep.subr.mxu0 0.0
  %950 = vmatpush1.msra.mxu0 0.0
  %951 = vmatprep.subr.mxu0 0.0
  %952 = vmatpush1.msra.mxu0 0.0
  %953 = vmatprep.mubr.f32.mxu0 0.0
  %954 = vmatmul.mubr.f32.gmra.mrb[0].mxu0 %v794
  %v955 = vpop.f32.mrb[0].mxu0
  %v956 = vadd.f32 %v791, %v955
  %v957 = vpop.f32.mrb[0].mxu0
  %958 = vmatprep.mubr.f32.mxu0 0.0
  %959 = vmatmul.mubr.f32.gmra.mrb[0].mxu0 %v797
  %v960 = vpop.f32.mrb[0].mxu0
  %v961 = vadd.f32 %v791, %v960
  %v962 = vpop.f32.mrb[0].mxu0
  %963 = vmatprep.mubr.f32.mxu0 0.0
  %964 = vmatmul.mubr.f32.gmra.mrb[0].mxu0 %v800
  %v965 = vpop.f32.mrb[0].mxu0
  %v966 = vadd.f32 %v791, %v965
  %v967 = vpop.f32.mrb[0].mxu0
  %968 = vmatprep.mubr.f32.mxu0 0.0
  %969 = vmatmul.mubr.f32.gmra.mrb[0].mxu0 %v803
  %v970 = vpop.f32.mrb[0].mxu0
  %v971 = vadd.f32 %v791, %v970
  %v972 = vpop.f32.mrb[0].mxu0
  %973 = vmatprep.mubr.f32.mxu0 0.0
  %974 = vmatmul.mubr.f32.gmra.mrb[0].mxu0 %v806
  %v975 = vpop.f32.mrb[0].mxu0
  %v976 = vadd.f32 %v791, %v975
  %v977 = vpop.f32.mrb[0].mxu0
  %978 = vmatprep.mubr.f32.mxu0 0.0
  %979 = vmatmul.mubr.f32.gmra.mrb[0].mxu0 %v809
  %v980 = vpop.f32.mrb[0].mxu0
  %v981 = vadd.f32 %v791, %v980
  %v982 = vpop.f32.mrb[0].mxu0
  %983 = vmatprep.mubr.f32.mxu0 0.0
  %984 = vmatmul.mubr.f32.gmra.mrb[0].mxu0 %v812
  %v985 = vpop.f32.mrb[0].mxu0
  %v986 = vadd.f32 %v791, %v985
  %v987 = vpop.f32.mrb[0].mxu0
  %988 = vmatprep.mubr.f32.mxu0 0.0
  %989 = vmatmul.mubr.f32.gmra.mrb[0].mxu0 %v815
  %v990 = vpop.f32.mrb[0].mxu0
  %v991 = vadd.f32 %v791, %v990
  %v992 = vpop.f32.mrb[0].mxu0
  %993 = vmatprep.mubr.f32.mxu0 0.0
  %994 = vmatmul.mubr.f32.gmra.mrb[0].mxu0 %v818
  %v995 = vpop.f32.mrb[0].mxu0
  %v996 = vadd.f32 %v791, %v995
  %v997 = vpop.f32.mrb[0].mxu0
  %998 = vmatprep.mubr.f32.mxu0 0.0
  %999 = vmatmul.mubr.f32.gmra.mrb[0].mxu0 %v821
  %v1000 = vpop.f32.mrb[0].mxu0
  %v1001 = vadd.f32 %v791, %v1000
  %v1002 = vpop.f32.mrb[0].mxu0
  %1003 = vmatprep.mubr.f32.mxu0 0.0
  %1004 = vmatmul.mubr.f32.gmra.mrb[0].mxu0 %v824
  %v1005 = vpop.f32.mrb[0].mxu0
  %v1006 = vadd.f32 %v791, %v1005
  %v1007 = vpop.f32.mrb[0].mxu0
  %1008 = vmatprep.mubr.f32.mxu0 0.0
  %1009 = vmatmul.mubr.f32.gmra.mrb[0].mxu0 %v827
  %v1010 = vpop.f32.mrb[0].mxu0
  %v1011 = vadd.f32 %v791, %v1010
  %v1012 = vpop.f32.mrb[0].mxu0
  %1013 = vmatprep.mubr.f32.mxu0 0.0
  %1014 = vmatmul.mubr.f32.gmra.mrb[0].mxu0 %v830
  %v1015 = vpop.f32.mrb[0].mxu0
  %v1016 = vadd.f32 %v791, %v1015
  %v1017 = vpop.f32.mrb[0].mxu0
  %1018 = vmatprep.mubr.f32.mxu0 0.0
  %1019 = vmatmul.mubr.f32.gmra.mrb[0].mxu0 %v833
  %v1020 = vpop.f32.mrb[0].mxu0
  %v1021 = vadd.f32 %v791, %v1020
  %v1022 = vpop.f32.mrb[0].mxu0
  %1023 = vmatprep.mubr.f32.mxu0 0.0
  %1024 = vmatmul.mubr.f32.gmra.mrb[0].mxu0 %v836
  %v1025 = vpop.f32.mrb[0].mxu0
  %v1026 = vadd.f32 %v791, %v1025
  %v1027 = vpop.f32.mrb[0].mxu0
  %1028 = vmatprep.mubr.f32.mxu0 0.0
  %1029 = vmatmul.mubr.f32.gmra.mrb[0].mxu0 %v839
  %v1030 = vpop.f32.mrb[0].mxu0
  %v1031 = vadd.f32 %v791, %v1030
  %v1032 = vpop.f32.mrb[0].mxu0
  %1033 = vmatprep.mubr.f32.mxu0 0.0
  %1034 = vmatmul.mubr.f32.gmra.mrb[0].mxu0 %v842
  %v1035 = vpop.f32.mrb[0].mxu0
  %v1036 = vadd.f32 %v791, %v1035
  %v1037 = vpop.f32.mrb[0].mxu0
  %1038 = vmatprep.mubr.f32.mxu0 0.0
  %1039 = vmatmul.mubr.f32.gmra.mrb[0].mxu0 %v845
  %v1040 = vpop.f32.mrb[0].mxu0
  %v1041 = vadd.f32 %v791, %v1040
  %v1042 = vpop.f32.mrb[0].mxu0
  %1043 = vmatprep.mubr.f32.mxu0 0.0
  %1044 = vmatmul.mubr.f32.gmra.mrb[0].mxu0 %v848
  %v1045 = vpop.f32.mrb[0].mxu0
  %v1046 = vadd.f32 %v791, %v1045
  %v1047 = vpop.f32.mrb[0].mxu0
  %1048 = vmatprep.mubr.f32.mxu0 0.0
  %1049 = vmatmul.mubr.f32.gmra.mrb[0].mxu0 %v851
  %v1050 = vpop.f32.mrb[0].mxu0
  %v1051 = vadd.f32 %v791, %v1050
  %v1052 = vpop.f32.mrb[0].mxu0
  %1053 = vmatprep.mubr.f32.mxu0 0.0
  %1054 = vmatmul.mubr.f32.gmra.mrb[0].mxu0 %v854
  %v1055 = vpop.f32.mrb[0].mxu0
  %v1056 = vadd.f32 %v791, %v1055
  %v1057 = vpop.f32.mrb[0].mxu0
  %1058 = vmatprep.mubr.f32.mxu0 0.0
  %1059 = vmatmul.mubr.f32.gmra.mrb[0].mxu0 %v857
  %v1060 = vpop.f32.mrb[0].mxu0
  %v1061 = vadd.f32 %v791, %v1060
  %v1062 = vpop.f32.mrb[0].mxu0
  %1063 = vmatprep.mubr.f32.mxu0 0.0
  %1064 = vmatmul.mubr.f32.gmra.mrb[0].mxu0 %v860
  %v1065 = vpop.f32.mrb[0].mxu0
  %v1066 = vadd.f32 %v791, %v1065
  %v1067 = vpop.f32.mrb[0].mxu0
  %1068 = vmatprep.mubr.f32.mxu0 0.0
  %1069 = vmatmul.mubr.f32.gmra.mrb[0].mxu0 %v863
  %v1070 = vpop.f32.mrb[0].mxu0
  %v1071 = vadd.f32 %v791, %v1070
  %v1072 = vpop.f32.mrb[0].mxu0
  %1073 = vmatprep.mubr.f32.mxu0 0.0
  %1074 = vmatmul.mubr.f32.gmra.mrb[0].mxu0 %v866
  %v1075 = vpop.f32.mrb[0].mxu0
  %v1076 = vadd.f32 %v791, %v1075
  %v1077 = vpop.f32.mrb[0].mxu0
  %1078 = vmatprep.mubr.f32.mxu0 0.0
  %1079 = vmatmul.mubr.f32.gmra.mrb[0].mxu0 %v869
  %v1080 = vpop.f32.mrb[0].mxu0
  %v1081 = vadd.f32 %v791, %v1080
  %v1082 = vpop.f32.mrb[0].mxu0
  %1083 = vmatprep.mubr.f32.mxu0 0.0
  %1084 = vmatmul.mubr.f32.gmra.mrb[0].mxu0 %v872
  %v1085 = vpop.f32.mrb[0].mxu0
  %v1086 = vadd.f32 %v791, %v1085
  %v1087 = vpop.f32.mrb[0].mxu0
  %1088 = vmatprep.mubr.f32.mxu0 0.0
  %1089 = vmatmul.mubr.f32.gmra.mrb[0].mxu0 %v875
  %v1090 = vpop.f32.mrb[0].mxu0
  %v1091 = vadd.f32 %v791, %v1090
  %v1092 = vpop.f32.mrb[0].mxu0
  %1093 = vmatprep.mubr.f32.mxu0 0.0
  %1094 = vmatmul.mubr.f32.gmra.mrb[0].mxu0 %v878
  %v1095 = vpop.f32.mrb[0].mxu0
  %v1096 = vadd.f32 %v791, %v1095
  %v1097 = vpop.f32.mrb[0].mxu0
  %1098 = vmatprep.mubr.f32.mxu0 0.0
  %1099 = vmatmul.mubr.f32.gmra.mrb[0].mxu0 %v881
  %v1100 = vpop.f32.mrb[0].mxu0
  %v1101 = vadd.f32 %v791, %v1100
  %v1102 = vpop.f32.mrb[0].mxu0
  %1103 = vmatprep.mubr.f32.mxu0 0.0
  %1104 = vmatmul.mubr.f32.gmra.mrb[0].mxu0 %v884
  %v1105 = vpop.f32.mrb[0].mxu0
  %v1106 = vadd.f32 %v791, %v1105
  %v1107 = vpop.f32.mrb[0].mxu0
  %1108 = vmatprep.mubr.f32.mxu0 0.0
  %1109 = vmatmul.mubr.f32.gmra.mrb[0].mxu0 %v887
  %v1110 = vpop.f32.mrb[0].mxu0
  %v1111 = vadd.f32 %v791, %v1110
  %v1112 = vpop.f32.mrb[0].mxu0
  %1113 = vdwg.mxu0
  %v1114 = vmax.f32 %v956, 0.0
  %v1115 = vmax.f32 %v961, 0.0
  %v1116 = vmax.f32 %v966, 0.0
  %v1117 = vmax.f32 %v971, 0.0
  %v1118 = vmax.f32 %v976, 0.0
  %v1119 = vmax.f32 %v981, 0.0
  %v1120 = vmax.f32 %v986, 0.0
  %v1121 = vmax.f32 %v991, 0.0
  %v1122 = vmax.f32 %v996, 0.0
  %v1123 = vmax.f32 %v1001, 0.0
  %v1124 = vmax.f32 %v1006, 0.0
  %v1125 = vmax.f32 %v1011, 0.0
  %v1126 = vmax.f32 %v1016, 0.0
  %v1127 = vmax.f32 %v1021, 0.0
  %v1128 = vmax.f32 %v1026, 0.0
  %v1129 = vmax.f32 %v1031, 0.0
  %v1130 = vmax.f32 %v1036, 0.0
  %v1131 = vmax.f32 %v1041, 0.0
  %v1132 = vmax.f32 %v1046, 0.0
  %v1133 = vmax.f32 %v1051, 0.0
  %v1134 = vmax.f32 %v1056, 0.0
  %v1135 = vmax.f32 %v1061, 0.0
  %v1136 = vmax.f32 %v1066, 0.0
  %v1137 = vmax.f32 %v1071, 0.0
  %v1138 = vmax.f32 %v1076, 0.0
  %v1139 = vmax.f32 %v1081, 0.0
  %v1140 = vmax.f32 %v1086, 0.0
  %v1141 = vmax.f32 %v1091, 0.0
  %v1142 = vmax.f32 %v1096, 0.0
  %v1143 = vmax.f32 %v1101, 0.0
  %v1144 = vmax.f32 %v1106, 0.0
  %v1145 = vmax.f32 %v1111, 0.0
  %s1146 = scalar_lea.vmem %s3, 64
  %v1147 = vld [vmem:[%s1146] sm:$0xff]
  %v1148 = vld [vmem:[%s1146 + $0x8] sm:$0xff]
  %v1149 = vld [vmem:[%s1146 + $0x10] sm:$0xff]
  %v1150 = vld [vmem:[%s1146 + $0x18] sm:$0xff]
  %v1151 = vld [vmem:[%s1146 + $0x20] sm:$0xff]
  %v1152 = vld [vmem:[%s1146 + $0x28] sm:$0xff]
  %v1153 = vld [vmem:[%s1146 + $0x30] sm:$0xff]
  %v1154 = vld [vmem:[%s1146 + $0x38] sm:$0xff]
  %s1155 = scalar_lea.vmem %s4, 1
  %v1156 = vld [vmem:[%s1155] sm:$0x1]
  %v1158 = vlaneseq
  %v1159 = vshrl.u32 %v1158, 7
  %v1160 = vsub.s32 0, %v1159
  %v1161 = vrot.slane %v1156, %v1160
  %v1164 = vsel %vm429, %v1114, 0
  %v1167 = vsel %vm429, %v1115, 0
  %v1170 = vsel %vm429, %v1116, 0
  %v1173 = vsel %vm429, %v1117, 0
  %v1176 = vsel %vm429, %v1118, 0
  %v1179 = vsel %vm429, %v1119, 0
  %v1182 = vsel %vm429, %v1120, 0
  %v1185 = vsel %vm429, %v1121, 0
  %v1188 = vsel %vm429, %v1122, 0
  %v1191 = vsel %vm429, %v1123, 0
  %v1194 = vsel %vm429, %v1124, 0
  %v1197 = vsel %vm429, %v1125, 0
  %v1200 = vsel %vm429, %v1126, 0
  %v1203 = vsel %vm429, %v1127, 0
  %v1206 = vsel %vm429, %v1128, 0
  %v1209 = vsel %vm429, %v1129, 0
  %v1212 = vsel %vm429, %v1130, 0
  %v1215 = vsel %vm429, %v1131, 0
  %v1218 = vsel %vm429, %v1132, 0
  %v1221 = vsel %vm429, %v1133, 0
  %v1224 = vsel %vm429, %v1134, 0
  %v1227 = vsel %vm429, %v1135, 0
  %v1230 = vsel %vm429, %v1136, 0
  %v1233 = vsel %vm429, %v1137, 0
  %v1236 = vsel %vm429, %v1138, 0
  %v1239 = vsel %vm429, %v1139, 0
  %v1242 = vsel %vm429, %v1140, 0
  %v1245 = vsel %vm429, %v1141, 0
  %v1248 = vsel %vm429, %v1142, 0
  %v1251 = vsel %vm429, %v1143, 0
  %v1254 = vsel %vm429, %v1144, 0
  %v1257 = vsel %vm429, %v1145, 0
  %1259 = vmatprep.subr.mxu0 0.0
  %1260 = vmatpush1.msra.mxu0 %v1147
  %1261 = vmatprep.subr.mxu0 0.0
  %1262 = vmatpush1.msra.mxu0 %v1148
  %1263 = vmatprep.subr.mxu0 0.0
  %1264 = vmatpush1.msra.mxu0 %v1149
  %1265 = vmatprep.subr.mxu0 0.0
  %1266 = vmatpush1.msra.mxu0 %v1150
  %1267 = vmatprep.subr.mxu0 0.0
  %1268 = vmatpush1.msra.mxu0 %v1151
  %1269 = vmatprep.subr.mxu0 0.0
  %1270 = vmatpush1.msra.mxu0 %v1152
  %1271 = vmatprep.subr.mxu0 0.0
  %1272 = vmatpush1.msra.mxu0 %v1153
  %1273 = vmatprep.subr.mxu0 0.0
  %1274 = vmatpush1.msra.mxu0 %v1154
  %1275 = vmatprep.subr.mxu0 0.0
  %1276 = vmatpush1.msra.mxu0 0.0
  %1277 = vmatprep.subr.mxu0 0.0
  %1278 = vmatpush1.msra.mxu0 0.0
  %1279 = vmatprep.subr.mxu0 0.0
  %1280 = vmatpush1.msra.mxu0 0.0
  %1281 = vmatprep.subr.mxu0 0.0
  %1282 = vmatpush1.msra.mxu0 0.0
  %1283 = vmatprep.subr.mxu0 0.0
  %1284 = vmatpush1.msra.mxu0 0.0
  %1285 = vmatprep.subr.mxu0 0.0
  %1286 = vmatpush1.msra.mxu0 0.0
  %1287 = vmatprep.subr.mxu0 0.0
  %1288 = vmatpush1.msra.mxu0 0.0
  %1289 = vmatprep.subr.mxu0 0.0
  %1290 = vmatpush1.msra.mxu0 0.0
  %1291 = vmatprep.subr.mxu0 0.0
  %1292 = vmatpush1.msra.mxu0 0.0
  %1293 = vmatprep.subr.mxu0 0.0
  %1294 = vmatpush1.msra.mxu0 0.0
  %1295 = vmatprep.subr.mxu0 0.0
  %1296 = vmatpush1.msra.mxu0 0.0
  %1297 = vmatprep.subr.mxu0 0.0
  %1298 = vmatpush1.msra.mxu0 0.0
  %1299 = vmatprep.subr.mxu0 0.0
  %1300 = vmatpush1.msra.mxu0 0.0
  %1301 = vmatprep.subr.mxu0 0.0
  %1302 = vmatpush1.msra.mxu0 0.0
  %1303 = vmatprep.subr.mxu0 0.0
  %1304 = vmatpush1.msra.mxu0 0.0
  %1305 = vmatprep.subr.mxu0 0.0
  %1306 = vmatpush1.msra.mxu0 0.0
  %1307 = vmatprep.subr.mxu0 0.0
  %1308 = vmatpush1.msra.mxu0 0.0
  %1309 = vmatprep.subr.mxu0 0.0
  %1310 = vmatpush1.msra.mxu0 0.0
  %1311 = vmatprep.subr.mxu0 0.0
  %1312 = vmatpush1.msra.mxu0 0.0
  %1313 = vmatprep.subr.mxu0 0.0
  %1314 = vmatpush1.msra.mxu0 0.0
  %1315 = vmatprep.subr.mxu0 0.0
  %1316 = vmatpush1.msra.mxu0 0.0
  %1317 = vmatprep.subr.mxu0 0.0
  %1318 = vmatpush1.msra.mxu0 0.0
  %1319 = vmatprep.subr.mxu0 0.0
  %1320 = vmatpush1.msra.mxu0 0.0
  %1321 = vmatprep.subr.mxu0 0.0
  %1322 = vmatpush1.msra.mxu0 0.0
  %1323 = vmatprep.mubr.f32.mxu0 0.0
  %1324 = vmatmul.mubr.f32.gmra.mrb[0].mxu0 %v1164
  %v1325 = vpop.f32.mrb[0].mxu0
  %v1326 = vadd.f32 %v1161, %v1325
  %v1327 = vpop.f32.mrb[0].mxu0
  %1328 = vmatprep.mubr.f32.mxu0 0.0
  %1329 = vmatmul.mubr.f32.gmra.mrb[0].mxu0 %v1167
  %v1330 = vpop.f32.mrb[0].mxu0
  %v1331 = vadd.f32 %v1161, %v1330
  %v1332 = vpop.f32.mrb[0].mxu0
  %1333 = vmatprep.mubr.f32.mxu0 0.0
  %1334 = vmatmul.mubr.f32.gmra.mrb[0].mxu0 %v1170
  %v1335 = vpop.f32.mrb[0].mxu0
  %v1336 = vadd.f32 %v1161, %v1335
  %v1337 = vpop.f32.mrb[0].mxu0
  %1338 = vmatprep.mubr.f32.mxu0 0.0
  %1339 = vmatmul.mubr.f32.gmra.mrb[0].mxu0 %v1173
  %v1340 = vpop.f32.mrb[0].mxu0
  %v1341 = vadd.f32 %v1161, %v1340
  %v1342 = vpop.f32.mrb[0].mxu0
  %1343 = vmatprep.mubr.f32.mxu0 0.0
  %1344 = vmatmul.mubr.f32.gmra.mrb[0].mxu0 %v1176
  %v1345 = vpop.f32.mrb[0].mxu0
  %v1346 = vadd.f32 %v1161, %v1345
  %v1347 = vpop.f32.mrb[0].mxu0
  %1348 = vmatprep.mubr.f32.mxu0 0.0
  %1349 = vmatmul.mubr.f32.gmra.mrb[0].mxu0 %v1179
  %v1350 = vpop.f32.mrb[0].mxu0
  %v1351 = vadd.f32 %v1161, %v1350
  %v1352 = vpop.f32.mrb[0].mxu0
  %1353 = vmatprep.mubr.f32.mxu0 0.0
  %1354 = vmatmul.mubr.f32.gmra.mrb[0].mxu0 %v1182
  %v1355 = vpop.f32.mrb[0].mxu0
  %v1356 = vadd.f32 %v1161, %v1355
  %v1357 = vpop.f32.mrb[0].mxu0
  %1358 = vmatprep.mubr.f32.mxu0 0.0
  %1359 = vmatmul.mubr.f32.gmra.mrb[0].mxu0 %v1185
  %v1360 = vpop.f32.mrb[0].mxu0
  %v1361 = vadd.f32 %v1161, %v1360
  %v1362 = vpop.f32.mrb[0].mxu0
  %1363 = vmatprep.mubr.f32.mxu0 0.0
  %1364 = vmatmul.mubr.f32.gmra.mrb[0].mxu0 %v1188
  %v1365 = vpop.f32.mrb[0].mxu0
  %v1366 = vadd.f32 %v1161, %v1365
  %v1367 = vpop.f32.mrb[0].mxu0
  %1368 = vmatprep.mubr.f32.mxu0 0.0
  %1369 = vmatmul.mubr.f32.gmra.mrb[0].mxu0 %v1191
  %v1370 = vpop.f32.mrb[0].mxu0
  %v1371 = vadd.f32 %v1161, %v1370
  %v1372 = vpop.f32.mrb[0].mxu0
  %1373 = vmatprep.mubr.f32.mxu0 0.0
  %1374 = vmatmul.mubr.f32.gmra.mrb[0].mxu0 %v1194
  %v1375 = vpop.f32.mrb[0].mxu0
  %v1376 = vadd.f32 %v1161, %v1375
  %v1377 = vpop.f32.mrb[0].mxu0
  %1378 = vmatprep.mubr.f32.mxu0 0.0
  %1379 = vmatmul.mubr.f32.gmra.mrb[0].mxu0 %v1197
  %v1380 = vpop.f32.mrb[0].mxu0
  %v1381 = vadd.f32 %v1161, %v1380
  %v1382 = vpop.f32.mrb[0].mxu0
  %1383 = vmatprep.mubr.f32.mxu0 0.0
  %1384 = vmatmul.mubr.f32.gmra.mrb[0].mxu0 %v1200
  %v1385 = vpop.f32.mrb[0].mxu0
  %v1386 = vadd.f32 %v1161, %v1385
  %v1387 = vpop.f32.mrb[0].mxu0
  %1388 = vmatprep.mubr.f32.mxu0 0.0
  %1389 = vmatmul.mubr.f32.gmra.mrb[0].mxu0 %v1203
  %v1390 = vpop.f32.mrb[0].mxu0
  %v1391 = vadd.f32 %v1161, %v1390
  %v1392 = vpop.f32.mrb[0].mxu0
  %1393 = vmatprep.mubr.f32.mxu0 0.0
  %1394 = vmatmul.mubr.f32.gmra.mrb[0].mxu0 %v1206
  %v1395 = vpop.f32.mrb[0].mxu0
  %v1396 = vadd.f32 %v1161, %v1395
  %v1397 = vpop.f32.mrb[0].mxu0
  %1398 = vmatprep.mubr.f32.mxu0 0.0
  %1399 = vmatmul.mubr.f32.gmra.mrb[0].mxu0 %v1209
  %v1400 = vpop.f32.mrb[0].mxu0
  %v1401 = vadd.f32 %v1161, %v1400
  %v1402 = vpop.f32.mrb[0].mxu0
  %1403 = vmatprep.mubr.f32.mxu0 0.0
  %1404 = vmatmul.mubr.f32.gmra.mrb[0].mxu0 %v1212
  %v1405 = vpop.f32.mrb[0].mxu0
  %v1406 = vadd.f32 %v1161, %v1405
  %v1407 = vpop.f32.mrb[0].mxu0
  %1408 = vmatprep.mubr.f32.mxu0 0.0
  %1409 = vmatmul.mubr.f32.gmra.mrb[0].mxu0 %v1215
  %v1410 = vpop.f32.mrb[0].mxu0
  %v1411 = vadd.f32 %v1161, %v1410
  %v1412 = vpop.f32.mrb[0].mxu0
  %1413 = vmatprep.mubr.f32.mxu0 0.0
  %1414 = vmatmul.mubr.f32.gmra.mrb[0].mxu0 %v1218
  %v1415 = vpop.f32.mrb[0].mxu0
  %v1416 = vadd.f32 %v1161, %v1415
  %v1417 = vpop.f32.mrb[0].mxu0
  %1418 = vmatprep.mubr.f32.mxu0 0.0
  %1419 = vmatmul.mubr.f32.gmra.mrb[0].mxu0 %v1221
  %v1420 = vpop.f32.mrb[0].mxu0
  %v1421 = vadd.f32 %v1161, %v1420
  %v1422 = vpop.f32.mrb[0].mxu0
  %1423 = vmatprep.mubr.f32.mxu0 0.0
  %1424 = vmatmul.mubr.f32.gmra.mrb[0].mxu0 %v1224
  %v1425 = vpop.f32.mrb[0].mxu0
  %v1426 = vadd.f32 %v1161, %v1425
  %v1427 = vpop.f32.mrb[0].mxu0
  %1428 = vmatprep.mubr.f32.mxu0 0.0
  %1429 = vmatmul.mubr.f32.gmra.mrb[0].mxu0 %v1227
  %v1430 = vpop.f32.mrb[0].mxu0
  %v1431 = vadd.f32 %v1161, %v1430
  %v1432 = vpop.f32.mrb[0].mxu0
  %1433 = vmatprep.mubr.f32.mxu0 0.0
  %1434 = vmatmul.mubr.f32.gmra.mrb[0].mxu0 %v1230
  %v1435 = vpop.f32.mrb[0].mxu0
  %v1436 = vadd.f32 %v1161, %v1435
  %v1437 = vpop.f32.mrb[0].mxu0
  %1438 = vmatprep.mubr.f32.mxu0 0.0
  %1439 = vmatmul.mubr.f32.gmra.mrb[0].mxu0 %v1233
  %v1440 = vpop.f32.mrb[0].mxu0
  %v1441 = vadd.f32 %v1161, %v1440
  %v1442 = vpop.f32.mrb[0].mxu0
  %1443 = vmatprep.mubr.f32.mxu0 0.0
  %1444 = vmatmul.mubr.f32.gmra.mrb[0].mxu0 %v1236
  %v1445 = vpop.f32.mrb[0].mxu0
  %v1446 = vadd.f32 %v1161, %v1445
  %v1447 = vpop.f32.mrb[0].mxu0
  %1448 = vmatprep.mubr.f32.mxu0 0.0
  %1449 = vmatmul.mubr.f32.gmra.mrb[0].mxu0 %v1239
  %v1450 = vpop.f32.mrb[0].mxu0
  %v1451 = vadd.f32 %v1161, %v1450
  %v1452 = vpop.f32.mrb[0].mxu0
  %1453 = vmatprep.mubr.f32.mxu0 0.0
  %1454 = vmatmul.mubr.f32.gmra.mrb[0].mxu0 %v1242
  %v1455 = vpop.f32.mrb[0].mxu0
  %v1456 = vadd.f32 %v1161, %v1455
  %v1457 = vpop.f32.mrb[0].mxu0
  %1458 = vmatprep.mubr.f32.mxu0 0.0
  %1459 = vmatmul.mubr.f32.gmra.mrb[0].mxu0 %v1245
  %v1460 = vpop.f32.mrb[0].mxu0
  %v1461 = vadd.f32 %v1161, %v1460
  %v1462 = vpop.f32.mrb[0].mxu0
  %1463 = vmatprep.mubr.f32.mxu0 0.0
  %1464 = vmatmul.mubr.f32.gmra.mrb[0].mxu0 %v1248
  %v1465 = vpop.f32.mrb[0].mxu0
  %v1466 = vadd.f32 %v1161, %v1465
  %v1467 = vpop.f32.mrb[0].mxu0
  %1468 = vmatprep.mubr.f32.mxu0 0.0
  %1469 = vmatmul.mubr.f32.gmra.mrb[0].mxu0 %v1251
  %v1470 = vpop.f32.mrb[0].mxu0
  %v1471 = vadd.f32 %v1161, %v1470
  %v1472 = vpop.f32.mrb[0].mxu0
  %1473 = vmatprep.mubr.f32.mxu0 0.0
  %1474 = vmatmul.mubr.f32.gmra.mrb[0].mxu0 %v1254
  %v1475 = vpop.f32.mrb[0].mxu0
  %v1476 = vadd.f32 %v1161, %v1475
  %v1477 = vpop.f32.mrb[0].mxu0
  %1478 = vmatprep.mubr.f32.mxu0 0.0
  %1479 = vmatmul.mubr.f32.gmra.mrb[0].mxu0 %v1257
  %v1480 = vpop.f32.mrb[0].mxu0
  %v1481 = vadd.f32 %v1161, %v1480
  %v1482 = vpop.f32.mrb[0].mxu0
  %1483 = vdwg.mxu0
  %v1484 = vadd.f32 %v1326, %v751
  %v1485 = vadd.f32 %v1331, %v752
  %v1486 = vadd.f32 %v1336, %v753
  %v1487 = vadd.f32 %v1341, %v754
  %v1488 = vadd.f32 %v1346, %v755
  %v1489 = vadd.f32 %v1351, %v756
  %v1490 = vadd.f32 %v1356, %v757
  %v1491 = vadd.f32 %v1361, %v758
  %v1492 = vadd.f32 %v1366, %v759
  %v1493 = vadd.f32 %v1371, %v760
  %v1494 = vadd.f32 %v1376, %v761
  %v1495 = vadd.f32 %v1381, %v762
  %v1496 = vadd.f32 %v1386, %v763
  %v1497 = vadd.f32 %v1391, %v764
  %v1498 = vadd.f32 %v1396, %v765
  %v1499 = vadd.f32 %v1401, %v766
  %v1500 = vadd.f32 %v1406, %v767
  %v1501 = vadd.f32 %v1411, %v768
  %v1502 = vadd.f32 %v1416, %v769
  %v1503 = vadd.f32 %v1421, %v770
  %v1504 = vadd.f32 %v1426, %v771
  %v1505 = vadd.f32 %v1431, %v772
  %v1506 = vadd.f32 %v1436, %v773
  %v1507 = vadd.f32 %v1441, %v774
  %v1508 = vadd.f32 %v1446, %v775
  %v1509 = vadd.f32 %v1451, %v776
  %v1510 = vadd.f32 %v1456, %v777
  %v1511 = vadd.f32 %v1461, %v778
  %v1512 = vadd.f32 %v1466, %v779
  %v1513 = vadd.f32 %v1471, %v780
  %v1514 = vadd.f32 %v1476, %v781
  %v1515 = vadd.f32 %v1481, %v782
  %s1516 = scalar_lea.vmem %s1, 16
  %v1517 = vld [vmem:[%s1516] sm:$0xff]
  %s1518 = scalar_lea.vmem %s2, 2
  %v1519 = vld [vmem:[%s1518] sm:$0x1]
  %v1521 = vlaneseq
  %v1522 = vshrl.u32 %v1521, 7
  %v1523 = vsub.s32 0, %v1522
  %v1524 = vrot.slane %v1519, %v1523
  %v1527 = vsel %vm60, %v1484, 0
  %v1530 = vsel %vm60, %v1485, 0
  %v1533 = vsel %vm60, %v1486, 0
  %v1536 = vsel %vm60, %v1487, 0
  %v1539 = vsel %vm60, %v1488, 0
  %v1542 = vsel %vm60, %v1489, 0
  %v1545 = vsel %vm60, %v1490, 0
  %v1548 = vsel %vm60, %v1491, 0
  %v1551 = vsel %vm60, %v1492, 0
  %v1554 = vsel %vm60, %v1493, 0
  %v1557 = vsel %vm60, %v1494, 0
  %v1560 = vsel %vm60, %v1495, 0
  %v1563 = vsel %vm60, %v1496, 0
  %v1566 = vsel %vm60, %v1497, 0
  %v1569 = vsel %vm60, %v1498, 0
  %v1572 = vsel %vm60, %v1499, 0
  %v1575 = vsel %vm60, %v1500, 0
  %v1578 = vsel %vm60, %v1501, 0
  %v1581 = vsel %vm60, %v1502, 0
  %v1584 = vsel %vm60, %v1503, 0
  %v1587 = vsel %vm60, %v1504, 0
  %v1590 = vsel %vm60, %v1505, 0
  %v1593 = vsel %vm60, %v1506, 0
  %v1596 = vsel %vm60, %v1507, 0
  %v1599 = vsel %vm60, %v1508, 0
  %v1602 = vsel %vm60, %v1509, 0
  %v1605 = vsel %vm60, %v1510, 0
  %v1608 = vsel %vm60, %v1511, 0
  %v1611 = vsel %vm60, %v1512, 0
  %v1614 = vsel %vm60, %v1513, 0
  %v1617 = vsel %vm60, %v1514, 0
  %v1620 = vsel %vm60, %v1515, 0
  %1622 = vmatprep.subr.mxu0 0.0
  %1623 = vmatpush1.msra.mxu0 %v1517
  %1624 = vmatprep.subr.mxu0 0.0
  %1625 = vmatpush1.msra.mxu0 0.0
  %1626 = vmatprep.subr.mxu0 0.0
  %1627 = vmatpush1.msra.mxu0 0.0
  %1628 = vmatprep.subr.mxu0 0.0
  %1629 = vmatpush1.msra.mxu0 0.0
  %1630 = vmatprep.subr.mxu0 0.0
  %1631 = vmatpush1.msra.mxu0 0.0
  %1632 = vmatprep.subr.mxu0 0.0
  %1633 = vmatpush1.msra.mxu0 0.0
  %1634 = vmatprep.subr.mxu0 0.0
  %1635 = vmatpush1.msra.mxu0 0.0
  %1636 = vmatprep.subr.mxu0 0.0
  %1637 = vmatpush1.msra.mxu0 0.0
  %1638 = vmatprep.subr.mxu0 0.0
  %1639 = vmatpush1.msra.mxu0 0.0
  %1640 = vmatprep.subr.mxu0 0.0
  %1641 = vmatpush1.msra.mxu0 0.0
  %1642 = vmatprep.subr.mxu0 0.0
  %1643 = vmatpush1.msra.mxu0 0.0
  %1644 = vmatprep.subr.mxu0 0.0
  %1645 = vmatpush1.msra.mxu0 0.0
  %1646 = vmatprep.subr.mxu0 0.0
  %1647 = vmatpush1.msra.mxu0 0.0
  %1648 = vmatprep.subr.mxu0 0.0
  %1649 = vmatpush1.msra.mxu0 0.0
  %1650 = vmatprep.subr.mxu0 0.0
  %1651 = vmatpush1.msra.mxu0 0.0
  %1652 = vmatprep.subr.mxu0 0.0
  %1653 = vmatpush1.msra.mxu0 0.0
  %1654 = vmatprep.subr.mxu0 0.0
  %1655 = vmatpush1.msra.mxu0 0.0
  %1656 = vmatprep.subr.mxu0 0.0
  %1657 = vmatpush1.msra.mxu0 0.0
  %1658 = vmatprep.subr.mxu0 0.0
  %1659 = vmatpush1.msra.mxu0 0.0
  %1660 = vmatprep.subr.mxu0 0.0
  %1661 = vmatpush1.msra.mxu0 0.0
  %1662 = vmatprep.subr.mxu0 0.0
  %1663 = vmatpush1.msra.mxu0 0.0
  %1664 = vmatprep.subr.mxu0 0.0
  %1665 = vmatpush1.msra.mxu0 0.0
  %1666 = vmatprep.subr.mxu0 0.0
  %1667 = vmatpush1.msra.mxu0 0.0
  %1668 = vmatprep.subr.mxu0 0.0
  %1669 = vmatpush1.msra.mxu0 0.0
  %1670 = vmatprep.subr.mxu0 0.0
  %1671 = vmatpush1.msra.mxu0 0.0
  %1672 = vmatprep.subr.mxu0 0.0
  %1673 = vmatpush1.msra.mxu0 0.0
  %1674 = vmatprep.subr.mxu0 0.0
  %1675 = vmatpush1.msra.mxu0 0.0
  %1676 = vmatprep.subr.mxu0 0.0
  %1677 = vmatpush1.msra.mxu0 0.0
  %1678 = vmatprep.subr.mxu0 0.0
  %1679 = vmatpush1.msra.mxu0 0.0
  %1680 = vmatprep.subr.mxu0 0.0
  %1681 = vmatpush1.msra.mxu0 0.0
  %1682 = vmatprep.subr.mxu0 0.0
  %1683 = vmatpush1.msra.mxu0 0.0
  %1684 = vmatprep.subr.mxu0 0.0
  %1685 = vmatpush1.msra.mxu0 0.0
  %1686 = vmatprep.mubr.f32.mxu0 0.0
  %1687 = vmatmul.mubr.f32.gmra.mrb[0].mxu0 %v1527
  %v1688 = vpop.f32.mrb[0].mxu0
  %v1689 = vadd.f32 %v1524, %v1688
  %v1690 = vpop.f32.mrb[0].mxu0
  %1691 = vmatprep.mubr.f32.mxu0 0.0
  %1692 = vmatmul.mubr.f32.gmra.mrb[0].mxu0 %v1530
  %v1693 = vpop.f32.mrb[0].mxu0
  %v1694 = vadd.f32 %v1524, %v1693
  %v1695 = vpop.f32.mrb[0].mxu0
  %1696 = vmatprep.mubr.f32.mxu0 0.0
  %1697 = vmatmul.mubr.f32.gmra.mrb[0].mxu0 %v1533
  %v1698 = vpop.f32.mrb[0].mxu0
  %v1699 = vadd.f32 %v1524, %v1698
  %v1700 = vpop.f32.mrb[0].mxu0
  %1701 = vmatprep.mubr.f32.mxu0 0.0
  %1702 = vmatmul.mubr.f32.gmra.mrb[0].mxu0 %v1536
  %v1703 = vpop.f32.mrb[0].mxu0
  %v1704 = vadd.f32 %v1524, %v1703
  %v1705 = vpop.f32.mrb[0].mxu0
  %1706 = vmatprep.mubr.f32.mxu0 0.0
  %1707 = vmatmul.mubr.f32.gmra.mrb[0].mxu0 %v1539
  %v1708 = vpop.f32.mrb[0].mxu0
  %v1709 = vadd.f32 %v1524, %v1708
  %v1710 = vpop.f32.mrb[0].mxu0
  %1711 = vmatprep.mubr.f32.mxu0 0.0
  %1712 = vmatmul.mubr.f32.gmra.mrb[0].mxu0 %v1542
  %v1713 = vpop.f32.mrb[0].mxu0
  %v1714 = vadd.f32 %v1524, %v1713
  %v1715 = vpop.f32.mrb[0].mxu0
  %1716 = vmatprep.mubr.f32.mxu0 0.0
  %1717 = vmatmul.mubr.f32.gmra.mrb[0].mxu0 %v1545
  %v1718 = vpop.f32.mrb[0].mxu0
  %v1719 = vadd.f32 %v1524, %v1718
  %v1720 = vpop.f32.mrb[0].mxu0
  %1721 = vmatprep.mubr.f32.mxu0 0.0
  %1722 = vmatmul.mubr.f32.gmra.mrb[0].mxu0 %v1548
  %v1723 = vpop.f32.mrb[0].mxu0
  %v1724 = vadd.f32 %v1524, %v1723
  %v1725 = vpop.f32.mrb[0].mxu0
  %1726 = vmatprep.mubr.f32.mxu0 0.0
  %1727 = vmatmul.mubr.f32.gmra.mrb[0].mxu0 %v1551
  %v1728 = vpop.f32.mrb[0].mxu0
  %v1729 = vadd.f32 %v1524, %v1728
  %v1730 = vpop.f32.mrb[0].mxu0
  %1731 = vmatprep.mubr.f32.mxu0 0.0
  %1732 = vmatmul.mubr.f32.gmra.mrb[0].mxu0 %v1554
  %v1733 = vpop.f32.mrb[0].mxu0
  %v1734 = vadd.f32 %v1524, %v1733
  %v1735 = vpop.f32.mrb[0].mxu0
  %1736 = vmatprep.mubr.f32.mxu0 0.0
  %1737 = vmatmul.mubr.f32.gmra.mrb[0].mxu0 %v1557
  %v1738 = vpop.f32.mrb[0].mxu0
  %v1739 = vadd.f32 %v1524, %v1738
  %v1740 = vpop.f32.mrb[0].mxu0
  %1741 = vmatprep.mubr.f32.mxu0 0.0
  %1742 = vmatmul.mubr.f32.gmra.mrb[0].mxu0 %v1560
  %v1743 = vpop.f32.mrb[0].mxu0
  %v1744 = vadd.f32 %v1524, %v1743
  %v1745 = vpop.f32.mrb[0].mxu0
  %1746 = vmatprep.mubr.f32.mxu0 0.0
  %1747 = vmatmul.mubr.f32.gmra.mrb[0].mxu0 %v1563
  %v1748 = vpop.f32.mrb[0].mxu0
  %v1749 = vadd.f32 %v1524, %v1748
  %v1750 = vpop.f32.mrb[0].mxu0
  %1751 = vmatprep.mubr.f32.mxu0 0.0
  %1752 = vmatmul.mubr.f32.gmra.mrb[0].mxu0 %v1566
  %v1753 = vpop.f32.mrb[0].mxu0
  %v1754 = vadd.f32 %v1524, %v1753
  %v1755 = vpop.f32.mrb[0].mxu0
  %1756 = vmatprep.mubr.f32.mxu0 0.0
  %1757 = vmatmul.mubr.f32.gmra.mrb[0].mxu0 %v1569
  %v1758 = vpop.f32.mrb[0].mxu0
  %v1759 = vadd.f32 %v1524, %v1758
  %v1760 = vpop.f32.mrb[0].mxu0
  %1761 = vmatprep.mubr.f32.mxu0 0.0
  %1762 = vmatmul.mubr.f32.gmra.mrb[0].mxu0 %v1572
  %v1763 = vpop.f32.mrb[0].mxu0
  %v1764 = vadd.f32 %v1524, %v1763
  %v1765 = vpop.f32.mrb[0].mxu0
  %1766 = vmatprep.mubr.f32.mxu0 0.0
  %1767 = vmatmul.mubr.f32.gmra.mrb[0].mxu0 %v1575
  %v1768 = vpop.f32.mrb[0].mxu0
  %v1769 = vadd.f32 %v1524, %v1768
  %v1770 = vpop.f32.mrb[0].mxu0
  %1771 = vmatprep.mubr.f32.mxu0 0.0
  %1772 = vmatmul.mubr.f32.gmra.mrb[0].mxu0 %v1578
  %v1773 = vpop.f32.mrb[0].mxu0
  %v1774 = vadd.f32 %v1524, %v1773
  %v1775 = vpop.f32.mrb[0].mxu0
  %1776 = vmatprep.mubr.f32.mxu0 0.0
  %1777 = vmatmul.mubr.f32.gmra.mrb[0].mxu0 %v1581
  %v1778 = vpop.f32.mrb[0].mxu0
  %v1779 = vadd.f32 %v1524, %v1778
  %v1780 = vpop.f32.mrb[0].mxu0
  %1781 = vmatprep.mubr.f32.mxu0 0.0
  %1782 = vmatmul.mubr.f32.gmra.mrb[0].mxu0 %v1584
  %v1783 = vpop.f32.mrb[0].mxu0
  %v1784 = vadd.f32 %v1524, %v1783
  %v1785 = vpop.f32.mrb[0].mxu0
  %1786 = vmatprep.mubr.f32.mxu0 0.0
  %1787 = vmatmul.mubr.f32.gmra.mrb[0].mxu0 %v1587
  %v1788 = vpop.f32.mrb[0].mxu0
  %v1789 = vadd.f32 %v1524, %v1788
  %v1790 = vpop.f32.mrb[0].mxu0
  %1791 = vmatprep.mubr.f32.mxu0 0.0
  %1792 = vmatmul.mubr.f32.gmra.mrb[0].mxu0 %v1590
  %v1793 = vpop.f32.mrb[0].mxu0
  %v1794 = vadd.f32 %v1524, %v1793
  %v1795 = vpop.f32.mrb[0].mxu0
  %1796 = vmatprep.mubr.f32.mxu0 0.0
  %1797 = vmatmul.mubr.f32.gmra.mrb[0].mxu0 %v1593
  %v1798 = vpop.f32.mrb[0].mxu0
  %v1799 = vadd.f32 %v1524, %v1798
  %v1800 = vpop.f32.mrb[0].mxu0
  %1801 = vmatprep.mubr.f32.mxu0 0.0
  %1802 = vmatmul.mubr.f32.gmra.mrb[0].mxu0 %v1596
  %v1803 = vpop.f32.mrb[0].mxu0
  %v1804 = vadd.f32 %v1524, %v1803
  %v1805 = vpop.f32.mrb[0].mxu0
  %1806 = vmatprep.mubr.f32.mxu0 0.0
  %1807 = vmatmul.mubr.f32.gmra.mrb[0].mxu0 %v1599
  %v1808 = vpop.f32.mrb[0].mxu0
  %v1809 = vadd.f32 %v1524, %v1808
  %v1810 = vpop.f32.mrb[0].mxu0
  %1811 = vmatprep.mubr.f32.mxu0 0.0
  %1812 = vmatmul.mubr.f32.gmra.mrb[0].mxu0 %v1602
  %v1813 = vpop.f32.mrb[0].mxu0
  %v1814 = vadd.f32 %v1524, %v1813
  %v1815 = vpop.f32.mrb[0].mxu0
  %1816 = vmatprep.mubr.f32.mxu0 0.0
  %1817 = vmatmul.mubr.f32.gmra.mrb[0].mxu0 %v1605
  %v1818 = vpop.f32.mrb[0].mxu0
  %v1819 = vadd.f32 %v1524, %v1818
  %v1820 = vpop.f32.mrb[0].mxu0
  %1821 = vmatprep.mubr.f32.mxu0 0.0
  %1822 = vmatmul.mubr.f32.gmra.mrb[0].mxu0 %v1608
  %v1823 = vpop.f32.mrb[0].mxu0
  %v1824 = vadd.f32 %v1524, %v1823
  %v1825 = vpop.f32.mrb[0].mxu0
  %1826 = vmatprep.mubr.f32.mxu0 0.0
  %1827 = vmatmul.mubr.f32.gmra.mrb[0].mxu0 %v1611
  %v1828 = vpop.f32.mrb[0].mxu0
  %v1829 = vadd.f32 %v1524, %v1828
  %v1830 = vpop.f32.mrb[0].mxu0
  %1831 = vmatprep.mubr.f32.mxu0 0.0
  %1832 = vmatmul.mubr.f32.gmra.mrb[0].mxu0 %v1614
  %v1833 = vpop.f32.mrb[0].mxu0
  %v1834 = vadd.f32 %v1524, %v1833
  %v1835 = vpop.f32.mrb[0].mxu0
  %1836 = vmatprep.mubr.f32.mxu0 0.0
  %1837 = vmatmul.mubr.f32.gmra.mrb[0].mxu0 %v1617
  %v1838 = vpop.f32.mrb[0].mxu0
  %v1839 = vadd.f32 %v1524, %v1838
  %v1840 = vpop.f32.mrb[0].mxu0
  %1841 = vmatprep.mubr.f32.mxu0 0.0
  %1842 = vmatmul.mubr.f32.gmra.mrb[0].mxu0 %v1620
  %v1843 = vpop.f32.mrb[0].mxu0
  %v1844 = vadd.f32 %v1524, %v1843
  %v1845 = vpop.f32.mrb[0].mxu0
  %1846 = vdwg.mxu0
  %v1847 = vmax.f32 %v1689, 0.0
  %v1848 = vmax.f32 %v1694, 0.0
  %v1849 = vmax.f32 %v1699, 0.0
  %v1850 = vmax.f32 %v1704, 0.0
  %v1851 = vmax.f32 %v1709, 0.0
  %v1852 = vmax.f32 %v1714, 0.0
  %v1853 = vmax.f32 %v1719, 0.0
  %v1854 = vmax.f32 %v1724, 0.0
  %v1855 = vmax.f32 %v1729, 0.0
  %v1856 = vmax.f32 %v1734, 0.0
  %v1857 = vmax.f32 %v1739, 0.0
  %v1858 = vmax.f32 %v1744, 0.0
  %v1859 = vmax.f32 %v1749, 0.0
  %v1860 = vmax.f32 %v1754, 0.0
  %v1861 = vmax.f32 %v1759, 0.0
  %v1862 = vmax.f32 %v1764, 0.0
  %v1863 = vmax.f32 %v1769, 0.0
  %v1864 = vmax.f32 %v1774, 0.0
  %v1865 = vmax.f32 %v1779, 0.0
  %v1866 = vmax.f32 %v1784, 0.0
  %v1867 = vmax.f32 %v1789, 0.0
  %v1868 = vmax.f32 %v1794, 0.0
  %v1869 = vmax.f32 %v1799, 0.0
  %v1870 = vmax.f32 %v1804, 0.0
  %v1871 = vmax.f32 %v1809, 0.0
  %v1872 = vmax.f32 %v1814, 0.0
  %v1873 = vmax.f32 %v1819, 0.0
  %v1874 = vmax.f32 %v1824, 0.0
  %v1875 = vmax.f32 %v1829, 0.0
  %v1876 = vmax.f32 %v1834, 0.0
  %v1877 = vmax.f32 %v1839, 0.0
  %v1878 = vmax.f32 %v1844, 0.0
  %s1879 = scalar_lea.vmem %s3, 128
  %v1880 = vld [vmem:[%s1879] sm:$0xff]
  %v1881 = vld [vmem:[%s1879 + $0x8] sm:$0xff]
  %v1882 = vld [vmem:[%s1879 + $0x10] sm:$0xff]
  %v1883 = vld [vmem:[%s1879 + $0x18] sm:$0xff]
  %v1884 = vld [vmem:[%s1879 + $0x20] sm:$0xff]
  %v1885 = vld [vmem:[%s1879 + $0x28] sm:$0xff]
  %v1886 = vld [vmem:[%s1879 + $0x30] sm:$0xff]
  %v1887 = vld [vmem:[%s1879 + $0x38] sm:$0xff]
  %s1888 = scalar_lea.vmem %s4, 2
  %v1889 = vld [vmem:[%s1888] sm:$0x1]
  %v1891 = vlaneseq
  %v1892 = vshrl.u32 %v1891, 7
  %v1893 = vsub.s32 0, %v1892
  %v1894 = vrot.slane %v1889, %v1893
  %v1897 = vsel %vm429, %v1847, 0
  %v1900 = vsel %vm429, %v1848, 0
  %v1903 = vsel %vm429, %v1849, 0
  %v1906 = vsel %vm429, %v1850, 0
  %v1909 = vsel %vm429, %v1851, 0
  %v1912 = vsel %vm429, %v1852, 0
  %v1915 = vsel %vm429, %v1853, 0
  %v1918 = vsel %vm429, %v1854, 0
  %v1921 = vsel %vm429, %v1855, 0
  %v1924 = vsel %vm429, %v1856, 0
  %v1927 = vsel %vm429, %v1857, 0
  %v1930 = vsel %vm429, %v1858, 0
  %v1933 = vsel %vm429, %v1859, 0
  %v1936 = vsel %vm429, %v1860, 0
  %v1939 = vsel %vm429, %v1861, 0
  %v1942 = vsel %vm429, %v1862, 0
  %v1945 = vsel %vm429, %v1863, 0
  %v1948 = vsel %vm429, %v1864, 0
  %v1951 = vsel %vm429, %v1865, 0
  %v1954 = vsel %vm429, %v1866, 0
  %v1957 = vsel %vm429, %v1867, 0
  %v1960 = vsel %vm429, %v1868, 0
  %v1963 = vsel %vm429, %v1869, 0
  %v1966 = vsel %vm429, %v1870, 0
  %v1969 = vsel %vm429, %v1871, 0
  %v1972 = vsel %vm429, %v1872, 0
  %v1975 = vsel %vm429, %v1873, 0
  %v1978 = vsel %vm429, %v1874, 0
  %v1981 = vsel %vm429, %v1875, 0
  %v1984 = vsel %vm429, %v1876, 0
  %v1987 = vsel %vm429, %v1877, 0
  %v1990 = vsel %vm429, %v1878, 0
  %1992 = vmatprep.subr.mxu0 0.0
  %1993 = vmatpush1.msra.mxu0 %v1880
  %1994 = vmatprep.subr.mxu0 0.0
  %1995 = vmatpush1.msra.mxu0 %v1881
  %1996 = vmatprep.subr.mxu0 0.0
  %1997 = vmatpush1.msra.mxu0 %v1882
  %1998 = vmatprep.subr.mxu0 0.0
  %1999 = vmatpush1.msra.mxu0 %v1883
  %2000 = vmatprep.subr.mxu0 0.0
  %2001 = vmatpush1.msra.mxu0 %v1884
  %2002 = vmatprep.subr.mxu0 0.0
  %2003 = vmatpush1.msra.mxu0 %v1885
  %2004 = vmatprep.subr.mxu0 0.0
  %2005 = vmatpush1.msra.mxu0 %v1886
  %2006 = vmatprep.subr.mxu0 0.0
  %2007 = vmatpush1.msra.mxu0 %v1887
  %2008 = vmatprep.subr.mxu0 0.0
  %2009 = vmatpush1.msra.mxu0 0.0
  %2010 = vmatprep.subr.mxu0 0.0
  %2011 = vmatpush1.msra.mxu0 0.0
  %2012 = vmatprep.subr.mxu0 0.0
  %2013 = vmatpush1.msra.mxu0 0.0
  %2014 = vmatprep.subr.mxu0 0.0
  %2015 = vmatpush1.msra.mxu0 0.0
  %2016 = vmatprep.subr.mxu0 0.0
  %2017 = vmatpush1.msra.mxu0 0.0
  %2018 = vmatprep.subr.mxu0 0.0
  %2019 = vmatpush1.msra.mxu0 0.0
  %2020 = vmatprep.subr.mxu0 0.0
  %2021 = vmatpush1.msra.mxu0 0.0
  %2022 = vmatprep.subr.mxu0 0.0
  %2023 = vmatpush1.msra.mxu0 0.0
  %2024 = vmatprep.subr.mxu0 0.0
  %2025 = vmatpush1.msra.mxu0 0.0
  %2026 = vmatprep.subr.mxu0 0.0
  %2027 = vmatpush1.msra.mxu0 0.0
  %2028 = vmatprep.subr.mxu0 0.0
  %2029 = vmatpush1.msra.mxu0 0.0
  %2030 = vmatprep.subr.mxu0 0.0
  %2031 = vmatpush1.msra.mxu0 0.0
  %2032 = vmatprep.subr.mxu0 0.0
  %2033 = vmatpush1.msra.mxu0 0.0
  %2034 = vmatprep.subr.mxu0 0.0
  %2035 = vmatpush1.msra.mxu0 0.0
  %2036 = vmatprep.subr.mxu0 0.0
  %2037 = vmatpush1.msra.mxu0 0.0
  %2038 = vmatprep.subr.mxu0 0.0
  %2039 = vmatpush1.msra.mxu0 0.0
  %2040 = vmatprep.subr.mxu0 0.0
  %2041 = vmatpush1.msra.mxu0 0.0
  %2042 = vmatprep.subr.mxu0 0.0
  %2043 = vmatpush1.msra.mxu0 0.0
  %2044 = vmatprep.subr.mxu0 0.0
  %2045 = vmatpush1.msra.mxu0 0.0
  %2046 = vmatprep.subr.mxu0 0.0
  %2047 = vmatpush1.msra.mxu0 0.0
  %2048 = vmatprep.subr.mxu0 0.0
  %2049 = vmatpush1.msra.mxu0 0.0
  %2050 = vmatprep.subr.mxu0 0.0
  %2051 = vmatpush1.msra.mxu0 0.0
  %2052 = vmatprep.subr.mxu0 0.0
  %2053 = vmatpush1.msra.mxu0 0.0
  %2054 = vmatprep.subr.mxu0 0.0
  %2055 = vmatpush1.msra.mxu0 0.0
  %2056 = vmatprep.mubr.f32.mxu0 0.0
  %2057 = vmatmul.mubr.f32.gmra.mrb[0].mxu0 %v1897
  %v2058 = vpop.f32.mrb[0].mxu0
  %v2059 = vadd.f32 %v1894, %v2058
  %v2060 = vpop.f32.mrb[0].mxu0
  %2061 = vmatprep.mubr.f32.mxu0 0.0
  %2062 = vmatmul.mubr.f32.gmra.mrb[0].mxu0 %v1900
  %v2063 = vpop.f32.mrb[0].mxu0
  %v2064 = vadd.f32 %v1894, %v2063
  %v2065 = vpop.f32.mrb[0].mxu0
  %2066 = vmatprep.mubr.f32.mxu0 0.0
  %2067 = vmatmul.mubr.f32.gmra.mrb[0].mxu0 %v1903
  %v2068 = vpop.f32.mrb[0].mxu0
  %v2069 = vadd.f32 %v1894, %v2068
  %v2070 = vpop.f32.mrb[0].mxu0
  %2071 = vmatprep.mubr.f32.mxu0 0.0
  %2072 = vmatmul.mubr.f32.gmra.mrb[0].mxu0 %v1906
  %v2073 = vpop.f32.mrb[0].mxu0
  %v2074 = vadd.f32 %v1894, %v2073
  %v2075 = vpop.f32.mrb[0].mxu0
  %2076 = vmatprep.mubr.f32.mxu0 0.0
  %2077 = vmatmul.mubr.f32.gmra.mrb[0].mxu0 %v1909
  %v2078 = vpop.f32.mrb[0].mxu0
  %v2079 = vadd.f32 %v1894, %v2078
  %v2080 = vpop.f32.mrb[0].mxu0
  %2081 = vmatprep.mubr.f32.mxu0 0.0
  %2082 = vmatmul.mubr.f32.gmra.mrb[0].mxu0 %v1912
  %v2083 = vpop.f32.mrb[0].mxu0
  %v2084 = vadd.f32 %v1894, %v2083
  %v2085 = vpop.f32.mrb[0].mxu0
  %2086 = vmatprep.mubr.f32.mxu0 0.0
  %2087 = vmatmul.mubr.f32.gmra.mrb[0].mxu0 %v1915
  %v2088 = vpop.f32.mrb[0].mxu0
  %v2089 = vadd.f32 %v1894, %v2088
  %v2090 = vpop.f32.mrb[0].mxu0
  %2091 = vmatprep.mubr.f32.mxu0 0.0
  %2092 = vmatmul.mubr.f32.gmra.mrb[0].mxu0 %v1918
  %v2093 = vpop.f32.mrb[0].mxu0
  %v2094 = vadd.f32 %v1894, %v2093
  %v2095 = vpop.f32.mrb[0].mxu0
  %2096 = vmatprep.mubr.f32.mxu0 0.0
  %2097 = vmatmul.mubr.f32.gmra.mrb[0].mxu0 %v1921
  %v2098 = vpop.f32.mrb[0].mxu0
  %v2099 = vadd.f32 %v1894, %v2098
  %v2100 = vpop.f32.mrb[0].mxu0
  %2101 = vmatprep.mubr.f32.mxu0 0.0
  %2102 = vmatmul.mubr.f32.gmra.mrb[0].mxu0 %v1924
  %v2103 = vpop.f32.mrb[0].mxu0
  %v2104 = vadd.f32 %v1894, %v2103
  %v2105 = vpop.f32.mrb[0].mxu0
  %2106 = vmatprep.mubr.f32.mxu0 0.0
  %2107 = vmatmul.mubr.f32.gmra.mrb[0].mxu0 %v1927
  %v2108 = vpop.f32.mrb[0].mxu0
  %v2109 = vadd.f32 %v1894, %v2108
  %v2110 = vpop.f32.mrb[0].mxu0
  %2111 = vmatprep.mubr.f32.mxu0 0.0
  %2112 = vmatmul.mubr.f32.gmra.mrb[0].mxu0 %v1930
  %v2113 = vpop.f32.mrb[0].mxu0
  %v2114 = vadd.f32 %v1894, %v2113
  %v2115 = vpop.f32.mrb[0].mxu0
  %2116 = vmatprep.mubr.f32.mxu0 0.0
  %2117 = vmatmul.mubr.f32.gmra.mrb[0].mxu0 %v1933
  %v2118 = vpop.f32.mrb[0].mxu0
  %v2119 = vadd.f32 %v1894, %v2118
  %v2120 = vpop.f32.mrb[0].mxu0
  %2121 = vmatprep.mubr.f32.mxu0 0.0
  %2122 = vmatmul.mubr.f32.gmra.mrb[0].mxu0 %v1936
  %v2123 = vpop.f32.mrb[0].mxu0
  %v2124 = vadd.f32 %v1894, %v2123
  %v2125 = vpop.f32.mrb[0].mxu0
  %2126 = vmatprep.mubr.f32.mxu0 0.0
  %2127 = vmatmul.mubr.f32.gmra.mrb[0].mxu0 %v1939
  %v2128 = vpop.f32.mrb[0].mxu0
  %v2129 = vadd.f32 %v1894, %v2128
  %v2130 = vpop.f32.mrb[0].mxu0
  %2131 = vmatprep.mubr.f32.mxu0 0.0
  %2132 = vmatmul.mubr.f32.gmra.mrb[0].mxu0 %v1942
  %v2133 = vpop.f32.mrb[0].mxu0
  %v2134 = vadd.f32 %v1894, %v2133
  %v2135 = vpop.f32.mrb[0].mxu0
  %2136 = vmatprep.mubr.f32.mxu0 0.0
  %2137 = vmatmul.mubr.f32.gmra.mrb[0].mxu0 %v1945
  %v2138 = vpop.f32.mrb[0].mxu0
  %v2139 = vadd.f32 %v1894, %v2138
  %v2140 = vpop.f32.mrb[0].mxu0
  %2141 = vmatprep.mubr.f32.mxu0 0.0
  %2142 = vmatmul.mubr.f32.gmra.mrb[0].mxu0 %v1948
  %v2143 = vpop.f32.mrb[0].mxu0
  %v2144 = vadd.f32 %v1894, %v2143
  %v2145 = vpop.f32.mrb[0].mxu0
  %2146 = vmatprep.mubr.f32.mxu0 0.0
  %2147 = vmatmul.mubr.f32.gmra.mrb[0].mxu0 %v1951
  %v2148 = vpop.f32.mrb[0].mxu0
  %v2149 = vadd.f32 %v1894, %v2148
  %v2150 = vpop.f32.mrb[0].mxu0
  %2151 = vmatprep.mubr.f32.mxu0 0.0
  %2152 = vmatmul.mubr.f32.gmra.mrb[0].mxu0 %v1954
  %v2153 = vpop.f32.mrb[0].mxu0
  %v2154 = vadd.f32 %v1894, %v2153
  %v2155 = vpop.f32.mrb[0].mxu0
  %2156 = vmatprep.mubr.f32.mxu0 0.0
  %2157 = vmatmul.mubr.f32.gmra.mrb[0].mxu0 %v1957
  %v2158 = vpop.f32.mrb[0].mxu0
  %v2159 = vadd.f32 %v1894, %v2158
  %v2160 = vpop.f32.mrb[0].mxu0
  %2161 = vmatprep.mubr.f32.mxu0 0.0
  %2162 = vmatmul.mubr.f32.gmra.mrb[0].mxu0 %v1960
  %v2163 = vpop.f32.mrb[0].mxu0
  %v2164 = vadd.f32 %v1894, %v2163
  %v2165 = vpop.f32.mrb[0].mxu0
  %2166 = vmatprep.mubr.f32.mxu0 0.0
  %2167 = vmatmul.mubr.f32.gmra.mrb[0].mxu0 %v1963
  %v2168 = vpop.f32.mrb[0].mxu0
  %v2169 = vadd.f32 %v1894, %v2168
  %v2170 = vpop.f32.mrb[0].mxu0
  %2171 = vmatprep.mubr.f32.mxu0 0.0
  %2172 = vmatmul.mubr.f32.gmra.mrb[0].mxu0 %v1966
  %v2173 = vpop.f32.mrb[0].mxu0
  %v2174 = vadd.f32 %v1894, %v2173
  %v2175 = vpop.f32.mrb[0].mxu0
  %2176 = vmatprep.mubr.f32.mxu0 0.0
  %2177 = vmatmul.mubr.f32.gmra.mrb[0].mxu0 %v1969
  %v2178 = vpop.f32.mrb[0].mxu0
  %v2179 = vadd.f32 %v1894, %v2178
  %v2180 = vpop.f32.mrb[0].mxu0
  %2181 = vmatprep.mubr.f32.mxu0 0.0
  %2182 = vmatmul.mubr.f32.gmra.mrb[0].mxu0 %v1972
  %v2183 = vpop.f32.mrb[0].mxu0
  %v2184 = vadd.f32 %v1894, %v2183
  %v2185 = vpop.f32.mrb[0].mxu0
  %2186 = vmatprep.mubr.f32.mxu0 0.0
  %2187 = vmatmul.mubr.f32.gmra.mrb[0].mxu0 %v1975
  %v2188 = vpop.f32.mrb[0].mxu0
  %v2189 = vadd.f32 %v1894, %v2188
  %v2190 = vpop.f32.mrb[0].mxu0
  %2191 = vmatprep.mubr.f32.mxu0 0.0
  %2192 = vmatmul.mubr.f32.gmra.mrb[0].mxu0 %v1978
  %v2193 = vpop.f32.mrb[0].mxu0
  %v2194 = vadd.f32 %v1894, %v2193
  %v2195 = vpop.f32.mrb[0].mxu0
  %2196 = vmatprep.mubr.f32.mxu0 0.0
  %2197 = vmatmul.mubr.f32.gmra.mrb[0].mxu0 %v1981
  %v2198 = vpop.f32.mrb[0].mxu0
  %v2199 = vadd.f32 %v1894, %v2198
  %v2200 = vpop.f32.mrb[0].mxu0
  %2201 = vmatprep.mubr.f32.mxu0 0.0
  %2202 = vmatmul.mubr.f32.gmra.mrb[0].mxu0 %v1984
  %v2203 = vpop.f32.mrb[0].mxu0
  %v2204 = vadd.f32 %v1894, %v2203
  %v2205 = vpop.f32.mrb[0].mxu0
  %2206 = vmatprep.mubr.f32.mxu0 0.0
  %2207 = vmatmul.mubr.f32.gmra.mrb[0].mxu0 %v1987
  %v2208 = vpop.f32.mrb[0].mxu0
  %v2209 = vadd.f32 %v1894, %v2208
  %v2210 = vpop.f32.mrb[0].mxu0
  %2211 = vmatprep.mubr.f32.mxu0 0.0
  %2212 = vmatmul.mubr.f32.gmra.mrb[0].mxu0 %v1990
  %v2213 = vpop.f32.mrb[0].mxu0
  %v2214 = vadd.f32 %v1894, %v2213
  %v2215 = vpop.f32.mrb[0].mxu0
  %2216 = vdwg.mxu0
  %v2217 = vadd.f32 %v2059, %v1484
  %v2218 = vadd.f32 %v2064, %v1485
  %v2219 = vadd.f32 %v2069, %v1486
  %v2220 = vadd.f32 %v2074, %v1487
  %v2221 = vadd.f32 %v2079, %v1488
  %v2222 = vadd.f32 %v2084, %v1489
  %v2223 = vadd.f32 %v2089, %v1490
  %v2224 = vadd.f32 %v2094, %v1491
  %v2225 = vadd.f32 %v2099, %v1492
  %v2226 = vadd.f32 %v2104, %v1493
  %v2227 = vadd.f32 %v2109, %v1494
  %v2228 = vadd.f32 %v2114, %v1495
  %v2229 = vadd.f32 %v2119, %v1496
  %v2230 = vadd.f32 %v2124, %v1497
  %v2231 = vadd.f32 %v2129, %v1498
  %v2232 = vadd.f32 %v2134, %v1499
  %v2233 = vadd.f32 %v2139, %v1500
  %v2234 = vadd.f32 %v2144, %v1501
  %v2235 = vadd.f32 %v2149, %v1502
  %v2236 = vadd.f32 %v2154, %v1503
  %v2237 = vadd.f32 %v2159, %v1504
  %v2238 = vadd.f32 %v2164, %v1505
  %v2239 = vadd.f32 %v2169, %v1506
  %v2240 = vadd.f32 %v2174, %v1507
  %v2241 = vadd.f32 %v2179, %v1508
  %v2242 = vadd.f32 %v2184, %v1509
  %v2243 = vadd.f32 %v2189, %v1510
  %v2244 = vadd.f32 %v2194, %v1511
  %v2245 = vadd.f32 %v2199, %v1512
  %v2246 = vadd.f32 %v2204, %v1513
  %v2247 = vadd.f32 %v2209, %v1514
  %v2248 = vadd.f32 %v2214, %v1515
  %s2249 = scalar_lea.vmem %s1, 24
  %v2250 = vld [vmem:[%s2249] sm:$0xff]
  %s2251 = scalar_lea.vmem %s2, 3
  %v2252 = vld [vmem:[%s2251] sm:$0x1]
  %v2254 = vlaneseq
  %v2255 = vshrl.u32 %v2254, 7
  %v2256 = vsub.s32 0, %v2255
  %v2257 = vrot.slane %v2252, %v2256
  %v2260 = vsel %vm60, %v2217, 0
  %v2263 = vsel %vm60, %v2218, 0
  %v2266 = vsel %vm60, %v2219, 0
  %v2269 = vsel %vm60, %v2220, 0
  %v2272 = vsel %vm60, %v2221, 0
  %v2275 = vsel %vm60, %v2222, 0
  %v2278 = vsel %vm60, %v2223, 0
  %v2281 = vsel %vm60, %v2224, 0
  %v2284 = vsel %vm60, %v2225, 0
  %v2287 = vsel %vm60, %v2226, 0
  %v2290 = vsel %vm60, %v2227, 0
  %v2293 = vsel %vm60, %v2228, 0
  %v2296 = vsel %vm60, %v2229, 0
  %v2299 = vsel %vm60, %v2230, 0
  %v2302 = vsel %vm60, %v2231, 0
  %v2305 = vsel %vm60, %v2232, 0
  %v2308 = vsel %vm60, %v2233, 0
  %v2311 = vsel %vm60, %v2234, 0
  %v2314 = vsel %vm60, %v2235, 0
  %v2317 = vsel %vm60, %v2236, 0
  %v2320 = vsel %vm60, %v2237, 0
  %v2323 = vsel %vm60, %v2238, 0
  %v2326 = vsel %vm60, %v2239, 0
  %v2329 = vsel %vm60, %v2240, 0
  %v2332 = vsel %vm60, %v2241, 0
  %v2335 = vsel %vm60, %v2242, 0
  %v2338 = vsel %vm60, %v2243, 0
  %v2341 = vsel %vm60, %v2244, 0
  %v2344 = vsel %vm60, %v2245, 0
  %v2347 = vsel %vm60, %v2246, 0
  %v2350 = vsel %vm60, %v2247, 0
  %v2353 = vsel %vm60, %v2248, 0
  %2355 = vmatprep.subr.mxu0 0.0
  %2356 = vmatpush1.msra.mxu0 %v2250
  %2357 = vmatprep.subr.mxu0 0.0
  %2358 = vmatpush1.msra.mxu0 0.0
  %2359 = vmatprep.subr.mxu0 0.0
  %2360 = vmatpush1.msra.mxu0 0.0
  %2361 = vmatprep.subr.mxu0 0.0
  %2362 = vmatpush1.msra.mxu0 0.0
  %2363 = vmatprep.subr.mxu0 0.0
  %2364 = vmatpush1.msra.mxu0 0.0
  %2365 = vmatprep.subr.mxu0 0.0
  %2366 = vmatpush1.msra.mxu0 0.0
  %2367 = vmatprep.subr.mxu0 0.0
  %2368 = vmatpush1.msra.mxu0 0.0
  %2369 = vmatprep.subr.mxu0 0.0
  %2370 = vmatpush1.msra.mxu0 0.0
  %2371 = vmatprep.subr.mxu0 0.0
  %2372 = vmatpush1.msra.mxu0 0.0
  %2373 = vmatprep.subr.mxu0 0.0
  %2374 = vmatpush1.msra.mxu0 0.0
  %2375 = vmatprep.subr.mxu0 0.0
  %2376 = vmatpush1.msra.mxu0 0.0
  %2377 = vmatprep.subr.mxu0 0.0
  %2378 = vmatpush1.msra.mxu0 0.0
  %2379 = vmatprep.subr.mxu0 0.0
  %2380 = vmatpush1.msra.mxu0 0.0
  %2381 = vmatprep.subr.mxu0 0.0
  %2382 = vmatpush1.msra.mxu0 0.0
  %2383 = vmatprep.subr.mxu0 0.0
  %2384 = vmatpush1.msra.mxu0 0.0
  %2385 = vmatprep.subr.mxu0 0.0
  %2386 = vmatpush1.msra.mxu0 0.0
  %2387 = vmatprep.subr.mxu0 0.0
  %2388 = vmatpush1.msra.mxu0 0.0
  %2389 = vmatprep.subr.mxu0 0.0
  %2390 = vmatpush1.msra.mxu0 0.0
  %2391 = vmatprep.subr.mxu0 0.0
  %2392 = vmatpush1.msra.mxu0 0.0
  %2393 = vmatprep.subr.mxu0 0.0
  %2394 = vmatpush1.msra.mxu0 0.0
  %2395 = vmatprep.subr.mxu0 0.0
  %2396 = vmatpush1.msra.mxu0 0.0
  %2397 = vmatprep.subr.mxu0 0.0
  %2398 = vmatpush1.msra.mxu0 0.0
  %2399 = vmatprep.subr.mxu0 0.0
  %2400 = vmatpush1.msra.mxu0 0.0
  %2401 = vmatprep.subr.mxu0 0.0
  %2402 = vmatpush1.msra.mxu0 0.0
  %2403 = vmatprep.subr.mxu0 0.0
  %2404 = vmatpush1.msra.mxu0 0.0
  %2405 = vmatprep.subr.mxu0 0.0
  %2406 = vmatpush1.msra.mxu0 0.0
  %2407 = vmatprep.subr.mxu0 0.0
  %2408 = vmatpush1.msra.mxu0 0.0
  %2409 = vmatprep.subr.mxu0 0.0
  %2410 = vmatpush1.msra.mxu0 0.0
  %2411 = vmatprep.subr.mxu0 0.0
  %2412 = vmatpush1.msra.mxu0 0.0
  %2413 = vmatprep.subr.mxu0 0.0
  %2414 = vmatpush1.msra.mxu0 0.0
  %2415 = vmatprep.subr.mxu0 0.0
  %2416 = vmatpush1.msra.mxu0 0.0
  %2417 = vmatprep.subr.mxu0 0.0
  %2418 = vmatpush1.msra.mxu0 0.0
  %2419 = vmatprep.mubr.f32.mxu0 0.0
  %2420 = vmatmul.mubr.f32.gmra.mrb[0].mxu0 %v2260
  %v2421 = vpop.f32.mrb[0].mxu0
  %v2422 = vadd.f32 %v2257, %v2421
  %v2423 = vpop.f32.mrb[0].mxu0
  %2424 = vmatprep.mubr.f32.mxu0 0.0
  %2425 = vmatmul.mubr.f32.gmra.mrb[0].mxu0 %v2263
  %v2426 = vpop.f32.mrb[0].mxu0
  %v2427 = vadd.f32 %v2257, %v2426
  %v2428 = vpop.f32.mrb[0].mxu0
  %2429 = vmatprep.mubr.f32.mxu0 0.0
  %2430 = vmatmul.mubr.f32.gmra.mrb[0].mxu0 %v2266
  %v2431 = vpop.f32.mrb[0].mxu0
  %v2432 = vadd.f32 %v2257, %v2431
  %v2433 = vpop.f32.mrb[0].mxu0
  %2434 = vmatprep.mubr.f32.mxu0 0.0
  %2435 = vmatmul.mubr.f32.gmra.mrb[0].mxu0 %v2269
  %v2436 = vpop.f32.mrb[0].mxu0
  %v2437 = vadd.f32 %v2257, %v2436
  %v2438 = vpop.f32.mrb[0].mxu0
  %2439 = vmatprep.mubr.f32.mxu0 0.0
  %2440 = vmatmul.mubr.f32.gmra.mrb[0].mxu0 %v2272
  %v2441 = vpop.f32.mrb[0].mxu0
  %v2442 = vadd.f32 %v2257, %v2441
  %v2443 = vpop.f32.mrb[0].mxu0
  %2444 = vmatprep.mubr.f32.mxu0 0.0
  %2445 = vmatmul.mubr.f32.gmra.mrb[0].mxu0 %v2275
  %v2446 = vpop.f32.mrb[0].mxu0
  %v2447 = vadd.f32 %v2257, %v2446
  %v2448 = vpop.f32.mrb[0].mxu0
  %2449 = vmatprep.mubr.f32.mxu0 0.0
  %2450 = vmatmul.mubr.f32.gmra.mrb[0].mxu0 %v2278
  %v2451 = vpop.f32.mrb[0].mxu0
  %v2452 = vadd.f32 %v2257, %v2451
  %v2453 = vpop.f32.mrb[0].mxu0
  %2454 = vmatprep.mubr.f32.mxu0 0.0
  %2455 = vmatmul.mubr.f32.gmra.mrb[0].mxu0 %v2281
  %v2456 = vpop.f32.mrb[0].mxu0
  %v2457 = vadd.f32 %v2257, %v2456
  %v2458 = vpop.f32.mrb[0].mxu0
  %2459 = vmatprep.mubr.f32.mxu0 0.0
  %2460 = vmatmul.mubr.f32.gmra.mrb[0].mxu0 %v2284
  %v2461 = vpop.f32.mrb[0].mxu0
  %v2462 = vadd.f32 %v2257, %v2461
  %v2463 = vpop.f32.mrb[0].mxu0
  %2464 = vmatprep.mubr.f32.mxu0 0.0
  %2465 = vmatmul.mubr.f32.gmra.mrb[0].mxu0 %v2287
  %v2466 = vpop.f32.mrb[0].mxu0
  %v2467 = vadd.f32 %v2257, %v2466
  %v2468 = vpop.f32.mrb[0].mxu0
  %2469 = vmatprep.mubr.f32.mxu0 0.0
  %2470 = vmatmul.mubr.f32.gmra.mrb[0].mxu0 %v2290
  %v2471 = vpop.f32.mrb[0].mxu0
  %v2472 = vadd.f32 %v2257, %v2471
  %v2473 = vpop.f32.mrb[0].mxu0
  %2474 = vmatprep.mubr.f32.mxu0 0.0
  %2475 = vmatmul.mubr.f32.gmra.mrb[0].mxu0 %v2293
  %v2476 = vpop.f32.mrb[0].mxu0
  %v2477 = vadd.f32 %v2257, %v2476
  %v2478 = vpop.f32.mrb[0].mxu0
  %2479 = vmatprep.mubr.f32.mxu0 0.0
  %2480 = vmatmul.mubr.f32.gmra.mrb[0].mxu0 %v2296
  %v2481 = vpop.f32.mrb[0].mxu0
  %v2482 = vadd.f32 %v2257, %v2481
  %v2483 = vpop.f32.mrb[0].mxu0
  %2484 = vmatprep.mubr.f32.mxu0 0.0
  %2485 = vmatmul.mubr.f32.gmra.mrb[0].mxu0 %v2299
  %v2486 = vpop.f32.mrb[0].mxu0
  %v2487 = vadd.f32 %v2257, %v2486
  %v2488 = vpop.f32.mrb[0].mxu0
  %2489 = vmatprep.mubr.f32.mxu0 0.0
  %2490 = vmatmul.mubr.f32.gmra.mrb[0].mxu0 %v2302
  %v2491 = vpop.f32.mrb[0].mxu0
  %v2492 = vadd.f32 %v2257, %v2491
  %v2493 = vpop.f32.mrb[0].mxu0
  %2494 = vmatprep.mubr.f32.mxu0 0.0
  %2495 = vmatmul.mubr.f32.gmra.mrb[0].mxu0 %v2305
  %v2496 = vpop.f32.mrb[0].mxu0
  %v2497 = vadd.f32 %v2257, %v2496
  %v2498 = vpop.f32.mrb[0].mxu0
  %2499 = vmatprep.mubr.f32.mxu0 0.0
  %2500 = vmatmul.mubr.f32.gmra.mrb[0].mxu0 %v2308
  %v2501 = vpop.f32.mrb[0].mxu0
  %v2502 = vadd.f32 %v2257, %v2501
  %v2503 = vpop.f32.mrb[0].mxu0
  %2504 = vmatprep.mubr.f32.mxu0 0.0
  %2505 = vmatmul.mubr.f32.gmra.mrb[0].mxu0 %v2311
  %v2506 = vpop.f32.mrb[0].mxu0
  %v2507 = vadd.f32 %v2257, %v2506
  %v2508 = vpop.f32.mrb[0].mxu0
  %2509 = vmatprep.mubr.f32.mxu0 0.0
  %2510 = vmatmul.mubr.f32.gmra.mrb[0].mxu0 %v2314
  %v2511 = vpop.f32.mrb[0].mxu0
  %v2512 = vadd.f32 %v2257, %v2511
  %v2513 = vpop.f32.mrb[0].mxu0
  %2514 = vmatprep.mubr.f32.mxu0 0.0
  %2515 = vmatmul.mubr.f32.gmra.mrb[0].mxu0 %v2317
  %v2516 = vpop.f32.mrb[0].mxu0
  %v2517 = vadd.f32 %v2257, %v2516
  %v2518 = vpop.f32.mrb[0].mxu0
  %2519 = vmatprep.mubr.f32.mxu0 0.0
  %2520 = vmatmul.mubr.f32.gmra.mrb[0].mxu0 %v2320
  %v2521 = vpop.f32.mrb[0].mxu0
  %v2522 = vadd.f32 %v2257, %v2521
  %v2523 = vpop.f32.mrb[0].mxu0
  %2524 = vmatprep.mubr.f32.mxu0 0.0
  %2525 = vmatmul.mubr.f32.gmra.mrb[0].mxu0 %v2323
  %v2526 = vpop.f32.mrb[0].mxu0
  %v2527 = vadd.f32 %v2257, %v2526
  %v2528 = vpop.f32.mrb[0].mxu0
  %2529 = vmatprep.mubr.f32.mxu0 0.0
  %2530 = vmatmul.mubr.f32.gmra.mrb[0].mxu0 %v2326
  %v2531 = vpop.f32.mrb[0].mxu0
  %v2532 = vadd.f32 %v2257, %v2531
  %v2533 = vpop.f32.mrb[0].mxu0
  %2534 = vmatprep.mubr.f32.mxu0 0.0
  %2535 = vmatmul.mubr.f32.gmra.mrb[0].mxu0 %v2329
  %v2536 = vpop.f32.mrb[0].mxu0
  %v2537 = vadd.f32 %v2257, %v2536
  %v2538 = vpop.f32.mrb[0].mxu0
  %2539 = vmatprep.mubr.f32.mxu0 0.0
  %2540 = vmatmul.mubr.f32.gmra.mrb[0].mxu0 %v2332
  %v2541 = vpop.f32.mrb[0].mxu0
  %v2542 = vadd.f32 %v2257, %v2541
  %v2543 = vpop.f32.mrb[0].mxu0
  %2544 = vmatprep.mubr.f32.mxu0 0.0
  %2545 = vmatmul.mubr.f32.gmra.mrb[0].mxu0 %v2335
  %v2546 = vpop.f32.mrb[0].mxu0
  %v2547 = vadd.f32 %v2257, %v2546
  %v2548 = vpop.f32.mrb[0].mxu0
  %2549 = vmatprep.mubr.f32.mxu0 0.0
  %2550 = vmatmul.mubr.f32.gmra.mrb[0].mxu0 %v2338
  %v2551 = vpop.f32.mrb[0].mxu0
  %v2552 = vadd.f32 %v2257, %v2551
  %v2553 = vpop.f32.mrb[0].mxu0
  %2554 = vmatprep.mubr.f32.mxu0 0.0
  %2555 = vmatmul.mubr.f32.gmra.mrb[0].mxu0 %v2341
  %v2556 = vpop.f32.mrb[0].mxu0
  %v2557 = vadd.f32 %v2257, %v2556
  %v2558 = vpop.f32.mrb[0].mxu0
  %2559 = vmatprep.mubr.f32.mxu0 0.0
  %2560 = vmatmul.mubr.f32.gmra.mrb[0].mxu0 %v2344
  %v2561 = vpop.f32.mrb[0].mxu0
  %v2562 = vadd.f32 %v2257, %v2561
  %v2563 = vpop.f32.mrb[0].mxu0
  %2564 = vmatprep.mubr.f32.mxu0 0.0
  %2565 = vmatmul.mubr.f32.gmra.mrb[0].mxu0 %v2347
  %v2566 = vpop.f32.mrb[0].mxu0
  %v2567 = vadd.f32 %v2257, %v2566
  %v2568 = vpop.f32.mrb[0].mxu0
  %2569 = vmatprep.mubr.f32.mxu0 0.0
  %2570 = vmatmul.mubr.f32.gmra.mrb[0].mxu0 %v2350
  %v2571 = vpop.f32.mrb[0].mxu0
  %v2572 = vadd.f32 %v2257, %v2571
  %v2573 = vpop.f32.mrb[0].mxu0
  %2574 = vmatprep.mubr.f32.mxu0 0.0
  %2575 = vmatmul.mubr.f32.gmra.mrb[0].mxu0 %v2353
  %v2576 = vpop.f32.mrb[0].mxu0
  %v2577 = vadd.f32 %v2257, %v2576
  %v2578 = vpop.f32.mrb[0].mxu0
  %2579 = vdwg.mxu0
  %v2580 = vmax.f32 %v2422, 0.0
  %v2581 = vmax.f32 %v2427, 0.0
  %v2582 = vmax.f32 %v2432, 0.0
  %v2583 = vmax.f32 %v2437, 0.0
  %v2584 = vmax.f32 %v2442, 0.0
  %v2585 = vmax.f32 %v2447, 0.0
  %v2586 = vmax.f32 %v2452, 0.0
  %v2587 = vmax.f32 %v2457, 0.0
  %v2588 = vmax.f32 %v2462, 0.0
  %v2589 = vmax.f32 %v2467, 0.0
  %v2590 = vmax.f32 %v2472, 0.0
  %v2591 = vmax.f32 %v2477, 0.0
  %v2592 = vmax.f32 %v2482, 0.0
  %v2593 = vmax.f32 %v2487, 0.0
  %v2594 = vmax.f32 %v2492, 0.0
  %v2595 = vmax.f32 %v2497, 0.0
  %v2596 = vmax.f32 %v2502, 0.0
  %v2597 = vmax.f32 %v2507, 0.0
  %v2598 = vmax.f32 %v2512, 0.0
  %v2599 = vmax.f32 %v2517, 0.0
  %v2600 = vmax.f32 %v2522, 0.0
  %v2601 = vmax.f32 %v2527, 0.0
  %v2602 = vmax.f32 %v2532, 0.0
  %v2603 = vmax.f32 %v2537, 0.0
  %v2604 = vmax.f32 %v2542, 0.0
  %v2605 = vmax.f32 %v2547, 0.0
  %v2606 = vmax.f32 %v2552, 0.0
  %v2607 = vmax.f32 %v2557, 0.0
  %v2608 = vmax.f32 %v2562, 0.0
  %v2609 = vmax.f32 %v2567, 0.0
  %v2610 = vmax.f32 %v2572, 0.0
  %v2611 = vmax.f32 %v2577, 0.0
  %s2612 = scalar_lea.vmem %s3, 192
  %v2613 = vld [vmem:[%s2612] sm:$0xff]
  %v2614 = vld [vmem:[%s2612 + $0x8] sm:$0xff]
  %v2615 = vld [vmem:[%s2612 + $0x10] sm:$0xff]
  %v2616 = vld [vmem:[%s2612 + $0x18] sm:$0xff]
  %v2617 = vld [vmem:[%s2612 + $0x20] sm:$0xff]
  %v2618 = vld [vmem:[%s2612 + $0x28] sm:$0xff]
  %v2619 = vld [vmem:[%s2612 + $0x30] sm:$0xff]
  %v2620 = vld [vmem:[%s2612 + $0x38] sm:$0xff]
  %s2621 = scalar_lea.vmem %s4, 3
  %v2622 = vld [vmem:[%s2621] sm:$0x1]
  %v2624 = vlaneseq
  %v2625 = vshrl.u32 %v2624, 7
  %v2626 = vsub.s32 0, %v2625
  %v2627 = vrot.slane %v2622, %v2626
  %v2630 = vsel %vm429, %v2580, 0
  %v2633 = vsel %vm429, %v2581, 0
  %v2636 = vsel %vm429, %v2582, 0
  %v2639 = vsel %vm429, %v2583, 0
  %v2642 = vsel %vm429, %v2584, 0
  %v2645 = vsel %vm429, %v2585, 0
  %v2648 = vsel %vm429, %v2586, 0
  %v2651 = vsel %vm429, %v2587, 0
  %v2654 = vsel %vm429, %v2588, 0
  %v2657 = vsel %vm429, %v2589, 0
  %v2660 = vsel %vm429, %v2590, 0
  %v2663 = vsel %vm429, %v2591, 0
  %v2666 = vsel %vm429, %v2592, 0
  %v2669 = vsel %vm429, %v2593, 0
  %v2672 = vsel %vm429, %v2594, 0
  %v2675 = vsel %vm429, %v2595, 0
  %v2678 = vsel %vm429, %v2596, 0
  %v2681 = vsel %vm429, %v2597, 0
  %v2684 = vsel %vm429, %v2598, 0
  %v2687 = vsel %vm429, %v2599, 0
  %v2690 = vsel %vm429, %v2600, 0
  %v2693 = vsel %vm429, %v2601, 0
  %v2696 = vsel %vm429, %v2602, 0
  %v2699 = vsel %vm429, %v2603, 0
  %v2702 = vsel %vm429, %v2604, 0
  %v2705 = vsel %vm429, %v2605, 0
  %v2708 = vsel %vm429, %v2606, 0
  %v2711 = vsel %vm429, %v2607, 0
  %v2714 = vsel %vm429, %v2608, 0
  %v2717 = vsel %vm429, %v2609, 0
  %v2720 = vsel %vm429, %v2610, 0
  %v2723 = vsel %vm429, %v2611, 0
  %2725 = vmatprep.subr.mxu0 0.0
  %2726 = vmatpush1.msra.mxu0 %v2613
  %2727 = vmatprep.subr.mxu0 0.0
  %2728 = vmatpush1.msra.mxu0 %v2614
  %2729 = vmatprep.subr.mxu0 0.0
  %2730 = vmatpush1.msra.mxu0 %v2615
  %2731 = vmatprep.subr.mxu0 0.0
  %2732 = vmatpush1.msra.mxu0 %v2616
  %2733 = vmatprep.subr.mxu0 0.0
  %2734 = vmatpush1.msra.mxu0 %v2617
  %2735 = vmatprep.subr.mxu0 0.0
  %2736 = vmatpush1.msra.mxu0 %v2618
  %2737 = vmatprep.subr.mxu0 0.0
  %2738 = vmatpush1.msra.mxu0 %v2619
  %2739 = vmatprep.subr.mxu0 0.0
  %2740 = vmatpush1.msra.mxu0 %v2620
  %2741 = vmatprep.subr.mxu0 0.0
  %2742 = vmatpush1.msra.mxu0 0.0
  %2743 = vmatprep.subr.mxu0 0.0
  %2744 = vmatpush1.msra.mxu0 0.0
  %2745 = vmatprep.subr.mxu0 0.0
  %2746 = vmatpush1.msra.mxu0 0.0
  %2747 = vmatprep.subr.mxu0 0.0
  %2748 = vmatpush1.msra.mxu0 0.0
  %2749 = vmatprep.subr.mxu0 0.0
  %2750 = vmatpush1.msra.mxu0 0.0
  %2751 = vmatprep.subr.mxu0 0.0
  %2752 = vmatpush1.msra.mxu0 0.0
  %2753 = vmatprep.subr.mxu0 0.0
  %2754 = vmatpush1.msra.mxu0 0.0
  %2755 = vmatprep.subr.mxu0 0.0
  %2756 = vmatpush1.msra.mxu0 0.0
  %2757 = vmatprep.subr.mxu0 0.0
  %2758 = vmatpush1.msra.mxu0 0.0
  %2759 = vmatprep.subr.mxu0 0.0
  %2760 = vmatpush1.msra.mxu0 0.0
  %2761 = vmatprep.subr.mxu0 0.0
  %2762 = vmatpush1.msra.mxu0 0.0
  %2763 = vmatprep.subr.mxu0 0.0
  %2764 = vmatpush1.msra.mxu0 0.0
  %2765 = vmatprep.subr.mxu0 0.0
  %2766 = vmatpush1.msra.mxu0 0.0
  %2767 = vmatprep.subr.mxu0 0.0
  %2768 = vmatpush1.msra.mxu0 0.0
  %2769 = vmatprep.subr.mxu0 0.0
  %2770 = vmatpush1.msra.mxu0 0.0
  %2771 = vmatprep.subr.mxu0 0.0
  %2772 = vmatpush1.msra.mxu0 0.0
  %2773 = vmatprep.subr.mxu0 0.0
  %2774 = vmatpush1.msra.mxu0 0.0
  %2775 = vmatprep.subr.mxu0 0.0
  %2776 = vmatpush1.msra.mxu0 0.0
  %2777 = vmatprep.subr.mxu0 0.0
  %2778 = vmatpush1.msra.mxu0 0.0
  %2779 = vmatprep.subr.mxu0 0.0
  %2780 = vmatpush1.msra.mxu0 0.0
  %2781 = vmatprep.subr.mxu0 0.0
  %2782 = vmatpush1.msra.mxu0 0.0
  %2783 = vmatprep.subr.mxu0 0.0
  %2784 = vmatpush1.msra.mxu0 0.0
  %2785 = vmatprep.subr.mxu0 0.0
  %2786 = vmatpush1.msra.mxu0 0.0
  %2787 = vmatprep.subr.mxu0 0.0
  %2788 = vmatpush1.msra.mxu0 0.0
  %2789 = vmatprep.mubr.f32.mxu0 0.0
  %2790 = vmatmul.mubr.f32.gmra.mrb[0].mxu0 %v2630
  %v2791 = vpop.f32.mrb[0].mxu0
  %v2792 = vadd.f32 %v2627, %v2791
  %v2793 = vpop.f32.mrb[0].mxu0
  %2794 = vmatprep.mubr.f32.mxu0 0.0
  %2795 = vmatmul.mubr.f32.gmra.mrb[0].mxu0 %v2633
  %v2796 = vpop.f32.mrb[0].mxu0
  %v2797 = vadd.f32 %v2627, %v2796
  %v2798 = vpop.f32.mrb[0].mxu0
  %2799 = vmatprep.mubr.f32.mxu0 0.0
  %2800 = vmatmul.mubr.f32.gmra.mrb[0].mxu0 %v2636
  %v2801 = vpop.f32.mrb[0].mxu0
  %v2802 = vadd.f32 %v2627, %v2801
  %v2803 = vpop.f32.mrb[0].mxu0
  %2804 = vmatprep.mubr.f32.mxu0 0.0
  %2805 = vmatmul.mubr.f32.gmra.mrb[0].mxu0 %v2639
  %v2806 = vpop.f32.mrb[0].mxu0
  %v2807 = vadd.f32 %v2627, %v2806
  %v2808 = vpop.f32.mrb[0].mxu0
  %2809 = vmatprep.mubr.f32.mxu0 0.0
  %2810 = vmatmul.mubr.f32.gmra.mrb[0].mxu0 %v2642
  %v2811 = vpop.f32.mrb[0].mxu0
  %v2812 = vadd.f32 %v2627, %v2811
  %v2813 = vpop.f32.mrb[0].mxu0
  %2814 = vmatprep.mubr.f32.mxu0 0.0
  %2815 = vmatmul.mubr.f32.gmra.mrb[0].mxu0 %v2645
  %v2816 = vpop.f32.mrb[0].mxu0
  %v2817 = vadd.f32 %v2627, %v2816
  %v2818 = vpop.f32.mrb[0].mxu0
  %2819 = vmatprep.mubr.f32.mxu0 0.0
  %2820 = vmatmul.mubr.f32.gmra.mrb[0].mxu0 %v2648
  %v2821 = vpop.f32.mrb[0].mxu0
  %v2822 = vadd.f32 %v2627, %v2821
  %v2823 = vpop.f32.mrb[0].mxu0
  %2824 = vmatprep.mubr.f32.mxu0 0.0
  %2825 = vmatmul.mubr.f32.gmra.mrb[0].mxu0 %v2651
  %v2826 = vpop.f32.mrb[0].mxu0
  %v2827 = vadd.f32 %v2627, %v2826
  %v2828 = vpop.f32.mrb[0].mxu0
  %2829 = vmatprep.mubr.f32.mxu0 0.0
  %2830 = vmatmul.mubr.f32.gmra.mrb[0].mxu0 %v2654
  %v2831 = vpop.f32.mrb[0].mxu0
  %v2832 = vadd.f32 %v2627, %v2831
  %v2833 = vpop.f32.mrb[0].mxu0
  %2834 = vmatprep.mubr.f32.mxu0 0.0
  %2835 = vmatmul.mubr.f32.gmra.mrb[0].mxu0 %v2657
  %v2836 = vpop.f32.mrb[0].mxu0
  %v2837 = vadd.f32 %v2627, %v2836
  %v2838 = vpop.f32.mrb[0].mxu0
  %2839 = vmatprep.mubr.f32.mxu0 0.0
  %2840 = vmatmul.mubr.f32.gmra.mrb[0].mxu0 %v2660
  %v2841 = vpop.f32.mrb[0].mxu0
  %v2842 = vadd.f32 %v2627, %v2841
  %v2843 = vpop.f32.mrb[0].mxu0
  %2844 = vmatprep.mubr.f32.mxu0 0.0
  %2845 = vmatmul.mubr.f32.gmra.mrb[0].mxu0 %v2663
  %v2846 = vpop.f32.mrb[0].mxu0
  %v2847 = vadd.f32 %v2627, %v2846
  %v2848 = vpop.f32.mrb[0].mxu0
  %2849 = vmatprep.mubr.f32.mxu0 0.0
  %2850 = vmatmul.mubr.f32.gmra.mrb[0].mxu0 %v2666
  %v2851 = vpop.f32.mrb[0].mxu0
  %v2852 = vadd.f32 %v2627, %v2851
  %v2853 = vpop.f32.mrb[0].mxu0
  %2854 = vmatprep.mubr.f32.mxu0 0.0
  %2855 = vmatmul.mubr.f32.gmra.mrb[0].mxu0 %v2669
  %v2856 = vpop.f32.mrb[0].mxu0
  %v2857 = vadd.f32 %v2627, %v2856
  %v2858 = vpop.f32.mrb[0].mxu0
  %2859 = vmatprep.mubr.f32.mxu0 0.0
  %2860 = vmatmul.mubr.f32.gmra.mrb[0].mxu0 %v2672
  %v2861 = vpop.f32.mrb[0].mxu0
  %v2862 = vadd.f32 %v2627, %v2861
  %v2863 = vpop.f32.mrb[0].mxu0
  %2864 = vmatprep.mubr.f32.mxu0 0.0
  %2865 = vmatmul.mubr.f32.gmra.mrb[0].mxu0 %v2675
  %v2866 = vpop.f32.mrb[0].mxu0
  %v2867 = vadd.f32 %v2627, %v2866
  %v2868 = vpop.f32.mrb[0].mxu0
  %2869 = vmatprep.mubr.f32.mxu0 0.0
  %2870 = vmatmul.mubr.f32.gmra.mrb[0].mxu0 %v2678
  %v2871 = vpop.f32.mrb[0].mxu0
  %v2872 = vadd.f32 %v2627, %v2871
  %v2873 = vpop.f32.mrb[0].mxu0
  %2874 = vmatprep.mubr.f32.mxu0 0.0
  %2875 = vmatmul.mubr.f32.gmra.mrb[0].mxu0 %v2681
  %v2876 = vpop.f32.mrb[0].mxu0
  %v2877 = vadd.f32 %v2627, %v2876
  %v2878 = vpop.f32.mrb[0].mxu0
  %2879 = vmatprep.mubr.f32.mxu0 0.0
  %2880 = vmatmul.mubr.f32.gmra.mrb[0].mxu0 %v2684
  %v2881 = vpop.f32.mrb[0].mxu0
  %v2882 = vadd.f32 %v2627, %v2881
  %v2883 = vpop.f32.mrb[0].mxu0
  %2884 = vmatprep.mubr.f32.mxu0 0.0
  %2885 = vmatmul.mubr.f32.gmra.mrb[0].mxu0 %v2687
  %v2886 = vpop.f32.mrb[0].mxu0
  %v2887 = vadd.f32 %v2627, %v2886
  %v2888 = vpop.f32.mrb[0].mxu0
  %2889 = vmatprep.mubr.f32.mxu0 0.0
  %2890 = vmatmul.mubr.f32.gmra.mrb[0].mxu0 %v2690
  %v2891 = vpop.f32.mrb[0].mxu0
  %v2892 = vadd.f32 %v2627, %v2891
  %v2893 = vpop.f32.mrb[0].mxu0
  %2894 = vmatprep.mubr.f32.mxu0 0.0
  %2895 = vmatmul.mubr.f32.gmra.mrb[0].mxu0 %v2693
  %v2896 = vpop.f32.mrb[0].mxu0
  %v2897 = vadd.f32 %v2627, %v2896
  %v2898 = vpop.f32.mrb[0].mxu0
  %2899 = vmatprep.mubr.f32.mxu0 0.0
  %2900 = vmatmul.mubr.f32.gmra.mrb[0].mxu0 %v2696
  %v2901 = vpop.f32.mrb[0].mxu0
  %v2902 = vadd.f32 %v2627, %v2901
  %v2903 = vpop.f32.mrb[0].mxu0
  %2904 = vmatprep.mubr.f32.mxu0 0.0
  %2905 = vmatmul.mubr.f32.gmra.mrb[0].mxu0 %v2699
  %v2906 = vpop.f32.mrb[0].mxu0
  %v2907 = vadd.f32 %v2627, %v2906
  %v2908 = vpop.f32.mrb[0].mxu0
  %2909 = vmatprep.mubr.f32.mxu0 0.0
  %2910 = vmatmul.mubr.f32.gmra.mrb[0].mxu0 %v2702
  %v2911 = vpop.f32.mrb[0].mxu0
  %v2912 = vadd.f32 %v2627, %v2911
  %v2913 = vpop.f32.mrb[0].mxu0
  %2914 = vmatprep.mubr.f32.mxu0 0.0
  %2915 = vmatmul.mubr.f32.gmra.mrb[0].mxu0 %v2705
  %v2916 = vpop.f32.mrb[0].mxu0
  %v2917 = vadd.f32 %v2627, %v2916
  %v2918 = vpop.f32.mrb[0].mxu0
  %2919 = vmatprep.mubr.f32.mxu0 0.0
  %2920 = vmatmul.mubr.f32.gmra.mrb[0].mxu0 %v2708
  %v2921 = vpop.f32.mrb[0].mxu0
  %v2922 = vadd.f32 %v2627, %v2921
  %v2923 = vpop.f32.mrb[0].mxu0
  %2924 = vmatprep.mubr.f32.mxu0 0.0
  %2925 = vmatmul.mubr.f32.gmra.mrb[0].mxu0 %v2711
  %v2926 = vpop.f32.mrb[0].mxu0
  %v2927 = vadd.f32 %v2627, %v2926
  %v2928 = vpop.f32.mrb[0].mxu0
  %2929 = vmatprep.mubr.f32.mxu0 0.0
  %2930 = vmatmul.mubr.f32.gmra.mrb[0].mxu0 %v2714
  %v2931 = vpop.f32.mrb[0].mxu0
  %v2932 = vadd.f32 %v2627, %v2931
  %v2933 = vpop.f32.mrb[0].mxu0
  %2934 = vmatprep.mubr.f32.mxu0 0.0
  %2935 = vmatmul.mubr.f32.gmra.mrb[0].mxu0 %v2717
  %v2936 = vpop.f32.mrb[0].mxu0
  %v2937 = vadd.f32 %v2627, %v2936
  %v2938 = vpop.f32.mrb[0].mxu0
  %2939 = vmatprep.mubr.f32.mxu0 0.0
  %2940 = vmatmul.mubr.f32.gmra.mrb[0].mxu0 %v2720
  %v2941 = vpop.f32.mrb[0].mxu0
  %v2942 = vadd.f32 %v2627, %v2941
  %v2943 = vpop.f32.mrb[0].mxu0
  %2944 = vmatprep.mubr.f32.mxu0 0.0
  %2945 = vmatmul.mubr.f32.gmra.mrb[0].mxu0 %v2723
  %v2946 = vpop.f32.mrb[0].mxu0
  %v2947 = vadd.f32 %v2627, %v2946
  %v2948 = vpop.f32.mrb[0].mxu0
  %2949 = vdwg.mxu0
  %v2950 = vadd.f32 %v2792, %v2217
  %v2951 = vadd.f32 %v2797, %v2218
  %v2952 = vadd.f32 %v2802, %v2219
  %v2953 = vadd.f32 %v2807, %v2220
  %v2954 = vadd.f32 %v2812, %v2221
  %v2955 = vadd.f32 %v2817, %v2222
  %v2956 = vadd.f32 %v2822, %v2223
  %v2957 = vadd.f32 %v2827, %v2224
  %v2958 = vadd.f32 %v2832, %v2225
  %v2959 = vadd.f32 %v2837, %v2226
  %v2960 = vadd.f32 %v2842, %v2227
  %v2961 = vadd.f32 %v2847, %v2228
  %v2962 = vadd.f32 %v2852, %v2229
  %v2963 = vadd.f32 %v2857, %v2230
  %v2964 = vadd.f32 %v2862, %v2231
  %v2965 = vadd.f32 %v2867, %v2232
  %v2966 = vadd.f32 %v2872, %v2233
  %v2967 = vadd.f32 %v2877, %v2234
  %v2968 = vadd.f32 %v2882, %v2235
  %v2969 = vadd.f32 %v2887, %v2236
  %v2970 = vadd.f32 %v2892, %v2237
  %v2971 = vadd.f32 %v2897, %v2238
  %v2972 = vadd.f32 %v2902, %v2239
  %v2973 = vadd.f32 %v2907, %v2240
  %v2974 = vadd.f32 %v2912, %v2241
  %v2975 = vadd.f32 %v2917, %v2242
  %v2976 = vadd.f32 %v2922, %v2243
  %v2977 = vadd.f32 %v2927, %v2244
  %v2978 = vadd.f32 %v2932, %v2245
  %v2979 = vadd.f32 %v2937, %v2246
  %v2980 = vadd.f32 %v2942, %v2247
  %v2981 = vadd.f32 %v2947, %v2248
  %s2982 = scalar_lea.vmem %s1, 32
  %v2983 = vld [vmem:[%s2982] sm:$0xff]
  %s2984 = scalar_lea.vmem %s2, 4
  %v2985 = vld [vmem:[%s2984] sm:$0x1]
  %v2987 = vlaneseq
  %v2988 = vshrl.u32 %v2987, 7
  %v2989 = vsub.s32 0, %v2988
  %v2990 = vrot.slane %v2985, %v2989
  %v2993 = vsel %vm60, %v2950, 0
  %v2996 = vsel %vm60, %v2951, 0
  %v2999 = vsel %vm60, %v2952, 0
  %v3002 = vsel %vm60, %v2953, 0
  %v3005 = vsel %vm60, %v2954, 0
  %v3008 = vsel %vm60, %v2955, 0
  %v3011 = vsel %vm60, %v2956, 0
  %v3014 = vsel %vm60, %v2957, 0
  %v3017 = vsel %vm60, %v2958, 0
  %v3020 = vsel %vm60, %v2959, 0
  %v3023 = vsel %vm60, %v2960, 0
  %v3026 = vsel %vm60, %v2961, 0
  %v3029 = vsel %vm60, %v2962, 0
  %v3032 = vsel %vm60, %v2963, 0
  %v3035 = vsel %vm60, %v2964, 0
  %v3038 = vsel %vm60, %v2965, 0
  %v3041 = vsel %vm60, %v2966, 0
  %v3044 = vsel %vm60, %v2967, 0
  %v3047 = vsel %vm60, %v2968, 0
  %v3050 = vsel %vm60, %v2969, 0
  %v3053 = vsel %vm60, %v2970, 0
  %v3056 = vsel %vm60, %v2971, 0
  %v3059 = vsel %vm60, %v2972, 0
  %v3062 = vsel %vm60, %v2973, 0
  %v3065 = vsel %vm60, %v2974, 0
  %v3068 = vsel %vm60, %v2975, 0
  %v3071 = vsel %vm60, %v2976, 0
  %v3074 = vsel %vm60, %v2977, 0
  %v3077 = vsel %vm60, %v2978, 0
  %v3080 = vsel %vm60, %v2979, 0
  %v3083 = vsel %vm60, %v2980, 0
  %v3086 = vsel %vm60, %v2981, 0
  %3088 = vmatprep.subr.mxu0 0.0
  %3089 = vmatpush1.msra.mxu0 %v2983
  %3090 = vmatprep.subr.mxu0 0.0
  %3091 = vmatpush1.msra.mxu0 0.0
  %3092 = vmatprep.subr.mxu0 0.0
  %3093 = vmatpush1.msra.mxu0 0.0
  %3094 = vmatprep.subr.mxu0 0.0
  %3095 = vmatpush1.msra.mxu0 0.0
  %3096 = vmatprep.subr.mxu0 0.0
  %3097 = vmatpush1.msra.mxu0 0.0
  %3098 = vmatprep.subr.mxu0 0.0
  %3099 = vmatpush1.msra.mxu0 0.0
  %3100 = vmatprep.subr.mxu0 0.0
  %3101 = vmatpush1.msra.mxu0 0.0
  %3102 = vmatprep.subr.mxu0 0.0
  %3103 = vmatpush1.msra.mxu0 0.0
  %3104 = vmatprep.subr.mxu0 0.0
  %3105 = vmatpush1.msra.mxu0 0.0
  %3106 = vmatprep.subr.mxu0 0.0
  %3107 = vmatpush1.msra.mxu0 0.0
  %3108 = vmatprep.subr.mxu0 0.0
  %3109 = vmatpush1.msra.mxu0 0.0
  %3110 = vmatprep.subr.mxu0 0.0
  %3111 = vmatpush1.msra.mxu0 0.0
  %3112 = vmatprep.subr.mxu0 0.0
  %3113 = vmatpush1.msra.mxu0 0.0
  %3114 = vmatprep.subr.mxu0 0.0
  %3115 = vmatpush1.msra.mxu0 0.0
  %3116 = vmatprep.subr.mxu0 0.0
  %3117 = vmatpush1.msra.mxu0 0.0
  %3118 = vmatprep.subr.mxu0 0.0
  %3119 = vmatpush1.msra.mxu0 0.0
  %3120 = vmatprep.subr.mxu0 0.0
  %3121 = vmatpush1.msra.mxu0 0.0
  %3122 = vmatprep.subr.mxu0 0.0
  %3123 = vmatpush1.msra.mxu0 0.0
  %3124 = vmatprep.subr.mxu0 0.0
  %3125 = vmatpush1.msra.mxu0 0.0
  %3126 = vmatprep.subr.mxu0 0.0
  %3127 = vmatpush1.msra.mxu0 0.0
  %3128 = vmatprep.subr.mxu0 0.0
  %3129 = vmatpush1.msra.mxu0 0.0
  %3130 = vmatprep.subr.mxu0 0.0
  %3131 = vmatpush1.msra.mxu0 0.0
  %3132 = vmatprep.subr.mxu0 0.0
  %3133 = vmatpush1.msra.mxu0 0.0
  %3134 = vmatprep.subr.mxu0 0.0
  %3135 = vmatpush1.msra.mxu0 0.0
  %3136 = vmatprep.subr.mxu0 0.0
  %3137 = vmatpush1.msra.mxu0 0.0
  %3138 = vmatprep.subr.mxu0 0.0
  %3139 = vmatpush1.msra.mxu0 0.0
  %3140 = vmatprep.subr.mxu0 0.0
  %3141 = vmatpush1.msra.mxu0 0.0
  %3142 = vmatprep.subr.mxu0 0.0
  %3143 = vmatpush1.msra.mxu0 0.0
  %3144 = vmatprep.subr.mxu0 0.0
  %3145 = vmatpush1.msra.mxu0 0.0
  %3146 = vmatprep.subr.mxu0 0.0
  %3147 = vmatpush1.msra.mxu0 0.0
  %3148 = vmatprep.subr.mxu0 0.0
  %3149 = vmatpush1.msra.mxu0 0.0
  %3150 = vmatprep.subr.mxu0 0.0
  %3151 = vmatpush1.msra.mxu0 0.0
  %3152 = vmatprep.mubr.f32.mxu0 0.0
  %3153 = vmatmul.mubr.f32.gmra.mrb[0].mxu0 %v2993
  %v3154 = vpop.f32.mrb[0].mxu0
  %v3155 = vadd.f32 %v2990, %v3154
  %v3156 = vpop.f32.mrb[0].mxu0
  %3157 = vmatprep.mubr.f32.mxu0 0.0
  %3158 = vmatmul.mubr.f32.gmra.mrb[0].mxu0 %v2996
  %v3159 = vpop.f32.mrb[0].mxu0
  %v3160 = vadd.f32 %v2990, %v3159
  %v3161 = vpop.f32.mrb[0].mxu0
  %3162 = vmatprep.mubr.f32.mxu0 0.0
  %3163 = vmatmul.mubr.f32.gmra.mrb[0].mxu0 %v2999
  %v3164 = vpop.f32.mrb[0].mxu0
  %v3165 = vadd.f32 %v2990, %v3164
  %v3166 = vpop.f32.mrb[0].mxu0
  %3167 = vmatprep.mubr.f32.mxu0 0.0
  %3168 = vmatmul.mubr.f32.gmra.mrb[0].mxu0 %v3002
  %v3169 = vpop.f32.mrb[0].mxu0
  %v3170 = vadd.f32 %v2990, %v3169
  %v3171 = vpop.f32.mrb[0].mxu0
  %3172 = vmatprep.mubr.f32.mxu0 0.0
  %3173 = vmatmul.mubr.f32.gmra.mrb[0].mxu0 %v3005
  %v3174 = vpop.f32.mrb[0].mxu0
  %v3175 = vadd.f32 %v2990, %v3174
  %v3176 = vpop.f32.mrb[0].mxu0
  %3177 = vmatprep.mubr.f32.mxu0 0.0
  %3178 = vmatmul.mubr.f32.gmra.mrb[0].mxu0 %v3008
  %v3179 = vpop.f32.mrb[0].mxu0
  %v3180 = vadd.f32 %v2990, %v3179
  %v3181 = vpop.f32.mrb[0].mxu0
  %3182 = vmatprep.mubr.f32.mxu0 0.0
  %3183 = vmatmul.mubr.f32.gmra.mrb[0].mxu0 %v3011
  %v3184 = vpop.f32.mrb[0].mxu0
  %v3185 = vadd.f32 %v2990, %v3184
  %v3186 = vpop.f32.mrb[0].mxu0
  %3187 = vmatprep.mubr.f32.mxu0 0.0
  %3188 = vmatmul.mubr.f32.gmra.mrb[0].mxu0 %v3014
  %v3189 = vpop.f32.mrb[0].mxu0
  %v3190 = vadd.f32 %v2990, %v3189
  %v3191 = vpop.f32.mrb[0].mxu0
  %3192 = vmatprep.mubr.f32.mxu0 0.0
  %3193 = vmatmul.mubr.f32.gmra.mrb[0].mxu0 %v3017
  %v3194 = vpop.f32.mrb[0].mxu0
  %v3195 = vadd.f32 %v2990, %v3194
  %v3196 = vpop.f32.mrb[0].mxu0
  %3197 = vmatprep.mubr.f32.mxu0 0.0
  %3198 = vmatmul.mubr.f32.gmra.mrb[0].mxu0 %v3020
  %v3199 = vpop.f32.mrb[0].mxu0
  %v3200 = vadd.f32 %v2990, %v3199
  %v3201 = vpop.f32.mrb[0].mxu0
  %3202 = vmatprep.mubr.f32.mxu0 0.0
  %3203 = vmatmul.mubr.f32.gmra.mrb[0].mxu0 %v3023
  %v3204 = vpop.f32.mrb[0].mxu0
  %v3205 = vadd.f32 %v2990, %v3204
  %v3206 = vpop.f32.mrb[0].mxu0
  %3207 = vmatprep.mubr.f32.mxu0 0.0
  %3208 = vmatmul.mubr.f32.gmra.mrb[0].mxu0 %v3026
  %v3209 = vpop.f32.mrb[0].mxu0
  %v3210 = vadd.f32 %v2990, %v3209
  %v3211 = vpop.f32.mrb[0].mxu0
  %3212 = vmatprep.mubr.f32.mxu0 0.0
  %3213 = vmatmul.mubr.f32.gmra.mrb[0].mxu0 %v3029
  %v3214 = vpop.f32.mrb[0].mxu0
  %v3215 = vadd.f32 %v2990, %v3214
  %v3216 = vpop.f32.mrb[0].mxu0
  %3217 = vmatprep.mubr.f32.mxu0 0.0
  %3218 = vmatmul.mubr.f32.gmra.mrb[0].mxu0 %v3032
  %v3219 = vpop.f32.mrb[0].mxu0
  %v3220 = vadd.f32 %v2990, %v3219
  %v3221 = vpop.f32.mrb[0].mxu0
  %3222 = vmatprep.mubr.f32.mxu0 0.0
  %3223 = vmatmul.mubr.f32.gmra.mrb[0].mxu0 %v3035
  %v3224 = vpop.f32.mrb[0].mxu0
  %v3225 = vadd.f32 %v2990, %v3224
  %v3226 = vpop.f32.mrb[0].mxu0
  %3227 = vmatprep.mubr.f32.mxu0 0.0
  %3228 = vmatmul.mubr.f32.gmra.mrb[0].mxu0 %v3038
  %v3229 = vpop.f32.mrb[0].mxu0
  %v3230 = vadd.f32 %v2990, %v3229
  %v3231 = vpop.f32.mrb[0].mxu0
  %3232 = vmatprep.mubr.f32.mxu0 0.0
  %3233 = vmatmul.mubr.f32.gmra.mrb[0].mxu0 %v3041
  %v3234 = vpop.f32.mrb[0].mxu0
  %v3235 = vadd.f32 %v2990, %v3234
  %v3236 = vpop.f32.mrb[0].mxu0
  %3237 = vmatprep.mubr.f32.mxu0 0.0
  %3238 = vmatmul.mubr.f32.gmra.mrb[0].mxu0 %v3044
  %v3239 = vpop.f32.mrb[0].mxu0
  %v3240 = vadd.f32 %v2990, %v3239
  %v3241 = vpop.f32.mrb[0].mxu0
  %3242 = vmatprep.mubr.f32.mxu0 0.0
  %3243 = vmatmul.mubr.f32.gmra.mrb[0].mxu0 %v3047
  %v3244 = vpop.f32.mrb[0].mxu0
  %v3245 = vadd.f32 %v2990, %v3244
  %v3246 = vpop.f32.mrb[0].mxu0
  %3247 = vmatprep.mubr.f32.mxu0 0.0
  %3248 = vmatmul.mubr.f32.gmra.mrb[0].mxu0 %v3050
  %v3249 = vpop.f32.mrb[0].mxu0
  %v3250 = vadd.f32 %v2990, %v3249
  %v3251 = vpop.f32.mrb[0].mxu0
  %3252 = vmatprep.mubr.f32.mxu0 0.0
  %3253 = vmatmul.mubr.f32.gmra.mrb[0].mxu0 %v3053
  %v3254 = vpop.f32.mrb[0].mxu0
  %v3255 = vadd.f32 %v2990, %v3254
  %v3256 = vpop.f32.mrb[0].mxu0
  %3257 = vmatprep.mubr.f32.mxu0 0.0
  %3258 = vmatmul.mubr.f32.gmra.mrb[0].mxu0 %v3056
  %v3259 = vpop.f32.mrb[0].mxu0
  %v3260 = vadd.f32 %v2990, %v3259
  %v3261 = vpop.f32.mrb[0].mxu0
  %3262 = vmatprep.mubr.f32.mxu0 0.0
  %3263 = vmatmul.mubr.f32.gmra.mrb[0].mxu0 %v3059
  %v3264 = vpop.f32.mrb[0].mxu0
  %v3265 = vadd.f32 %v2990, %v3264
  %v3266 = vpop.f32.mrb[0].mxu0
  %3267 = vmatprep.mubr.f32.mxu0 0.0
  %3268 = vmatmul.mubr.f32.gmra.mrb[0].mxu0 %v3062
  %v3269 = vpop.f32.mrb[0].mxu0
  %v3270 = vadd.f32 %v2990, %v3269
  %v3271 = vpop.f32.mrb[0].mxu0
  %3272 = vmatprep.mubr.f32.mxu0 0.0
  %3273 = vmatmul.mubr.f32.gmra.mrb[0].mxu0 %v3065
  %v3274 = vpop.f32.mrb[0].mxu0
  %v3275 = vadd.f32 %v2990, %v3274
  %v3276 = vpop.f32.mrb[0].mxu0
  %3277 = vmatprep.mubr.f32.mxu0 0.0
  %3278 = vmatmul.mubr.f32.gmra.mrb[0].mxu0 %v3068
  %v3279 = vpop.f32.mrb[0].mxu0
  %v3280 = vadd.f32 %v2990, %v3279
  %v3281 = vpop.f32.mrb[0].mxu0
  %3282 = vmatprep.mubr.f32.mxu0 0.0
  %3283 = vmatmul.mubr.f32.gmra.mrb[0].mxu0 %v3071
  %v3284 = vpop.f32.mrb[0].mxu0
  %v3285 = vadd.f32 %v2990, %v3284
  %v3286 = vpop.f32.mrb[0].mxu0
  %3287 = vmatprep.mubr.f32.mxu0 0.0
  %3288 = vmatmul.mubr.f32.gmra.mrb[0].mxu0 %v3074
  %v3289 = vpop.f32.mrb[0].mxu0
  %v3290 = vadd.f32 %v2990, %v3289
  %v3291 = vpop.f32.mrb[0].mxu0
  %3292 = vmatprep.mubr.f32.mxu0 0.0
  %3293 = vmatmul.mubr.f32.gmra.mrb[0].mxu0 %v3077
  %v3294 = vpop.f32.mrb[0].mxu0
  %v3295 = vadd.f32 %v2990, %v3294
  %v3296 = vpop.f32.mrb[0].mxu0
  %3297 = vmatprep.mubr.f32.mxu0 0.0
  %3298 = vmatmul.mubr.f32.gmra.mrb[0].mxu0 %v3080
  %v3299 = vpop.f32.mrb[0].mxu0
  %v3300 = vadd.f32 %v2990, %v3299
  %v3301 = vpop.f32.mrb[0].mxu0
  %3302 = vmatprep.mubr.f32.mxu0 0.0
  %3303 = vmatmul.mubr.f32.gmra.mrb[0].mxu0 %v3083
  %v3304 = vpop.f32.mrb[0].mxu0
  %v3305 = vadd.f32 %v2990, %v3304
  %v3306 = vpop.f32.mrb[0].mxu0
  %3307 = vmatprep.mubr.f32.mxu0 0.0
  %3308 = vmatmul.mubr.f32.gmra.mrb[0].mxu0 %v3086
  %v3309 = vpop.f32.mrb[0].mxu0
  %v3310 = vadd.f32 %v2990, %v3309
  %v3311 = vpop.f32.mrb[0].mxu0
  %3312 = vdwg.mxu0
  %v3313 = vmax.f32 %v3155, 0.0
  %v3314 = vmax.f32 %v3160, 0.0
  %v3315 = vmax.f32 %v3165, 0.0
  %v3316 = vmax.f32 %v3170, 0.0
  %v3317 = vmax.f32 %v3175, 0.0
  %v3318 = vmax.f32 %v3180, 0.0
  %v3319 = vmax.f32 %v3185, 0.0
  %v3320 = vmax.f32 %v3190, 0.0
  %v3321 = vmax.f32 %v3195, 0.0
  %v3322 = vmax.f32 %v3200, 0.0
  %v3323 = vmax.f32 %v3205, 0.0
  %v3324 = vmax.f32 %v3210, 0.0
  %v3325 = vmax.f32 %v3215, 0.0
  %v3326 = vmax.f32 %v3220, 0.0
  %v3327 = vmax.f32 %v3225, 0.0
  %v3328 = vmax.f32 %v3230, 0.0
  %v3329 = vmax.f32 %v3235, 0.0
  %v3330 = vmax.f32 %v3240, 0.0
  %v3331 = vmax.f32 %v3245, 0.0
  %v3332 = vmax.f32 %v3250, 0.0
  %v3333 = vmax.f32 %v3255, 0.0
  %v3334 = vmax.f32 %v3260, 0.0
  %v3335 = vmax.f32 %v3265, 0.0
  %v3336 = vmax.f32 %v3270, 0.0
  %v3337 = vmax.f32 %v3275, 0.0
  %v3338 = vmax.f32 %v3280, 0.0
  %v3339 = vmax.f32 %v3285, 0.0
  %v3340 = vmax.f32 %v3290, 0.0
  %v3341 = vmax.f32 %v3295, 0.0
  %v3342 = vmax.f32 %v3300, 0.0
  %v3343 = vmax.f32 %v3305, 0.0
  %v3344 = vmax.f32 %v3310, 0.0
  %s3345 = scalar_lea.vmem %s3, 256
  %v3346 = vld [vmem:[%s3345] sm:$0xff]
  %v3347 = vld [vmem:[%s3345 + $0x8] sm:$0xff]
  %v3348 = vld [vmem:[%s3345 + $0x10] sm:$0xff]
  %v3349 = vld [vmem:[%s3345 + $0x18] sm:$0xff]
  %v3350 = vld [vmem:[%s3345 + $0x20] sm:$0xff]
  %v3351 = vld [vmem:[%s3345 + $0x28] sm:$0xff]
  %v3352 = vld [vmem:[%s3345 + $0x30] sm:$0xff]
  %v3353 = vld [vmem:[%s3345 + $0x38] sm:$0xff]
  %s3354 = scalar_lea.vmem %s4, 4
  %v3355 = vld [vmem:[%s3354] sm:$0x1]
  %v3357 = vlaneseq
  %v3358 = vshrl.u32 %v3357, 7
  %v3359 = vsub.s32 0, %v3358
  %v3360 = vrot.slane %v3355, %v3359
  %v3363 = vsel %vm429, %v3313, 0
  %v3366 = vsel %vm429, %v3314, 0
  %v3369 = vsel %vm429, %v3315, 0
  %v3372 = vsel %vm429, %v3316, 0
  %v3375 = vsel %vm429, %v3317, 0
  %v3378 = vsel %vm429, %v3318, 0
  %v3381 = vsel %vm429, %v3319, 0
  %v3384 = vsel %vm429, %v3320, 0
  %v3387 = vsel %vm429, %v3321, 0
  %v3390 = vsel %vm429, %v3322, 0
  %v3393 = vsel %vm429, %v3323, 0
  %v3396 = vsel %vm429, %v3324, 0
  %v3399 = vsel %vm429, %v3325, 0
  %v3402 = vsel %vm429, %v3326, 0
  %v3405 = vsel %vm429, %v3327, 0
  %v3408 = vsel %vm429, %v3328, 0
  %v3411 = vsel %vm429, %v3329, 0
  %v3414 = vsel %vm429, %v3330, 0
  %v3417 = vsel %vm429, %v3331, 0
  %v3420 = vsel %vm429, %v3332, 0
  %v3423 = vsel %vm429, %v3333, 0
  %v3426 = vsel %vm429, %v3334, 0
  %v3429 = vsel %vm429, %v3335, 0
  %v3432 = vsel %vm429, %v3336, 0
  %v3435 = vsel %vm429, %v3337, 0
  %v3438 = vsel %vm429, %v3338, 0
  %v3441 = vsel %vm429, %v3339, 0
  %v3444 = vsel %vm429, %v3340, 0
  %v3447 = vsel %vm429, %v3341, 0
  %v3450 = vsel %vm429, %v3342, 0
  %v3453 = vsel %vm429, %v3343, 0
  %v3456 = vsel %vm429, %v3344, 0
  %3458 = vmatprep.subr.mxu0 0.0
  %3459 = vmatpush1.msra.mxu0 %v3346
  %3460 = vmatprep.subr.mxu0 0.0
  %3461 = vmatpush1.msra.mxu0 %v3347
  %3462 = vmatprep.subr.mxu0 0.0
  %3463 = vmatpush1.msra.mxu0 %v3348
  %3464 = vmatprep.subr.mxu0 0.0
  %3465 = vmatpush1.msra.mxu0 %v3349
  %3466 = vmatprep.subr.mxu0 0.0
  %3467 = vmatpush1.msra.mxu0 %v3350
  %3468 = vmatprep.subr.mxu0 0.0
  %3469 = vmatpush1.msra.mxu0 %v3351
  %3470 = vmatprep.subr.mxu0 0.0
  %3471 = vmatpush1.msra.mxu0 %v3352
  %3472 = vmatprep.subr.mxu0 0.0
  %3473 = vmatpush1.msra.mxu0 %v3353
  %3474 = vmatprep.subr.mxu0 0.0
  %3475 = vmatpush1.msra.mxu0 0.0
  %3476 = vmatprep.subr.mxu0 0.0
  %3477 = vmatpush1.msra.mxu0 0.0
  %3478 = vmatprep.subr.mxu0 0.0
  %3479 = vmatpush1.msra.mxu0 0.0
  %3480 = vmatprep.subr.mxu0 0.0
  %3481 = vmatpush1.msra.mxu0 0.0
  %3482 = vmatprep.subr.mxu0 0.0
  %3483 = vmatpush1.msra.mxu0 0.0
  %3484 = vmatprep.subr.mxu0 0.0
  %3485 = vmatpush1.msra.mxu0 0.0
  %3486 = vmatprep.subr.mxu0 0.0
  %3487 = vmatpush1.msra.mxu0 0.0
  %3488 = vmatprep.subr.mxu0 0.0
  %3489 = vmatpush1.msra.mxu0 0.0
  %3490 = vmatprep.subr.mxu0 0.0
  %3491 = vmatpush1.msra.mxu0 0.0
  %3492 = vmatprep.subr.mxu0 0.0
  %3493 = vmatpush1.msra.mxu0 0.0
  %3494 = vmatprep.subr.mxu0 0.0
  %3495 = vmatpush1.msra.mxu0 0.0
  %3496 = vmatprep.subr.mxu0 0.0
  %3497 = vmatpush1.msra.mxu0 0.0
  %3498 = vmatprep.subr.mxu0 0.0
  %3499 = vmatpush1.msra.mxu0 0.0
  %3500 = vmatprep.subr.mxu0 0.0
  %3501 = vmatpush1.msra.mxu0 0.0
  %3502 = vmatprep.subr.mxu0 0.0
  %3503 = vmatpush1.msra.mxu0 0.0
  %3504 = vmatprep.subr.mxu0 0.0
  %3505 = vmatpush1.msra.mxu0 0.0
  %3506 = vmatprep.subr.mxu0 0.0
  %3507 = vmatpush1.msra.mxu0 0.0
  %3508 = vmatprep.subr.mxu0 0.0
  %3509 = vmatpush1.msra.mxu0 0.0
  %3510 = vmatprep.subr.mxu0 0.0
  %3511 = vmatpush1.msra.mxu0 0.0
  %3512 = vmatprep.subr.mxu0 0.0
  %3513 = vmatpush1.msra.mxu0 0.0
  %3514 = vmatprep.subr.mxu0 0.0
  %3515 = vmatpush1.msra.mxu0 0.0
  %3516 = vmatprep.subr.mxu0 0.0
  %3517 = vmatpush1.msra.mxu0 0.0
  %3518 = vmatprep.subr.mxu0 0.0
  %3519 = vmatpush1.msra.mxu0 0.0
  %3520 = vmatprep.subr.mxu0 0.0
  %3521 = vmatpush1.msra.mxu0 0.0
  %3522 = vmatprep.mubr.f32.mxu0 0.0
  %3523 = vmatmul.mubr.f32.gmra.mrb[0].mxu0 %v3363
  %v3524 = vpop.f32.mrb[0].mxu0
  %v3525 = vadd.f32 %v3360, %v3524
  %v3526 = vpop.f32.mrb[0].mxu0
  %3527 = vmatprep.mubr.f32.mxu0 0.0
  %3528 = vmatmul.mubr.f32.gmra.mrb[0].mxu0 %v3366
  %v3529 = vpop.f32.mrb[0].mxu0
  %v3530 = vadd.f32 %v3360, %v3529
  %v3531 = vpop.f32.mrb[0].mxu0
  %3532 = vmatprep.mubr.f32.mxu0 0.0
  %3533 = vmatmul.mubr.f32.gmra.mrb[0].mxu0 %v3369
  %v3534 = vpop.f32.mrb[0].mxu0
  %v3535 = vadd.f32 %v3360, %v3534
  %v3536 = vpop.f32.mrb[0].mxu0
  %3537 = vmatprep.mubr.f32.mxu0 0.0
  %3538 = vmatmul.mubr.f32.gmra.mrb[0].mxu0 %v3372
  %v3539 = vpop.f32.mrb[0].mxu0
  %v3540 = vadd.f32 %v3360, %v3539
  %v3541 = vpop.f32.mrb[0].mxu0
  %3542 = vmatprep.mubr.f32.mxu0 0.0
  %3543 = vmatmul.mubr.f32.gmra.mrb[0].mxu0 %v3375
  %v3544 = vpop.f32.mrb[0].mxu0
  %v3545 = vadd.f32 %v3360, %v3544
  %v3546 = vpop.f32.mrb[0].mxu0
  %3547 = vmatprep.mubr.f32.mxu0 0.0
  %3548 = vmatmul.mubr.f32.gmra.mrb[0].mxu0 %v3378
  %v3549 = vpop.f32.mrb[0].mxu0
  %v3550 = vadd.f32 %v3360, %v3549
  %v3551 = vpop.f32.mrb[0].mxu0
  %3552 = vmatprep.mubr.f32.mxu0 0.0
  %3553 = vmatmul.mubr.f32.gmra.mrb[0].mxu0 %v3381
  %v3554 = vpop.f32.mrb[0].mxu0
  %v3555 = vadd.f32 %v3360, %v3554
  %v3556 = vpop.f32.mrb[0].mxu0
  %3557 = vmatprep.mubr.f32.mxu0 0.0
  %3558 = vmatmul.mubr.f32.gmra.mrb[0].mxu0 %v3384
  %v3559 = vpop.f32.mrb[0].mxu0
  %v3560 = vadd.f32 %v3360, %v3559
  %v3561 = vpop.f32.mrb[0].mxu0
  %3562 = vmatprep.mubr.f32.mxu0 0.0
  %3563 = vmatmul.mubr.f32.gmra.mrb[0].mxu0 %v3387
  %v3564 = vpop.f32.mrb[0].mxu0
  %v3565 = vadd.f32 %v3360, %v3564
  %v3566 = vpop.f32.mrb[0].mxu0
  %3567 = vmatprep.mubr.f32.mxu0 0.0
  %3568 = vmatmul.mubr.f32.gmra.mrb[0].mxu0 %v3390
  %v3569 = vpop.f32.mrb[0].mxu0
  %v3570 = vadd.f32 %v3360, %v3569
  %v3571 = vpop.f32.mrb[0].mxu0
  %3572 = vmatprep.mubr.f32.mxu0 0.0
  %3573 = vmatmul.mubr.f32.gmra.mrb[0].mxu0 %v3393
  %v3574 = vpop.f32.mrb[0].mxu0
  %v3575 = vadd.f32 %v3360, %v3574
  %v3576 = vpop.f32.mrb[0].mxu0
  %3577 = vmatprep.mubr.f32.mxu0 0.0
  %3578 = vmatmul.mubr.f32.gmra.mrb[0].mxu0 %v3396
  %v3579 = vpop.f32.mrb[0].mxu0
  %v3580 = vadd.f32 %v3360, %v3579
  %v3581 = vpop.f32.mrb[0].mxu0
  %3582 = vmatprep.mubr.f32.mxu0 0.0
  %3583 = vmatmul.mubr.f32.gmra.mrb[0].mxu0 %v3399
  %v3584 = vpop.f32.mrb[0].mxu0
  %v3585 = vadd.f32 %v3360, %v3584
  %v3586 = vpop.f32.mrb[0].mxu0
  %3587 = vmatprep.mubr.f32.mxu0 0.0
  %3588 = vmatmul.mubr.f32.gmra.mrb[0].mxu0 %v3402
  %v3589 = vpop.f32.mrb[0].mxu0
  %v3590 = vadd.f32 %v3360, %v3589
  %v3591 = vpop.f32.mrb[0].mxu0
  %3592 = vmatprep.mubr.f32.mxu0 0.0
  %3593 = vmatmul.mubr.f32.gmra.mrb[0].mxu0 %v3405
  %v3594 = vpop.f32.mrb[0].mxu0
  %v3595 = vadd.f32 %v3360, %v3594
  %v3596 = vpop.f32.mrb[0].mxu0
  %3597 = vmatprep.mubr.f32.mxu0 0.0
  %3598 = vmatmul.mubr.f32.gmra.mrb[0].mxu0 %v3408
  %v3599 = vpop.f32.mrb[0].mxu0
  %v3600 = vadd.f32 %v3360, %v3599
  %v3601 = vpop.f32.mrb[0].mxu0
  %3602 = vmatprep.mubr.f32.mxu0 0.0
  %3603 = vmatmul.mubr.f32.gmra.mrb[0].mxu0 %v3411
  %v3604 = vpop.f32.mrb[0].mxu0
  %v3605 = vadd.f32 %v3360, %v3604
  %v3606 = vpop.f32.mrb[0].mxu0
  %3607 = vmatprep.mubr.f32.mxu0 0.0
  %3608 = vmatmul.mubr.f32.gmra.mrb[0].mxu0 %v3414
  %v3609 = vpop.f32.mrb[0].mxu0
  %v3610 = vadd.f32 %v3360, %v3609
  %v3611 = vpop.f32.mrb[0].mxu0
  %3612 = vmatprep.mubr.f32.mxu0 0.0
  %3613 = vmatmul.mubr.f32.gmra.mrb[0].mxu0 %v3417
  %v3614 = vpop.f32.mrb[0].mxu0
  %v3615 = vadd.f32 %v3360, %v3614
  %v3616 = vpop.f32.mrb[0].mxu0
  %3617 = vmatprep.mubr.f32.mxu0 0.0
  %3618 = vmatmul.mubr.f32.gmra.mrb[0].mxu0 %v3420
  %v3619 = vpop.f32.mrb[0].mxu0
  %v3620 = vadd.f32 %v3360, %v3619
  %v3621 = vpop.f32.mrb[0].mxu0
  %3622 = vmatprep.mubr.f32.mxu0 0.0
  %3623 = vmatmul.mubr.f32.gmra.mrb[0].mxu0 %v3423
  %v3624 = vpop.f32.mrb[0].mxu0
  %v3625 = vadd.f32 %v3360, %v3624
  %v3626 = vpop.f32.mrb[0].mxu0
  %3627 = vmatprep.mubr.f32.mxu0 0.0
  %3628 = vmatmul.mubr.f32.gmra.mrb[0].mxu0 %v3426
  %v3629 = vpop.f32.mrb[0].mxu0
  %v3630 = vadd.f32 %v3360, %v3629
  %v3631 = vpop.f32.mrb[0].mxu0
  %3632 = vmatprep.mubr.f32.mxu0 0.0
  %3633 = vmatmul.mubr.f32.gmra.mrb[0].mxu0 %v3429
  %v3634 = vpop.f32.mrb[0].mxu0
  %v3635 = vadd.f32 %v3360, %v3634
  %v3636 = vpop.f32.mrb[0].mxu0
  %3637 = vmatprep.mubr.f32.mxu0 0.0
  %3638 = vmatmul.mubr.f32.gmra.mrb[0].mxu0 %v3432
  %v3639 = vpop.f32.mrb[0].mxu0
  %v3640 = vadd.f32 %v3360, %v3639
  %v3641 = vpop.f32.mrb[0].mxu0
  %3642 = vmatprep.mubr.f32.mxu0 0.0
  %3643 = vmatmul.mubr.f32.gmra.mrb[0].mxu0 %v3435
  %v3644 = vpop.f32.mrb[0].mxu0
  %v3645 = vadd.f32 %v3360, %v3644
  %v3646 = vpop.f32.mrb[0].mxu0
  %3647 = vmatprep.mubr.f32.mxu0 0.0
  %3648 = vmatmul.mubr.f32.gmra.mrb[0].mxu0 %v3438
  %v3649 = vpop.f32.mrb[0].mxu0
  %v3650 = vadd.f32 %v3360, %v3649
  %v3651 = vpop.f32.mrb[0].mxu0
  %3652 = vmatprep.mubr.f32.mxu0 0.0
  %3653 = vmatmul.mubr.f32.gmra.mrb[0].mxu0 %v3441
  %v3654 = vpop.f32.mrb[0].mxu0
  %v3655 = vadd.f32 %v3360, %v3654
  %v3656 = vpop.f32.mrb[0].mxu0
  %3657 = vmatprep.mubr.f32.mxu0 0.0
  %3658 = vmatmul.mubr.f32.gmra.mrb[0].mxu0 %v3444
  %v3659 = vpop.f32.mrb[0].mxu0
  %v3660 = vadd.f32 %v3360, %v3659
  %v3661 = vpop.f32.mrb[0].mxu0
  %3662 = vmatprep.mubr.f32.mxu0 0.0
  %3663 = vmatmul.mubr.f32.gmra.mrb[0].mxu0 %v3447
  %v3664 = vpop.f32.mrb[0].mxu0
  %v3665 = vadd.f32 %v3360, %v3664
  %v3666 = vpop.f32.mrb[0].mxu0
  %3667 = vmatprep.mubr.f32.mxu0 0.0
  %3668 = vmatmul.mubr.f32.gmra.mrb[0].mxu0 %v3450
  %v3669 = vpop.f32.mrb[0].mxu0
  %v3670 = vadd.f32 %v3360, %v3669
  %v3671 = vpop.f32.mrb[0].mxu0
  %3672 = vmatprep.mubr.f32.mxu0 0.0
  %3673 = vmatmul.mubr.f32.gmra.mrb[0].mxu0 %v3453
  %v3674 = vpop.f32.mrb[0].mxu0
  %v3675 = vadd.f32 %v3360, %v3674
  %v3676 = vpop.f32.mrb[0].mxu0
  %3677 = vmatprep.mubr.f32.mxu0 0.0
  %3678 = vmatmul.mubr.f32.gmra.mrb[0].mxu0 %v3456
  %v3679 = vpop.f32.mrb[0].mxu0
  %v3680 = vadd.f32 %v3360, %v3679
  %v3681 = vpop.f32.mrb[0].mxu0
  %3682 = vdwg.mxu0
  %v3683 = vadd.f32 %v3525, %v2950
  %v3684 = vadd.f32 %v3530, %v2951
  %v3685 = vadd.f32 %v3535, %v2952
  %v3686 = vadd.f32 %v3540, %v2953
  %v3687 = vadd.f32 %v3545, %v2954
  %v3688 = vadd.f32 %v3550, %v2955
  %v3689 = vadd.f32 %v3555, %v2956
  %v3690 = vadd.f32 %v3560, %v2957
  %v3691 = vadd.f32 %v3565, %v2958
  %v3692 = vadd.f32 %v3570, %v2959
  %v3693 = vadd.f32 %v3575, %v2960
  %v3694 = vadd.f32 %v3580, %v2961
  %v3695 = vadd.f32 %v3585, %v2962
  %v3696 = vadd.f32 %v3590, %v2963
  %v3697 = vadd.f32 %v3595, %v2964
  %v3698 = vadd.f32 %v3600, %v2965
  %v3699 = vadd.f32 %v3605, %v2966
  %v3700 = vadd.f32 %v3610, %v2967
  %v3701 = vadd.f32 %v3615, %v2968
  %v3702 = vadd.f32 %v3620, %v2969
  %v3703 = vadd.f32 %v3625, %v2970
  %v3704 = vadd.f32 %v3630, %v2971
  %v3705 = vadd.f32 %v3635, %v2972
  %v3706 = vadd.f32 %v3640, %v2973
  %v3707 = vadd.f32 %v3645, %v2974
  %v3708 = vadd.f32 %v3650, %v2975
  %v3709 = vadd.f32 %v3655, %v2976
  %v3710 = vadd.f32 %v3660, %v2977
  %v3711 = vadd.f32 %v3665, %v2978
  %v3712 = vadd.f32 %v3670, %v2979
  %v3713 = vadd.f32 %v3675, %v2980
  %v3714 = vadd.f32 %v3680, %v2981
  %s3715 = scalar_lea.vmem %s1, 40
  %v3716 = vld [vmem:[%s3715] sm:$0xff]
  %s3717 = scalar_lea.vmem %s2, 5
  %v3718 = vld [vmem:[%s3717] sm:$0x1]
  %v3720 = vlaneseq
  %v3721 = vshrl.u32 %v3720, 7
  %v3722 = vsub.s32 0, %v3721
  %v3723 = vrot.slane %v3718, %v3722
  %v3726 = vsel %vm60, %v3683, 0
  %v3729 = vsel %vm60, %v3684, 0
  %v3732 = vsel %vm60, %v3685, 0
  %v3735 = vsel %vm60, %v3686, 0
  %v3738 = vsel %vm60, %v3687, 0
  %v3741 = vsel %vm60, %v3688, 0
  %v3744 = vsel %vm60, %v3689, 0
  %v3747 = vsel %vm60, %v3690, 0
  %v3750 = vsel %vm60, %v3691, 0
  %v3753 = vsel %vm60, %v3692, 0
  %v3756 = vsel %vm60, %v3693, 0
  %v3759 = vsel %vm60, %v3694, 0
  %v3762 = vsel %vm60, %v3695, 0
  %v3765 = vsel %vm60, %v3696, 0
  %v3768 = vsel %vm60, %v3697, 0
  %v3771 = vsel %vm60, %v3698, 0
  %v3774 = vsel %vm60, %v3699, 0
  %v3777 = vsel %vm60, %v3700, 0
  %v3780 = vsel %vm60, %v3701, 0
  %v3783 = vsel %vm60, %v3702, 0
  %v3786 = vsel %vm60, %v3703, 0
  %v3789 = vsel %vm60, %v3704, 0
  %v3792 = vsel %vm60, %v3705, 0
  %v3795 = vsel %vm60, %v3706, 0
  %v3798 = vsel %vm60, %v3707, 0
  %v3801 = vsel %vm60, %v3708, 0
  %v3804 = vsel %vm60, %v3709, 0
  %v3807 = vsel %vm60, %v3710, 0
  %v3810 = vsel %vm60, %v3711, 0
  %v3813 = vsel %vm60, %v3712, 0
  %v3816 = vsel %vm60, %v3713, 0
  %v3819 = vsel %vm60, %v3714, 0
  %3821 = vmatprep.subr.mxu0 0.0
  %3822 = vmatpush1.msra.mxu0 %v3716
  %3823 = vmatprep.subr.mxu0 0.0
  %3824 = vmatpush1.msra.mxu0 0.0
  %3825 = vmatprep.subr.mxu0 0.0
  %3826 = vmatpush1.msra.mxu0 0.0
  %3827 = vmatprep.subr.mxu0 0.0
  %3828 = vmatpush1.msra.mxu0 0.0
  %3829 = vmatprep.subr.mxu0 0.0
  %3830 = vmatpush1.msra.mxu0 0.0
  %3831 = vmatprep.subr.mxu0 0.0
  %3832 = vmatpush1.msra.mxu0 0.0
  %3833 = vmatprep.subr.mxu0 0.0
  %3834 = vmatpush1.msra.mxu0 0.0
  %3835 = vmatprep.subr.mxu0 0.0
  %3836 = vmatpush1.msra.mxu0 0.0
  %3837 = vmatprep.subr.mxu0 0.0
  %3838 = vmatpush1.msra.mxu0 0.0
  %3839 = vmatprep.subr.mxu0 0.0
  %3840 = vmatpush1.msra.mxu0 0.0
  %3841 = vmatprep.subr.mxu0 0.0
  %3842 = vmatpush1.msra.mxu0 0.0
  %3843 = vmatprep.subr.mxu0 0.0
  %3844 = vmatpush1.msra.mxu0 0.0
  %3845 = vmatprep.subr.mxu0 0.0
  %3846 = vmatpush1.msra.mxu0 0.0
  %3847 = vmatprep.subr.mxu0 0.0
  %3848 = vmatpush1.msra.mxu0 0.0
  %3849 = vmatprep.subr.mxu0 0.0
  %3850 = vmatpush1.msra.mxu0 0.0
  %3851 = vmatprep.subr.mxu0 0.0
  %3852 = vmatpush1.msra.mxu0 0.0
  %3853 = vmatprep.subr.mxu0 0.0
  %3854 = vmatpush1.msra.mxu0 0.0
  %3855 = vmatprep.subr.mxu0 0.0
  %3856 = vmatpush1.msra.mxu0 0.0
  %3857 = vmatprep.subr.mxu0 0.0
  %3858 = vmatpush1.msra.mxu0 0.0
  %3859 = vmatprep.subr.mxu0 0.0
  %3860 = vmatpush1.msra.mxu0 0.0
  %3861 = vmatprep.subr.mxu0 0.0
  %3862 = vmatpush1.msra.mxu0 0.0
  %3863 = vmatprep.subr.mxu0 0.0
  %3864 = vmatpush1.msra.mxu0 0.0
  %3865 = vmatprep.subr.mxu0 0.0
  %3866 = vmatpush1.msra.mxu0 0.0
  %3867 = vmatprep.subr.mxu0 0.0
  %3868 = vmatpush1.msra.mxu0 0.0
  %3869 = vmatprep.subr.mxu0 0.0
  %3870 = vmatpush1.msra.mxu0 0.0
  %3871 = vmatprep.subr.mxu0 0.0
  %3872 = vmatpush1.msra.mxu0 0.0
  %3873 = vmatprep.subr.mxu0 0.0
  %3874 = vmatpush1.msra.mxu0 0.0
  %3875 = vmatprep.subr.mxu0 0.0
  %3876 = vmatpush1.msra.mxu0 0.0
  %3877 = vmatprep.subr.mxu0 0.0
  %3878 = vmatpush1.msra.mxu0 0.0
  %3879 = vmatprep.subr.mxu0 0.0
  %3880 = vmatpush1.msra.mxu0 0.0
  %3881 = vmatprep.subr.mxu0 0.0
  %3882 = vmatpush1.msra.mxu0 0.0
  %3883 = vmatprep.subr.mxu0 0.0
  %3884 = vmatpush1.msra.mxu0 0.0
  %3885 = vmatprep.mubr.f32.mxu0 0.0
  %3886 = vmatmul.mubr.f32.gmra.mrb[0].mxu0 %v3726
  %v3887 = vpop.f32.mrb[0].mxu0
  %v3888 = vadd.f32 %v3723, %v3887
  %v3889 = vpop.f32.mrb[0].mxu0
  %3890 = vmatprep.mubr.f32.mxu0 0.0
  %3891 = vmatmul.mubr.f32.gmra.mrb[0].mxu0 %v3729
  %v3892 = vpop.f32.mrb[0].mxu0
  %v3893 = vadd.f32 %v3723, %v3892
  %v3894 = vpop.f32.mrb[0].mxu0
  %3895 = vmatprep.mubr.f32.mxu0 0.0
  %3896 = vmatmul.mubr.f32.gmra.mrb[0].mxu0 %v3732
  %v3897 = vpop.f32.mrb[0].mxu0
  %v3898 = vadd.f32 %v3723, %v3897
  %v3899 = vpop.f32.mrb[0].mxu0
  %3900 = vmatprep.mubr.f32.mxu0 0.0
  %3901 = vmatmul.mubr.f32.gmra.mrb[0].mxu0 %v3735
  %v3902 = vpop.f32.mrb[0].mxu0
  %v3903 = vadd.f32 %v3723, %v3902
  %v3904 = vpop.f32.mrb[0].mxu0
  %3905 = vmatprep.mubr.f32.mxu0 0.0
  %3906 = vmatmul.mubr.f32.gmra.mrb[0].mxu0 %v3738
  %v3907 = vpop.f32.mrb[0].mxu0
  %v3908 = vadd.f32 %v3723, %v3907
  %v3909 = vpop.f32.mrb[0].mxu0
  %3910 = vmatprep.mubr.f32.mxu0 0.0
  %3911 = vmatmul.mubr.f32.gmra.mrb[0].mxu0 %v3741
  %v3912 = vpop.f32.mrb[0].mxu0
  %v3913 = vadd.f32 %v3723, %v3912
  %v3914 = vpop.f32.mrb[0].mxu0
  %3915 = vmatprep.mubr.f32.mxu0 0.0
  %3916 = vmatmul.mubr.f32.gmra.mrb[0].mxu0 %v3744
  %v3917 = vpop.f32.mrb[0].mxu0
  %v3918 = vadd.f32 %v3723, %v3917
  %v3919 = vpop.f32.mrb[0].mxu0
  %3920 = vmatprep.mubr.f32.mxu0 0.0
  %3921 = vmatmul.mubr.f32.gmra.mrb[0].mxu0 %v3747
  %v3922 = vpop.f32.mrb[0].mxu0
  %v3923 = vadd.f32 %v3723, %v3922
  %v3924 = vpop.f32.mrb[0].mxu0
  %3925 = vmatprep.mubr.f32.mxu0 0.0
  %3926 = vmatmul.mubr.f32.gmra.mrb[0].mxu0 %v3750
  %v3927 = vpop.f32.mrb[0].mxu0
  %v3928 = vadd.f32 %v3723, %v3927
  %v3929 = vpop.f32.mrb[0].mxu0
  %3930 = vmatprep.mubr.f32.mxu0 0.0
  %3931 = vmatmul.mubr.f32.gmra.mrb[0].mxu0 %v3753
  %v3932 = vpop.f32.mrb[0].mxu0
  %v3933 = vadd.f32 %v3723, %v3932
  %v3934 = vpop.f32.mrb[0].mxu0
  %3935 = vmatprep.mubr.f32.mxu0 0.0
  %3936 = vmatmul.mubr.f32.gmra.mrb[0].mxu0 %v3756
  %v3937 = vpop.f32.mrb[0].mxu0
  %v3938 = vadd.f32 %v3723, %v3937
  %v3939 = vpop.f32.mrb[0].mxu0
  %3940 = vmatprep.mubr.f32.mxu0 0.0
  %3941 = vmatmul.mubr.f32.gmra.mrb[0].mxu0 %v3759
  %v3942 = vpop.f32.mrb[0].mxu0
  %v3943 = vadd.f32 %v3723, %v3942
  %v3944 = vpop.f32.mrb[0].mxu0
  %3945 = vmatprep.mubr.f32.mxu0 0.0
  %3946 = vmatmul.mubr.f32.gmra.mrb[0].mxu0 %v3762
  %v3947 = vpop.f32.mrb[0].mxu0
  %v3948 = vadd.f32 %v3723, %v3947
  %v3949 = vpop.f32.mrb[0].mxu0
  %3950 = vmatprep.mubr.f32.mxu0 0.0
  %3951 = vmatmul.mubr.f32.gmra.mrb[0].mxu0 %v3765
  %v3952 = vpop.f32.mrb[0].mxu0
  %v3953 = vadd.f32 %v3723, %v3952
  %v3954 = vpop.f32.mrb[0].mxu0
  %3955 = vmatprep.mubr.f32.mxu0 0.0
  %3956 = vmatmul.mubr.f32.gmra.mrb[0].mxu0 %v3768
  %v3957 = vpop.f32.mrb[0].mxu0
  %v3958 = vadd.f32 %v3723, %v3957
  %v3959 = vpop.f32.mrb[0].mxu0
  %3960 = vmatprep.mubr.f32.mxu0 0.0
  %3961 = vmatmul.mubr.f32.gmra.mrb[0].mxu0 %v3771
  %v3962 = vpop.f32.mrb[0].mxu0
  %v3963 = vadd.f32 %v3723, %v3962
  %v3964 = vpop.f32.mrb[0].mxu0
  %3965 = vmatprep.mubr.f32.mxu0 0.0
  %3966 = vmatmul.mubr.f32.gmra.mrb[0].mxu0 %v3774
  %v3967 = vpop.f32.mrb[0].mxu0
  %v3968 = vadd.f32 %v3723, %v3967
  %v3969 = vpop.f32.mrb[0].mxu0
  %3970 = vmatprep.mubr.f32.mxu0 0.0
  %3971 = vmatmul.mubr.f32.gmra.mrb[0].mxu0 %v3777
  %v3972 = vpop.f32.mrb[0].mxu0
  %v3973 = vadd.f32 %v3723, %v3972
  %v3974 = vpop.f32.mrb[0].mxu0
  %3975 = vmatprep.mubr.f32.mxu0 0.0
  %3976 = vmatmul.mubr.f32.gmra.mrb[0].mxu0 %v3780
  %v3977 = vpop.f32.mrb[0].mxu0
  %v3978 = vadd.f32 %v3723, %v3977
  %v3979 = vpop.f32.mrb[0].mxu0
  %3980 = vmatprep.mubr.f32.mxu0 0.0
  %3981 = vmatmul.mubr.f32.gmra.mrb[0].mxu0 %v3783
  %v3982 = vpop.f32.mrb[0].mxu0
  %v3983 = vadd.f32 %v3723, %v3982
  %v3984 = vpop.f32.mrb[0].mxu0
  %3985 = vmatprep.mubr.f32.mxu0 0.0
  %3986 = vmatmul.mubr.f32.gmra.mrb[0].mxu0 %v3786
  %v3987 = vpop.f32.mrb[0].mxu0
  %v3988 = vadd.f32 %v3723, %v3987
  %v3989 = vpop.f32.mrb[0].mxu0
  %3990 = vmatprep.mubr.f32.mxu0 0.0
  %3991 = vmatmul.mubr.f32.gmra.mrb[0].mxu0 %v3789
  %v3992 = vpop.f32.mrb[0].mxu0
  %v3993 = vadd.f32 %v3723, %v3992
  %v3994 = vpop.f32.mrb[0].mxu0
  %3995 = vmatprep.mubr.f32.mxu0 0.0
  %3996 = vmatmul.mubr.f32.gmra.mrb[0].mxu0 %v3792
  %v3997 = vpop.f32.mrb[0].mxu0
  %v3998 = vadd.f32 %v3723, %v3997
  %v3999 = vpop.f32.mrb[0].mxu0
  %4000 = vmatprep.mubr.f32.mxu0 0.0
  %4001 = vmatmul.mubr.f32.gmra.mrb[0].mxu0 %v3795
  %v4002 = vpop.f32.mrb[0].mxu0
  %v4003 = vadd.f32 %v3723, %v4002
  %v4004 = vpop.f32.mrb[0].mxu0
  %4005 = vmatprep.mubr.f32.mxu0 0.0
  %4006 = vmatmul.mubr.f32.gmra.mrb[0].mxu0 %v3798
  %v4007 = vpop.f32.mrb[0].mxu0
  %v4008 = vadd.f32 %v3723, %v4007
  %v4009 = vpop.f32.mrb[0].mxu0
  %4010 = vmatprep.mubr.f32.mxu0 0.0
  %4011 = vmatmul.mubr.f32.gmra.mrb[0].mxu0 %v3801
  %v4012 = vpop.f32.mrb[0].mxu0
  %v4013 = vadd.f32 %v3723, %v4012
  %v4014 = vpop.f32.mrb[0].mxu0
  %4015 = vmatprep.mubr.f32.mxu0 0.0
  %4016 = vmatmul.mubr.f32.gmra.mrb[0].mxu0 %v3804
  %v4017 = vpop.f32.mrb[0].mxu0
  %v4018 = vadd.f32 %v3723, %v4017
  %v4019 = vpop.f32.mrb[0].mxu0
  %4020 = vmatprep.mubr.f32.mxu0 0.0
  %4021 = vmatmul.mubr.f32.gmra.mrb[0].mxu0 %v3807
  %v4022 = vpop.f32.mrb[0].mxu0
  %v4023 = vadd.f32 %v3723, %v4022
  %v4024 = vpop.f32.mrb[0].mxu0
  %4025 = vmatprep.mubr.f32.mxu0 0.0
  %4026 = vmatmul.mubr.f32.gmra.mrb[0].mxu0 %v3810
  %v4027 = vpop.f32.mrb[0].mxu0
  %v4028 = vadd.f32 %v3723, %v4027
  %v4029 = vpop.f32.mrb[0].mxu0
  %4030 = vmatprep.mubr.f32.mxu0 0.0
  %4031 = vmatmul.mubr.f32.gmra.mrb[0].mxu0 %v3813
  %v4032 = vpop.f32.mrb[0].mxu0
  %v4033 = vadd.f32 %v3723, %v4032
  %v4034 = vpop.f32.mrb[0].mxu0
  %4035 = vmatprep.mubr.f32.mxu0 0.0
  %4036 = vmatmul.mubr.f32.gmra.mrb[0].mxu0 %v3816
  %v4037 = vpop.f32.mrb[0].mxu0
  %v4038 = vadd.f32 %v3723, %v4037
  %v4039 = vpop.f32.mrb[0].mxu0
  %4040 = vmatprep.mubr.f32.mxu0 0.0
  %4041 = vmatmul.mubr.f32.gmra.mrb[0].mxu0 %v3819
  %v4042 = vpop.f32.mrb[0].mxu0
  %v4043 = vadd.f32 %v3723, %v4042
  %v4044 = vpop.f32.mrb[0].mxu0
  %4045 = vdwg.mxu0
  %v4046 = vmax.f32 %v3888, 0.0
  %v4047 = vmax.f32 %v3893, 0.0
  %v4048 = vmax.f32 %v3898, 0.0
  %v4049 = vmax.f32 %v3903, 0.0
  %v4050 = vmax.f32 %v3908, 0.0
  %v4051 = vmax.f32 %v3913, 0.0
  %v4052 = vmax.f32 %v3918, 0.0
  %v4053 = vmax.f32 %v3923, 0.0
  %v4054 = vmax.f32 %v3928, 0.0
  %v4055 = vmax.f32 %v3933, 0.0
  %v4056 = vmax.f32 %v3938, 0.0
  %v4057 = vmax.f32 %v3943, 0.0
  %v4058 = vmax.f32 %v3948, 0.0
  %v4059 = vmax.f32 %v3953, 0.0
  %v4060 = vmax.f32 %v3958, 0.0
  %v4061 = vmax.f32 %v3963, 0.0
  %v4062 = vmax.f32 %v3968, 0.0
  %v4063 = vmax.f32 %v3973, 0.0
  %v4064 = vmax.f32 %v3978, 0.0
  %v4065 = vmax.f32 %v3983, 0.0
  %v4066 = vmax.f32 %v3988, 0.0
  %v4067 = vmax.f32 %v3993, 0.0
  %v4068 = vmax.f32 %v3998, 0.0
  %v4069 = vmax.f32 %v4003, 0.0
  %v4070 = vmax.f32 %v4008, 0.0
  %v4071 = vmax.f32 %v4013, 0.0
  %v4072 = vmax.f32 %v4018, 0.0
  %v4073 = vmax.f32 %v4023, 0.0
  %v4074 = vmax.f32 %v4028, 0.0
  %v4075 = vmax.f32 %v4033, 0.0
  %v4076 = vmax.f32 %v4038, 0.0
  %v4077 = vmax.f32 %v4043, 0.0
  %s4078 = scalar_lea.vmem %s3, 320
  %v4079 = vld [vmem:[%s4078] sm:$0xff]
  %v4080 = vld [vmem:[%s4078 + $0x8] sm:$0xff]
  %v4081 = vld [vmem:[%s4078 + $0x10] sm:$0xff]
  %v4082 = vld [vmem:[%s4078 + $0x18] sm:$0xff]
  %v4083 = vld [vmem:[%s4078 + $0x20] sm:$0xff]
  %v4084 = vld [vmem:[%s4078 + $0x28] sm:$0xff]
  %v4085 = vld [vmem:[%s4078 + $0x30] sm:$0xff]
  %v4086 = vld [vmem:[%s4078 + $0x38] sm:$0xff]
  %s4087 = scalar_lea.vmem %s4, 5
  %v4088 = vld [vmem:[%s4087] sm:$0x1]
  %v4090 = vlaneseq
  %v4091 = vshrl.u32 %v4090, 7
  %v4092 = vsub.s32 0, %v4091
  %v4093 = vrot.slane %v4088, %v4092
  %v4096 = vsel %vm429, %v4046, 0
  %v4099 = vsel %vm429, %v4047, 0
  %v4102 = vsel %vm429, %v4048, 0
  %v4105 = vsel %vm429, %v4049, 0
  %v4108 = vsel %vm429, %v4050, 0
  %v4111 = vsel %vm429, %v4051, 0
  %v4114 = vsel %vm429, %v4052, 0
  %v4117 = vsel %vm429, %v4053, 0
  %v4120 = vsel %vm429, %v4054, 0
  %v4123 = vsel %vm429, %v4055, 0
  %v4126 = vsel %vm429, %v4056, 0
  %v4129 = vsel %vm429, %v4057, 0
  %v4132 = vsel %vm429, %v4058, 0
  %v4135 = vsel %vm429, %v4059, 0
  %v4138 = vsel %vm429, %v4060, 0
  %v4141 = vsel %vm429, %v4061, 0
  %v4144 = vsel %vm429, %v4062, 0
  %v4147 = vsel %vm429, %v4063, 0
  %v4150 = vsel %vm429, %v4064, 0
  %v4153 = vsel %vm429, %v4065, 0
  %v4156 = vsel %vm429, %v4066, 0
  %v4159 = vsel %vm429, %v4067, 0
  %v4162 = vsel %vm429, %v4068, 0
  %v4165 = vsel %vm429, %v4069, 0
  %v4168 = vsel %vm429, %v4070, 0
  %v4171 = vsel %vm429, %v4071, 0
  %v4174 = vsel %vm429, %v4072, 0
  %v4177 = vsel %vm429, %v4073, 0
  %v4180 = vsel %vm429, %v4074, 0
  %v4183 = vsel %vm429, %v4075, 0
  %v4186 = vsel %vm429, %v4076, 0
  %v4189 = vsel %vm429, %v4077, 0
  %4191 = vmatprep.subr.mxu0 0.0
  %4192 = vmatpush1.msra.mxu0 %v4079
  %4193 = vmatprep.subr.mxu0 0.0
  %4194 = vmatpush1.msra.mxu0 %v4080
  %4195 = vmatprep.subr.mxu0 0.0
  %4196 = vmatpush1.msra.mxu0 %v4081
  %4197 = vmatprep.subr.mxu0 0.0
  %4198 = vmatpush1.msra.mxu0 %v4082
  %4199 = vmatprep.subr.mxu0 0.0
  %4200 = vmatpush1.msra.mxu0 %v4083
  %4201 = vmatprep.subr.mxu0 0.0
  %4202 = vmatpush1.msra.mxu0 %v4084
  %4203 = vmatprep.subr.mxu0 0.0
  %4204 = vmatpush1.msra.mxu0 %v4085
  %4205 = vmatprep.subr.mxu0 0.0
  %4206 = vmatpush1.msra.mxu0 %v4086
  %4207 = vmatprep.subr.mxu0 0.0
  %4208 = vmatpush1.msra.mxu0 0.0
  %4209 = vmatprep.subr.mxu0 0.0
  %4210 = vmatpush1.msra.mxu0 0.0
  %4211 = vmatprep.subr.mxu0 0.0
  %4212 = vmatpush1.msra.mxu0 0.0
  %4213 = vmatprep.subr.mxu0 0.0
  %4214 = vmatpush1.msra.mxu0 0.0
  %4215 = vmatprep.subr.mxu0 0.0
  %4216 = vmatpush1.msra.mxu0 0.0
  %4217 = vmatprep.subr.mxu0 0.0
  %4218 = vmatpush1.msra.mxu0 0.0
  %4219 = vmatprep.subr.mxu0 0.0
  %4220 = vmatpush1.msra.mxu0 0.0
  %4221 = vmatprep.subr.mxu0 0.0
  %4222 = vmatpush1.msra.mxu0 0.0
  %4223 = vmatprep.subr.mxu0 0.0
  %4224 = vmatpush1.msra.mxu0 0.0
  %4225 = vmatprep.subr.mxu0 0.0
  %4226 = vmatpush1.msra.mxu0 0.0
  %4227 = vmatprep.subr.mxu0 0.0
  %4228 = vmatpush1.msra.mxu0 0.0
  %4229 = vmatprep.subr.mxu0 0.0
  %4230 = vmatpush1.msra.mxu0 0.0
  %4231 = vmatprep.subr.mxu0 0.0
  %4232 = vmatpush1.msra.mxu0 0.0
  %4233 = vmatprep.subr.mxu0 0.0
  %4234 = vmatpush1.msra.mxu0 0.0
  %4235 = vmatprep.subr.mxu0 0.0
  %4236 = vmatpush1.msra.mxu0 0.0
  %4237 = vmatprep.subr.mxu0 0.0
  %4238 = vmatpush1.msra.mxu0 0.0
  %4239 = vmatprep.subr.mxu0 0.0
  %4240 = vmatpush1.msra.mxu0 0.0
  %4241 = vmatprep.subr.mxu0 0.0
  %4242 = vmatpush1.msra.mxu0 0.0
  %4243 = vmatprep.subr.mxu0 0.0
  %4244 = vmatpush1.msra.mxu0 0.0
  %4245 = vmatprep.subr.mxu0 0.0
  %4246 = vmatpush1.msra.mxu0 0.0
  %4247 = vmatprep.subr.mxu0 0.0
  %4248 = vmatpush1.msra.mxu0 0.0
  %4249 = vmatprep.subr.mxu0 0.0
  %4250 = vmatpush1.msra.mxu0 0.0
  %4251 = vmatprep.subr.mxu0 0.0
  %4252 = vmatpush1.msra.mxu0 0.0
  %4253 = vmatprep.subr.mxu0 0.0
  %4254 = vmatpush1.msra.mxu0 0.0
  %4255 = vmatprep.mubr.f32.mxu0 0.0
  %4256 = vmatmul.mubr.f32.gmra.mrb[0].mxu0 %v4096
  %v4257 = vpop.f32.mrb[0].mxu0
  %v4258 = vadd.f32 %v4093, %v4257
  %v4259 = vpop.f32.mrb[0].mxu0
  %4260 = vmatprep.mubr.f32.mxu0 0.0
  %4261 = vmatmul.mubr.f32.gmra.mrb[0].mxu0 %v4099
  %v4262 = vpop.f32.mrb[0].mxu0
  %v4263 = vadd.f32 %v4093, %v4262
  %v4264 = vpop.f32.mrb[0].mxu0
  %4265 = vmatprep.mubr.f32.mxu0 0.0
  %4266 = vmatmul.mubr.f32.gmra.mrb[0].mxu0 %v4102
  %v4267 = vpop.f32.mrb[0].mxu0
  %v4268 = vadd.f32 %v4093, %v4267
  %v4269 = vpop.f32.mrb[0].mxu0
  %4270 = vmatprep.mubr.f32.mxu0 0.0
  %4271 = vmatmul.mubr.f32.gmra.mrb[0].mxu0 %v4105
  %v4272 = vpop.f32.mrb[0].mxu0
  %v4273 = vadd.f32 %v4093, %v4272
  %v4274 = vpop.f32.mrb[0].mxu0
  %4275 = vmatprep.mubr.f32.mxu0 0.0
  %4276 = vmatmul.mubr.f32.gmra.mrb[0].mxu0 %v4108
  %v4277 = vpop.f32.mrb[0].mxu0
  %v4278 = vadd.f32 %v4093, %v4277
  %v4279 = vpop.f32.mrb[0].mxu0
  %4280 = vmatprep.mubr.f32.mxu0 0.0
  %4281 = vmatmul.mubr.f32.gmra.mrb[0].mxu0 %v4111
  %v4282 = vpop.f32.mrb[0].mxu0
  %v4283 = vadd.f32 %v4093, %v4282
  %v4284 = vpop.f32.mrb[0].mxu0
  %4285 = vmatprep.mubr.f32.mxu0 0.0
  %4286 = vmatmul.mubr.f32.gmra.mrb[0].mxu0 %v4114
  %v4287 = vpop.f32.mrb[0].mxu0
  %v4288 = vadd.f32 %v4093, %v4287
  %v4289 = vpop.f32.mrb[0].mxu0
  %4290 = vmatprep.mubr.f32.mxu0 0.0
  %4291 = vmatmul.mubr.f32.gmra.mrb[0].mxu0 %v4117
  %v4292 = vpop.f32.mrb[0].mxu0
  %v4293 = vadd.f32 %v4093, %v4292
  %v4294 = vpop.f32.mrb[0].mxu0
  %4295 = vmatprep.mubr.f32.mxu0 0.0
  %4296 = vmatmul.mubr.f32.gmra.mrb[0].mxu0 %v4120
  %v4297 = vpop.f32.mrb[0].mxu0
  %v4298 = vadd.f32 %v4093, %v4297
  %v4299 = vpop.f32.mrb[0].mxu0
  %4300 = vmatprep.mubr.f32.mxu0 0.0
  %4301 = vmatmul.mubr.f32.gmra.mrb[0].mxu0 %v4123
  %v4302 = vpop.f32.mrb[0].mxu0
  %v4303 = vadd.f32 %v4093, %v4302
  %v4304 = vpop.f32.mrb[0].mxu0
  %4305 = vmatprep.mubr.f32.mxu0 0.0
  %4306 = vmatmul.mubr.f32.gmra.mrb[0].mxu0 %v4126
  %v4307 = vpop.f32.mrb[0].mxu0
  %v4308 = vadd.f32 %v4093, %v4307
  %v4309 = vpop.f32.mrb[0].mxu0
  %4310 = vmatprep.mubr.f32.mxu0 0.0
  %4311 = vmatmul.mubr.f32.gmra.mrb[0].mxu0 %v4129
  %v4312 = vpop.f32.mrb[0].mxu0
  %v4313 = vadd.f32 %v4093, %v4312
  %v4314 = vpop.f32.mrb[0].mxu0
  %4315 = vmatprep.mubr.f32.mxu0 0.0
  %4316 = vmatmul.mubr.f32.gmra.mrb[0].mxu0 %v4132
  %v4317 = vpop.f32.mrb[0].mxu0
  %v4318 = vadd.f32 %v4093, %v4317
  %v4319 = vpop.f32.mrb[0].mxu0
  %4320 = vmatprep.mubr.f32.mxu0 0.0
  %4321 = vmatmul.mubr.f32.gmra.mrb[0].mxu0 %v4135
  %v4322 = vpop.f32.mrb[0].mxu0
  %v4323 = vadd.f32 %v4093, %v4322
  %v4324 = vpop.f32.mrb[0].mxu0
  %4325 = vmatprep.mubr.f32.mxu0 0.0
  %4326 = vmatmul.mubr.f32.gmra.mrb[0].mxu0 %v4138
  %v4327 = vpop.f32.mrb[0].mxu0
  %v4328 = vadd.f32 %v4093, %v4327
  %v4329 = vpop.f32.mrb[0].mxu0
  %4330 = vmatprep.mubr.f32.mxu0 0.0
  %4331 = vmatmul.mubr.f32.gmra.mrb[0].mxu0 %v4141
  %v4332 = vpop.f32.mrb[0].mxu0
  %v4333 = vadd.f32 %v4093, %v4332
  %v4334 = vpop.f32.mrb[0].mxu0
  %4335 = vmatprep.mubr.f32.mxu0 0.0
  %4336 = vmatmul.mubr.f32.gmra.mrb[0].mxu0 %v4144
  %v4337 = vpop.f32.mrb[0].mxu0
  %v4338 = vadd.f32 %v4093, %v4337
  %v4339 = vpop.f32.mrb[0].mxu0
  %4340 = vmatprep.mubr.f32.mxu0 0.0
  %4341 = vmatmul.mubr.f32.gmra.mrb[0].mxu0 %v4147
  %v4342 = vpop.f32.mrb[0].mxu0
  %v4343 = vadd.f32 %v4093, %v4342
  %v4344 = vpop.f32.mrb[0].mxu0
  %4345 = vmatprep.mubr.f32.mxu0 0.0
  %4346 = vmatmul.mubr.f32.gmra.mrb[0].mxu0 %v4150
  %v4347 = vpop.f32.mrb[0].mxu0
  %v4348 = vadd.f32 %v4093, %v4347
  %v4349 = vpop.f32.mrb[0].mxu0
  %4350 = vmatprep.mubr.f32.mxu0 0.0
  %4351 = vmatmul.mubr.f32.gmra.mrb[0].mxu0 %v4153
  %v4352 = vpop.f32.mrb[0].mxu0
  %v4353 = vadd.f32 %v4093, %v4352
  %v4354 = vpop.f32.mrb[0].mxu0
  %4355 = vmatprep.mubr.f32.mxu0 0.0
  %4356 = vmatmul.mubr.f32.gmra.mrb[0].mxu0 %v4156
  %v4357 = vpop.f32.mrb[0].mxu0
  %v4358 = vadd.f32 %v4093, %v4357
  %v4359 = vpop.f32.mrb[0].mxu0
  %4360 = vmatprep.mubr.f32.mxu0 0.0
  %4361 = vmatmul.mubr.f32.gmra.mrb[0].mxu0 %v4159
  %v4362 = vpop.f32.mrb[0].mxu0
  %v4363 = vadd.f32 %v4093, %v4362
  %v4364 = vpop.f32.mrb[0].mxu0
  %4365 = vmatprep.mubr.f32.mxu0 0.0
  %4366 = vmatmul.mubr.f32.gmra.mrb[0].mxu0 %v4162
  %v4367 = vpop.f32.mrb[0].mxu0
  %v4368 = vadd.f32 %v4093, %v4367
  %v4369 = vpop.f32.mrb[0].mxu0
  %4370 = vmatprep.mubr.f32.mxu0 0.0
  %4371 = vmatmul.mubr.f32.gmra.mrb[0].mxu0 %v4165
  %v4372 = vpop.f32.mrb[0].mxu0
  %v4373 = vadd.f32 %v4093, %v4372
  %v4374 = vpop.f32.mrb[0].mxu0
  %4375 = vmatprep.mubr.f32.mxu0 0.0
  %4376 = vmatmul.mubr.f32.gmra.mrb[0].mxu0 %v4168
  %v4377 = vpop.f32.mrb[0].mxu0
  %v4378 = vadd.f32 %v4093, %v4377
  %v4379 = vpop.f32.mrb[0].mxu0
  %4380 = vmatprep.mubr.f32.mxu0 0.0
  %4381 = vmatmul.mubr.f32.gmra.mrb[0].mxu0 %v4171
  %v4382 = vpop.f32.mrb[0].mxu0
  %v4383 = vadd.f32 %v4093, %v4382
  %v4384 = vpop.f32.mrb[0].mxu0
  %4385 = vmatprep.mubr.f32.mxu0 0.0
  %4386 = vmatmul.mubr.f32.gmra.mrb[0].mxu0 %v4174
  %v4387 = vpop.f32.mrb[0].mxu0
  %v4388 = vadd.f32 %v4093, %v4387
  %v4389 = vpop.f32.mrb[0].mxu0
  %4390 = vmatprep.mubr.f32.mxu0 0.0
  %4391 = vmatmul.mubr.f32.gmra.mrb[0].mxu0 %v4177
  %v4392 = vpop.f32.mrb[0].mxu0
  %v4393 = vadd.f32 %v4093, %v4392
  %v4394 = vpop.f32.mrb[0].mxu0
  %4395 = vmatprep.mubr.f32.mxu0 0.0
  %4396 = vmatmul.mubr.f32.gmra.mrb[0].mxu0 %v4180
  %v4397 = vpop.f32.mrb[0].mxu0
  %v4398 = vadd.f32 %v4093, %v4397
  %v4399 = vpop.f32.mrb[0].mxu0
  %4400 = vmatprep.mubr.f32.mxu0 0.0
  %4401 = vmatmul.mubr.f32.gmra.mrb[0].mxu0 %v4183
  %v4402 = vpop.f32.mrb[0].mxu0
  %v4403 = vadd.f32 %v4093, %v4402
  %v4404 = vpop.f32.mrb[0].mxu0
  %4405 = vmatprep.mubr.f32.mxu0 0.0
  %4406 = vmatmul.mubr.f32.gmra.mrb[0].mxu0 %v4186
  %v4407 = vpop.f32.mrb[0].mxu0
  %v4408 = vadd.f32 %v4093, %v4407
  %v4409 = vpop.f32.mrb[0].mxu0
  %4410 = vmatprep.mubr.f32.mxu0 0.0
  %4411 = vmatmul.mubr.f32.gmra.mrb[0].mxu0 %v4189
  %v4412 = vpop.f32.mrb[0].mxu0
  %v4413 = vadd.f32 %v4093, %v4412
  %v4414 = vpop.f32.mrb[0].mxu0
  %4415 = vdwg.mxu0
  %v4416 = vadd.f32 %v4258, %v3683
  %v4417 = vadd.f32 %v4263, %v3684
  %v4418 = vadd.f32 %v4268, %v3685
  %v4419 = vadd.f32 %v4273, %v3686
  %v4420 = vadd.f32 %v4278, %v3687
  %v4421 = vadd.f32 %v4283, %v3688
  %v4422 = vadd.f32 %v4288, %v3689
  %v4423 = vadd.f32 %v4293, %v3690
  %v4424 = vadd.f32 %v4298, %v3691
  %v4425 = vadd.f32 %v4303, %v3692
  %v4426 = vadd.f32 %v4308, %v3693
  %v4427 = vadd.f32 %v4313, %v3694
  %v4428 = vadd.f32 %v4318, %v3695
  %v4429 = vadd.f32 %v4323, %v3696
  %v4430 = vadd.f32 %v4328, %v3697
  %v4431 = vadd.f32 %v4333, %v3698
  %v4432 = vadd.f32 %v4338, %v3699
  %v4433 = vadd.f32 %v4343, %v3700
  %v4434 = vadd.f32 %v4348, %v3701
  %v4435 = vadd.f32 %v4353, %v3702
  %v4436 = vadd.f32 %v4358, %v3703
  %v4437 = vadd.f32 %v4363, %v3704
  %v4438 = vadd.f32 %v4368, %v3705
  %v4439 = vadd.f32 %v4373, %v3706
  %v4440 = vadd.f32 %v4378, %v3707
  %v4441 = vadd.f32 %v4383, %v3708
  %v4442 = vadd.f32 %v4388, %v3709
  %v4443 = vadd.f32 %v4393, %v3710
  %v4444 = vadd.f32 %v4398, %v3711
  %v4445 = vadd.f32 %v4403, %v3712
  %v4446 = vadd.f32 %v4408, %v3713
  %v4447 = vadd.f32 %v4413, %v3714
  %4448 = vst.msk [vmem:[%s5] sm:$0xff] %vm60, %v4416
  %4449 = vst.msk [vmem:[%s5 + $0x8] sm:$0xff] %vm60, %v4417
  %4450 = vst.msk [vmem:[%s5 + $0x10] sm:$0xff] %vm60, %v4418
  %4451 = vst.msk [vmem:[%s5 + $0x18] sm:$0xff] %vm60, %v4419
  %4452 = vst.msk [vmem:[%s5 + $0x20] sm:$0xff] %vm60, %v4420
  %4453 = vst.msk [vmem:[%s5 + $0x28] sm:$0xff] %vm60, %v4421
  %4454 = vst.msk [vmem:[%s5 + $0x30] sm:$0xff] %vm60, %v4422
  %4455 = vst.msk [vmem:[%s5 + $0x38] sm:$0xff] %vm60, %v4423
  %4456 = vst.msk [vmem:[%s5 + $0x40] sm:$0xff] %vm60, %v4424
  %4457 = vst.msk [vmem:[%s5 + $0x48] sm:$0xff] %vm60, %v4425
  %4458 = vst.msk [vmem:[%s5 + $0x50] sm:$0xff] %vm60, %v4426
  %4459 = vst.msk [vmem:[%s5 + $0x58] sm:$0xff] %vm60, %v4427
  %4460 = vst.msk [vmem:[%s5 + $0x60] sm:$0xff] %vm60, %v4428
  %4461 = vst.msk [vmem:[%s5 + $0x68] sm:$0xff] %vm60, %v4429
  %4462 = vst.msk [vmem:[%s5 + $0x70] sm:$0xff] %vm60, %v4430
  %4463 = vst.msk [vmem:[%s5 + $0x78] sm:$0xff] %vm60, %v4431
  %4464 = vst.msk [vmem:[%s5 + $0x80] sm:$0xff] %vm60, %v4432
  %4465 = vst.msk [vmem:[%s5 + $0x88] sm:$0xff] %vm60, %v4433
  %4466 = vst.msk [vmem:[%s5 + $0x90] sm:$0xff] %vm60, %v4434
  %4467 = vst.msk [vmem:[%s5 + $0x98] sm:$0xff] %vm60, %v4435
  %4468 = vst.msk [vmem:[%s5 + $0xa0] sm:$0xff] %vm60, %v4436
  %4469 = vst.msk [vmem:[%s5 + $0xa8] sm:$0xff] %vm60, %v4437
  %4470 = vst.msk [vmem:[%s5 + $0xb0] sm:$0xff] %vm60, %v4438
  %4471 = vst.msk [vmem:[%s5 + $0xb8] sm:$0xff] %vm60, %v4439
  %4472 = vst.msk [vmem:[%s5 + $0xc0] sm:$0xff] %vm60, %v4440
  %4473 = vst.msk [vmem:[%s5 + $0xc8] sm:$0xff] %vm60, %v4441
  %4474 = vst.msk [vmem:[%s5 + $0xd0] sm:$0xff] %vm60, %v4442
  %4475 = vst.msk [vmem:[%s5 + $0xd8] sm:$0xff] %vm60, %v4443
  %4476 = vst.msk [vmem:[%s5 + $0xe0] sm:$0xff] %vm60, %v4444
  %4477 = vst.msk [vmem:[%s5 + $0xe8] sm:$0xff] %vm60, %v4445
  %4478 = vst.msk [vmem:[%s5 + $0xf0] sm:$0xff] %vm60, %v4446
  %4479 = vst.msk [vmem:[%s5 + $0xf8] sm:$0xff] %vm60, %v4447
  // Predicated region
  $region22: #{tpu_custom_call.1} parent=0 // pred_check
    _
  $region23: #{tpu_custom_call.1} parent=0 // pred_check_branch
    %4481 = sbr.rel (0) target = $region25
  $region24: #{tpu_custom_call.1} parent=0 // pred_region
    _
  $region25: #{tpu_custom_call.1} parent=0 // pred_fallthru
    _
  // Predicated region
  $region26: #{tpu_custom_call.1} parent=0 // pred_check
    _
  $region27: #{tpu_custom_call.1} parent=0 // pred_check_branch
    %4483 = sbr.rel (0) target = $region29
  $region28: #{tpu_custom_call.1} parent=0 // pred_region
    _
  $region29: #{tpu_custom_call.1} parent=0 // pred_fallthru
    _

</llo_original>
